<compile_context>
chip_gen: v7x
topology: tpu7x:2x2x1
jax: 0.10.0
libtpu: 0.0.40
codegen_flags: <defaults>
</compile_context>

<pallas_src>
from functools import partial

import jax
import jax.numpy as jnp
from jax.experimental import pallas as pl
from jax.experimental.pallas import tpu as pltpu

LEAKY_SLOPE = 0.02


# ----------------------------------------------------------------------------
# Fused kernel: n_layers convs -> +input -> LeakyReLU(0.02), one image/step.
# ----------------------------------------------------------------------------
def _residual_block_kernel(x_ref, w_ref, b_ref, o_ref, buf_a, buf_b, col_ref,
                           *, ks, n_layers, th, off):
    """
    x_ref:   (1, H, W, C)            input image (unpadded channels)
    w_ref:   (n_layers, Kp, C) bf16  im2col weights, K zero-padded to Kp
    b_ref:   (n_layers, 1, C)  f32   biases
    o_ref:   (1, H, W, C)            output image
    buf_a/b: (H+2p, Wb, C)    bf16   spatially padded activations (ping-pong)
    col_ref: (th, W, Kp)      bf16   im2col scratch for one row block
    """
    _, H, W, C = x_ref.shape
    p = ks // 2
    k_real = ks * ks * C
    kp = col_ref.shape[-1]
    n_blocks = H // th
    bufs = (buf_a, buf_b)

    # Re-zero only the halo strips (O(perimeter), not a full-buffer memset) and
    # the im2col pad columns.  The interiors are fully rewritten every layer.
    if p > 0:
        for buf in bufs:
            rows, wb, _ = buf.shape
            buf[0:p, :, :] = jnp.zeros((p, wb, C), buf.dtype)
            buf[p + H:, :, :] = jnp.zeros((p, wb, C), buf.dtype)
            buf[:, off - p:off, :] = jnp.zeros((rows, p, C), buf.dtype)
            buf[:, off + W:off + W + p, :] = jnp.zeros((rows, p, C), buf.dtype)
    if kp > k_real:
        col_ref[:, :, k_real:] = jnp.zeros((th, W, kp - k_real), col_ref.dtype)

    # Stage the input image into buf_a's (sublane-aligned) interior.
    buf_a[p:p + H, off:off + W, :] = x_ref[0].astype(buf_a.dtype)

    for layer in range(n_layers):
        src = bufs[layer % 2]
        dst = bufs[(layer + 1) % 2]
        last = layer == n_layers - 1
        w_l = w_ref[layer]                              # (Kp, C) bf16
        b_l = b_ref[layer].astype(jnp.float32)          # (1, C)  f32

        for rb in range(n_blocks):
            r0 = rb * th
            # Build im2col for this row block: taps folded into the K dim.
            # Each copy keeps (th, W, C) 3-D — no H/W merge across the halo.
            for kh in range(ks):
                for kw in range(ks):
                    t = kh * ks + kw
                    col_ref[:, :, t * C:(t + 1) * C] = src[
                        r0 + kh:r0 + kh + th,
                        off - p + kw:off - p + kw + W, :]

            # One MXU matmul per layer per row block (f32 accumulation).
            patch = col_ref[...].reshape(th * W, kp)
            acc = jnp.dot(patch, w_l, preferred_element_type=jnp.float32)
            act = (acc + b_l).reshape(th, W, C)          # f32

            if last:
                # Fused epilogue: residual add + LeakyReLU(0.02) in f32.
                s = act + x_ref[0, r0:r0 + th].astype(jnp.float32)
                o_ref[0, r0:r0 + th] = jnp.where(
                    s > 0, s, LEAKY_SLOPE * s).astype(o_ref.dtype)
            else:
                dst[p + r0:p + r0 + th, off:off + W, :] = act.astype(dst.dtype)


# ----------------------------------------------------------------------------
# Wrapper
# ----------------------------------------------------------------------------
def _round_up(x, m):
    return (x + m - 1) // m * m


def _pick_row_block(H, W, max_pixels=2048):
    th = 1
    for d in range(1, H + 1):
        if H % d == 0 and d * W <= max_pixels:
            th = d
    return th


def _padded_vmem_bytes(shape, dtype):
    """Rough VMEM footprint of one buffer, accounting for (8,128) tiling."""
    item = jnp.dtype(dtype).itemsize
    sub = 8 * max(1, 4 // item)
    s = list(shape)
    if len(s) >= 2:
        s[-1] = _round_up(s[-1], 128)
        s[-2] = _round_up(s[-2], sub)
    n = 1
    for d in s:
        n *= d
    return n * item


def residual_block_forward(x_nchw, weights_hwio, biases, *, ks):
    """ResidualBlock.forward: stacked same-padding convs -> +input -> LeakyReLU(0.02).

    x_nchw:       (N, C, H, W)
    weights_hwio: list of (ks, ks, C, C) HWIO conv weights
    biases:       list of (C,) biases
    """
    # TODO(synk): Dropout2d / BatchNorm2d branches are disabled by default
    # (dropout=None, batch_norm=False) and are not implemented here.
    N, C, H, W = x_nchw.shape
    n_layers = len(weights_hwio)
    p = ks // 2
    k_real = ks * ks * C
    kp = _round_up(k_real, 128)
    off = max(8, _round_up(p, 8)) if p > 0 else 0   # sublane-aligned interior start
    wb = _round_up(off + W + p, 8)
    th = _pick_row_block(H, W)

    # Layout plumbing (tiny, fused by XLA under jit): NCHW -> NHWC.  No HBM
    # channel padding: the kernel reads/writes the raw C channels.
    x_nhwc = jnp.transpose(x_nchw, (0, 2, 3, 1))

    # Pack all layers' weights into one resident im2col slab (bf16):
    # row index = kh*ks*C + kw*C + ci, matching the kernel's col layout.
    w_all = jnp.stack([w.reshape(k_real, C) for w in weights_hwio], axis=0)
    w_stack = jnp.pad(w_all, ((0, 0), (0, kp - k_real), (0, 0))).astype(jnp.bfloat16)
    b_stack = jnp.stack(biases, axis=0)[:, None, :].astype(jnp.float32)   # (L, 1, C)

    # Shape-derived VMEM budget: double-buffered I/O blocks + resident
    # weights/bias + scratch, with 2x headroom, clamped to [32, 64] MiB.
    est = (2 * 2 * _padded_vmem_bytes((1, H, W, C), x_nchw.dtype)
           + 2 * _padded_vmem_bytes((n_layers, kp, C), jnp.bfloat16)
           + 2 * _padded_vmem_bytes((n_layers, 1, C), jnp.float32)
           + 2 * _padded_vmem_bytes((H + 2 * p, wb, C), jnp.bfloat16)
           + _padded_vmem_bytes((th, W, kp), jnp.bfloat16))
    vmem_limit = int(min(max(2 * est, 32 * 1024 * 1024), 64 * 1024 * 1024))

    kernel = partial(_residual_block_kernel, ks=ks, n_layers=n_layers,
                     th=th, off=off)

    out_nhwc = pl.pallas_call(
        kernel,
        out_shape=jax.ShapeDtypeStruct((N, H, W, C), x_nchw.dtype),
        grid_spec=pltpu.PrefetchScalarGridSpec(
            num_scalar_prefetch=0,
            grid=(N,),
            in_specs=[
                pl.BlockSpec((1, H, W, C), lambda n: (n, 0, 0, 0)),
                # Weights/bias: constant index_map -> resident across the grid.
                pl.BlockSpec((n_layers, kp, C), lambda n: (0, 0, 0)),
                pl.BlockSpec((n_layers, 1, C), lambda n: (0, 0, 0)),
            ],
            out_specs=pl.BlockSpec((1, H, W, C), lambda n: (n, 0, 0, 0)),
            scratch_shapes=[
                pltpu.VMEM((H + 2 * p, wb, C), jnp.bfloat16),   # buf_a
                pltpu.VMEM((H + 2 * p, wb, C), jnp.bfloat16),   # buf_b
                pltpu.VMEM((th, W, kp), jnp.bfloat16),          # im2col block
            ],
        ),
        compiler_params=pltpu.CompilerParams(
            dimension_semantics=("parallel",),   # batch axis across TCs
            vmem_limit_bytes=vmem_limit,
        ),
    )(x_nhwc, w_stack, b_stack)

    return jnp.transpose(out_nhwc, (0, 3, 1, 2))   # NHWC -> NCHW


# ----------------------------------------------------------------------------
# Reference (plain JAX) for a sanity check
# ----------------------------------------------------------------------------
def residual_block_reference(x_nchw, weights_hwio, biases, *, ks):
    x = jnp.transpose(x_nchw, (0, 2, 3, 1))
    out = x
    for w, b in zip(weights_hwio, biases):
        out = jax.lax.conv_general_dilated(
            out, w, window_strides=(1, 1), padding="SAME",
            dimension_numbers=("NHWC", "HWIO", "NHWC"),
        ) + b.reshape(1, 1, 1, -1)
    s = out + x
    y = jnp.where(s > 0, s, LEAKY_SLOPE * s)
    return jnp.transpose(y, (0, 3, 1, 2))


# ----------------------------------------------------------------------------
# Main
# ----------------------------------------------------------------------------
if __name__ == "__main__":
    N, C, H, W = 2, 4, 16, 16
    n_layers = 2
    kernel_size = 3

    key = jax.random.PRNGKey(0)
    key, kx = jax.random.split(key)
    x = jax.random.normal(kx, (N, C, H, W), dtype=jnp.float32)

    # Deterministic parameter init (PyTorch Conv2d weight shape: (Cout, Cin, KH, KW)).
    weights_hwio, biases = [], []
    fan_in = C * kernel_size * kernel_size
    bound = 1.0 / (fan_in ** 0.5)
    for _ in range(n_layers):
        key, kw_, kb_ = jax.random.split(key, 3)
        w_oihw = jax.random.uniform(
            kw_, (C, C, kernel_size, kernel_size),
            minval=-bound, maxval=bound, dtype=jnp.float32)
        b = jax.random.uniform(kb_, (C,), minval=-bound, maxval=bound,
                               dtype=jnp.float32)
        weights_hwio.append(jnp.transpose(w_oihw, (2, 3, 1, 0)))  # -> HWIO
        biases.append(b)

    forward = jax.jit(partial(residual_block_forward, ks=kernel_size))
    out = jax.block_until_ready(forward(x, weights_hwio, biases))

    ref = residual_block_reference(x, weights_hwio, biases, ks=kernel_size)
    assert out.shape == (N, C, H, W)
    # bf16 MXU operands with f32 accumulation -> slightly looser tolerance.
    assert jnp.allclose(out, ref, atol=5e-2, rtol=5e-2), (
        "mismatch vs reference; max abs err = %e"
        % float(jnp.max(jnp.abs(out - ref))))

    print("KERNEL_OK")
</pallas_src>

<mosaic_0001>
module attributes {stable_mosaic.version = 11 : i64} {
  func.func @_residual_block_kernel(%arg0: i32, %arg1: memref<1x16x16x4xf32, #tpu.memory_space<vmem>>, %arg2: memref<2x128x4xbf16, #tpu.memory_space<vmem>>, %arg3: memref<2x1x4xf32, #tpu.memory_space<vmem>>, %arg4: memref<1x16x16x4xf32, #tpu.memory_space<vmem>>, %arg5: memref<18x32x4xbf16, #tpu.memory_space<vmem>>, %arg6: memref<18x32x4xbf16, #tpu.memory_space<vmem>>, %arg7: memref<16x16x128xbf16, #tpu.memory_space<vmem>>) attributes {dimension_semantics = [#tpu.dimension_semantics<parallel>], iteration_bounds = array<i64: 2>, scalar_prefetch = 0 : i64, scratch_operands = 3 : i64, tpu.core_type = #tpu.core_type<tc>, window_params = [{transform_indices = @transform_0, window_bounds = array<i64: 1, 16, 16, 4>}, {pipeline_mode = #tpu.pipeline_mode<synchronous>, transform_indices = @transform_1, window_bounds = array<i64: 2, 128, 4>}, {pipeline_mode = #tpu.pipeline_mode<synchronous>, transform_indices = @transform_2, window_bounds = array<i64: 2, 1, 4>}, {transform_indices = @transform_3, window_bounds = array<i64: 1, 16, 16, 4>}]} {
    %cst = arith.constant 0.000000e+00 : bf16
    %0 = vector.broadcast %cst : bf16 to vector<1x32x4xbf16>
    %c0 = arith.constant 0 : index
    %c0_0 = arith.constant 0 : index
    %c0_1 = arith.constant 0 : index
    %1 = vector.load %arg5[%c0, %c0_0, %c0_1] : memref<18x32x4xbf16, #tpu.memory_space<vmem>>, vector<1x32x4xbf16>
    tpu.vector_store %arg5[%c0, %c0_0, %c0_1], %0 {strides = array<i32>} : memref<18x32x4xbf16, #tpu.memory_space<vmem>>, vector<1x32x4xbf16>,
    %cst_2 = arith.constant 0.000000e+00 : bf16
    %2 = vector.broadcast %cst_2 : bf16 to vector<1x32x4xbf16>
    %c17 = arith.constant 17 : index
    %c0_3 = arith.constant 0 : index
    %c0_4 = arith.constant 0 : index
    %3 = vector.load %arg5[%c17, %c0_3, %c0_4] : memref<18x32x4xbf16, #tpu.memory_space<vmem>>, vector<1x32x4xbf16>
    tpu.vector_store %arg5[%c17, %c0_3, %c0_4], %2 {strides = array<i32>} : memref<18x32x4xbf16, #tpu.memory_space<vmem>>, vector<1x32x4xbf16>,
    %cst_5 = arith.constant 0.000000e+00 : bf16
    %4 = vector.broadcast %cst_5 : bf16 to vector<18x1x4xbf16>
    %c0_6 = arith.constant 0 : index
    %c7 = arith.constant 7 : index
    %c0_7 = arith.constant 0 : index
    %5 = vector.load %arg5[%c0_6, %c7, %c0_7] : memref<18x32x4xbf16, #tpu.memory_space<vmem>>, vector<18x1x4xbf16>
    tpu.vector_store %arg5[%c0_6, %c7, %c0_7], %4 {strides = array<i32>} : memref<18x32x4xbf16, #tpu.memory_space<vmem>>, vector<18x1x4xbf16>,
    %cst_8 = arith.constant 0.000000e+00 : bf16
    %6 = vector.broadcast %cst_8 : bf16 to vector<18x1x4xbf16>
    %c0_9 = arith.constant 0 : index
    %c24 = arith.constant 24 : index
    %c0_10 = arith.constant 0 : index
    %7 = vector.load %arg5[%c0_9, %c24, %c0_10] : memref<18x32x4xbf16, #tpu.memory_space<vmem>>, vector<18x1x4xbf16>
    tpu.vector_store %arg5[%c0_9, %c24, %c0_10], %6 {strides = array<i32>} : memref<18x32x4xbf16, #tpu.memory_space<vmem>>, vector<18x1x4xbf16>,
    %cst_11 = arith.constant 0.000000e+00 : bf16
    %8 = vector.broadcast %cst_11 : bf16 to vector<1x32x4xbf16>
    %c0_12 = arith.constant 0 : index
    %c0_13 = arith.constant 0 : index
    %c0_14 = arith.constant 0 : index
    %9 = vector.load %arg6[%c0_12, %c0_13, %c0_14] : memref<18x32x4xbf16, #tpu.memory_space<vmem>>, vector<1x32x4xbf16>
    tpu.vector_store %arg6[%c0_12, %c0_13, %c0_14], %8 {strides = array<i32>} : memref<18x32x4xbf16, #tpu.memory_space<vmem>>, vector<1x32x4xbf16>,
    %cst_15 = arith.constant 0.000000e+00 : bf16
    %10 = vector.broadcast %cst_15 : bf16 to vector<1x32x4xbf16>
    %c17_16 = arith.constant 17 : index
    %c0_17 = arith.constant 0 : index
    %c0_18 = arith.constant 0 : index
    %11 = vector.load %arg6[%c17_16, %c0_17, %c0_18] : memref<18x32x4xbf16, #tpu.memory_space<vmem>>, vector<1x32x4xbf16>
    tpu.vector_store %arg6[%c17_16, %c0_17, %c0_18], %10 {strides = array<i32>} : memref<18x32x4xbf16, #tpu.memory_space<vmem>>, vector<1x32x4xbf16>,
    %cst_19 = arith.constant 0.000000e+00 : bf16
    %12 = vector.broadcast %cst_19 : bf16 to vector<18x1x4xbf16>
    %c0_20 = arith.constant 0 : index
    %c7_21 = arith.constant 7 : index
    %c0_22 = arith.constant 0 : index
    %13 = vector.load %arg6[%c0_20, %c7_21, %c0_22] : memref<18x32x4xbf16, #tpu.memory_space<vmem>>, vector<18x1x4xbf16>
    tpu.vector_store %arg6[%c0_20, %c7_21, %c0_22], %12 {strides = array<i32>} : memref<18x32x4xbf16, #tpu.memory_space<vmem>>, vector<18x1x4xbf16>,
    %cst_23 = arith.constant 0.000000e+00 : bf16
    %14 = vector.broadcast %cst_23 : bf16 to vector<18x1x4xbf16>
    %c0_24 = arith.constant 0 : index
    %c24_25 = arith.constant 24 : index
    %c0_26 = arith.constant 0 : index
    %15 = vector.load %arg6[%c0_24, %c24_25, %c0_26] : memref<18x32x4xbf16, #tpu.memory_space<vmem>>, vector<18x1x4xbf16>
    tpu.vector_store %arg6[%c0_24, %c24_25, %c0_26], %14 {strides = array<i32>} : memref<18x32x4xbf16, #tpu.memory_space<vmem>>, vector<18x1x4xbf16>,
    %cst_27 = arith.constant 0.000000e+00 : bf16
    %16 = vector.broadcast %cst_27 : bf16 to vector<16x16x92xbf16>
    %c0_28 = arith.constant 0 : index
    %c0_29 = arith.constant 0 : index
    %c36 = arith.constant 36 : index
    %17 = vector.load %arg7[%c0_28, %c0_29, %c36] : memref<16x16x128xbf16, #tpu.memory_space<vmem>>, vector<16x16x92xbf16>
    tpu.vector_store %arg7[%c0_28, %c0_29, %c36], %16 {strides = array<i32>} : memref<16x16x128xbf16, #tpu.memory_space<vmem>>, vector<16x16x92xbf16>,
    %c0_30 = arith.constant 0 : index
    %c0_31 = arith.constant 0 : index
    %c0_32 = arith.constant 0 : index
    %c0_33 = arith.constant 0 : index
    %18 = vector.load %arg1[%c0_30, %c0_31, %c0_32, %c0_33] : memref<1x16x16x4xf32, #tpu.memory_space<vmem>>, vector<1x16x16x4xf32>
    %19 = vector.shape_cast %18 : vector<1x16x16x4xf32> to vector<16x16x4xf32>
    %20 = arith.truncf %19 : vector<16x16x4xf32> to vector<16x16x4xbf16>
    %c1 = arith.constant 1 : index
    %c8 = arith.constant 8 : index
    %c0_34 = arith.constant 0 : index
    %21 = vector.load %arg5[%c1, %c8, %c0_34] : memref<18x32x4xbf16, #tpu.memory_space<vmem>>, vector<16x16x4xbf16>
    tpu.vector_store %arg5[%c1, %c8, %c0_34], %20 {strides = array<i32>} : memref<18x32x4xbf16, #tpu.memory_space<vmem>>, vector<16x16x4xbf16>,
    %c0_35 = arith.constant 0 : index
    %c0_36 = arith.constant 0 : index
    %c0_37 = arith.constant 0 : index
    %22 = vector.load %arg2[%c0_35, %c0_36, %c0_37] : memref<2x128x4xbf16, #tpu.memory_space<vmem>>, vector<1x128x4xbf16>
    %23 = vector.shape_cast %22 : vector<1x128x4xbf16> to vector<128x4xbf16>
    %c0_38 = arith.constant 0 : index
    %c0_39 = arith.constant 0 : index
    %c0_40 = arith.constant 0 : index
    %24 = vector.load %arg3[%c0_38, %c0_39, %c0_40] : memref<2x1x4xf32, #tpu.memory_space<vmem>>, vector<1x1x4xf32>
    %25 = vector.shape_cast %24 : vector<1x1x4xf32> to vector<1x4xf32>
    %c0_41 = arith.constant 0 : index
    %c7_42 = arith.constant 7 : index
    %c0_43 = arith.constant 0 : index
    %26 = vector.load %arg5[%c0_41, %c7_42, %c0_43] : memref<18x32x4xbf16, #tpu.memory_space<vmem>>, vector<16x16x4xbf16>
    %c0_44 = arith.constant 0 : index
    %c0_45 = arith.constant 0 : index
    %c0_46 = arith.constant 0 : index
    %27 = vector.load %arg7[%c0_44, %c0_45, %c0_46] : memref<16x16x128xbf16, #tpu.memory_space<vmem>>, vector<16x16x4xbf16>
    tpu.vector_store %arg7[%c0_44, %c0_45, %c0_46], %26 {strides = array<i32>} : memref<16x16x128xbf16, #tpu.memory_space<vmem>>, vector<16x16x4xbf16>,
    %c0_47 = arith.constant 0 : index
    %c8_48 = arith.constant 8 : index
    %c0_49 = arith.constant 0 : index
    %28 = vector.load %arg5[%c0_47, %c8_48, %c0_49] : memref<18x32x4xbf16, #tpu.memory_space<vmem>>, vector<16x16x4xbf16>
    %c0_50 = arith.constant 0 : index
    %c0_51 = arith.constant 0 : index
    %c4 = arith.constant 4 : index
    %29 = vector.load %arg7[%c0_50, %c0_51, %c4] : memref<16x16x128xbf16, #tpu.memory_space<vmem>>, vector<16x16x4xbf16>
    tpu.vector_store %arg7[%c0_50, %c0_51, %c4], %28 {strides = array<i32>} : memref<16x16x128xbf16, #tpu.memory_space<vmem>>, vector<16x16x4xbf16>,
    %c0_52 = arith.constant 0 : index
    %c9 = arith.constant 9 : index
    %c0_53 = arith.constant 0 : index
    %30 = vector.load %arg5[%c0_52, %c9, %c0_53] : memref<18x32x4xbf16, #tpu.memory_space<vmem>>, vector<16x16x4xbf16>
    %c0_54 = arith.constant 0 : index
    %c0_55 = arith.constant 0 : index
    %c8_56 = arith.constant 8 : index
    %31 = vector.load %arg7[%c0_54, %c0_55, %c8_56] : memref<16x16x128xbf16, #tpu.memory_space<vmem>>, vector<16x16x4xbf16>
    tpu.vector_store %arg7[%c0_54, %c0_55, %c8_56], %30 {strides = array<i32>} : memref<16x16x128xbf16, #tpu.memory_space<vmem>>, vector<16x16x4xbf16>,
    %c1_57 = arith.constant 1 : index
    %c7_58 = arith.constant 7 : index
    %c0_59 = arith.constant 0 : index
    %32 = vector.load %arg5[%c1_57, %c7_58, %c0_59] : memref<18x32x4xbf16, #tpu.memory_space<vmem>>, vector<16x16x4xbf16>
    %c0_60 = arith.constant 0 : index
    %c0_61 = arith.constant 0 : index
    %c12 = arith.constant 12 : index
    %33 = vector.load %arg7[%c0_60, %c0_61, %c12] : memref<16x16x128xbf16, #tpu.memory_space<vmem>>, vector<16x16x4xbf16>
    tpu.vector_store %arg7[%c0_60, %c0_61, %c12], %32 {strides = array<i32>} : memref<16x16x128xbf16, #tpu.memory_space<vmem>>, vector<16x16x4xbf16>,
    %c1_62 = arith.constant 1 : index
    %c8_63 = arith.constant 8 : index
    %c0_64 = arith.constant 0 : index
    %34 = vector.load %arg5[%c1_62, %c8_63, %c0_64] : memref<18x32x4xbf16, #tpu.memory_space<vmem>>, vector<16x16x4xbf16>
    %c0_65 = arith.constant 0 : index
    %c0_66 = arith.constant 0 : index
    %c16 = arith.constant 16 : index
    %35 = vector.load %arg7[%c0_65, %c0_66, %c16] : memref<16x16x128xbf16, #tpu.memory_space<vmem>>, vector<16x16x4xbf16>
    tpu.vector_store %arg7[%c0_65, %c0_66, %c16], %34 {strides = array<i32>} : memref<16x16x128xbf16, #tpu.memory_space<vmem>>, vector<16x16x4xbf16>,
    %c1_67 = arith.constant 1 : index
    %c9_68 = arith.constant 9 : index
    %c0_69 = arith.constant 0 : index
    %36 = vector.load %arg5[%c1_67, %c9_68, %c0_69] : memref<18x32x4xbf16, #tpu.memory_space<vmem>>, vector<16x16x4xbf16>
    %c0_70 = arith.constant 0 : index
    %c0_71 = arith.constant 0 : index
    %c20 = arith.constant 20 : index
    %37 = vector.load %arg7[%c0_70, %c0_71, %c20] : memref<16x16x128xbf16, #tpu.memory_space<vmem>>, vector<16x16x4xbf16>
    tpu.vector_store %arg7[%c0_70, %c0_71, %c20], %36 {strides = array<i32>} : memref<16x16x128xbf16, #tpu.memory_space<vmem>>, vector<16x16x4xbf16>,
    %c2 = arith.constant 2 : index
    %c7_72 = arith.constant 7 : index
    %c0_73 = arith.constant 0 : index
    %38 = vector.load %arg5[%c2, %c7_72, %c0_73] : memref<18x32x4xbf16, #tpu.memory_space<vmem>>, vector<16x16x4xbf16>
    %c0_74 = arith.constant 0 : index
    %c0_75 = arith.constant 0 : index
    %c24_76 = arith.constant 24 : index
    %39 = vector.load %arg7[%c0_74, %c0_75, %c24_76] : memref<16x16x128xbf16, #tpu.memory_space<vmem>>, vector<16x16x4xbf16>
    tpu.vector_store %arg7[%c0_74, %c0_75, %c24_76], %38 {strides = array<i32>} : memref<16x16x128xbf16, #tpu.memory_space<vmem>>, vector<16x16x4xbf16>,
    %c2_77 = arith.constant 2 : index
    %c8_78 = arith.constant 8 : index
    %c0_79 = arith.constant 0 : index
    %40 = vector.load %arg5[%c2_77, %c8_78, %c0_79] : memref<18x32x4xbf16, #tpu.memory_space<vmem>>, vector<16x16x4xbf16>
    %c0_80 = arith.constant 0 : index
    %c0_81 = arith.constant 0 : index
    %c28 = arith.constant 28 : index
    %41 = vector.load %arg7[%c0_80, %c0_81, %c28] : memref<16x16x128xbf16, #tpu.memory_space<vmem>>, vector<16x16x4xbf16>
    tpu.vector_store %arg7[%c0_80, %c0_81, %c28], %40 {strides = array<i32>} : memref<16x16x128xbf16, #tpu.memory_space<vmem>>, vector<16x16x4xbf16>,
    %c2_82 = arith.constant 2 : index
    %c9_83 = arith.constant 9 : index
    %c0_84 = arith.constant 0 : index
    %42 = vector.load %arg5[%c2_82, %c9_83, %c0_84] : memref<18x32x4xbf16, #tpu.memory_space<vmem>>, vector<16x16x4xbf16>
    %c0_85 = arith.constant 0 : index
    %c0_86 = arith.constant 0 : index
    %c32 = arith.constant 32 : index
    %43 = vector.load %arg7[%c0_85, %c0_86, %c32] : memref<16x16x128xbf16, #tpu.memory_space<vmem>>, vector<16x16x4xbf16>
    tpu.vector_store %arg7[%c0_85, %c0_86, %c32], %42 {strides = array<i32>} : memref<16x16x128xbf16, #tpu.memory_space<vmem>>, vector<16x16x4xbf16>,
    %c0_87 = arith.constant 0 : index
    %c0_88 = arith.constant 0 : index
    %c0_89 = arith.constant 0 : index
    %44 = vector.load %arg7[%c0_87, %c0_88, %c0_89] : memref<16x16x128xbf16, #tpu.memory_space<vmem>>, vector<16x16x128xbf16>
    %45 = vector.shape_cast %44 : vector<16x16x128xbf16> to vector<256x128xbf16>
    %cst_90 = arith.constant dense<0.000000e+00> : vector<256x4xf32>
    %46 = tpu.matmul %45, %23, %cst_90 {dimension_numbers = #tpu.dot_dimension_numbers<[1], [0], [0], [1], [0, 0, 1, 1], [], []>} : vector<256x128xbf16>, vector<128x4xbf16>, vector<256x4xf32> -> vector<256x4xf32>
    %47 = vector.broadcast %25 : vector<1x4xf32> to vector<256x4xf32>
    %48 = arith.addf %46, %47 : vector<256x4xf32>
    %49 = vector.shape_cast %48 : vector<256x4xf32> to vector<16x16x4xf32>
    %50 = arith.truncf %49 : vector<16x16x4xf32> to vector<16x16x4xbf16>
    %c1_91 = arith.constant 1 : index
    %c8_92 = arith.constant 8 : index
    %c0_93 = arith.constant 0 : index
    %51 = vector.load %arg6[%c1_91, %c8_92, %c0_93] : memref<18x32x4xbf16, #tpu.memory_space<vmem>>, vector<16x16x4xbf16>
    tpu.vector_store %arg6[%c1_91, %c8_92, %c0_93], %50 {strides = array<i32>} : memref<18x32x4xbf16, #tpu.memory_space<vmem>>, vector<16x16x4xbf16>,
    %c1_94 = arith.constant 1 : index
    %c0_95 = arith.constant 0 : index
    %c0_96 = arith.constant 0 : index
    %52 = vector.load %arg2[%c1_94, %c0_95, %c0_96] : memref<2x128x4xbf16, #tpu.memory_space<vmem>>, vector<1x128x4xbf16>
    %53 = vector.shape_cast %52 : vector<1x128x4xbf16> to vector<128x4xbf16>
    %c1_97 = arith.constant 1 : index
    %c0_98 = arith.constant 0 : index
    %c0_99 = arith.constant 0 : index
    %54 = vector.load %arg3[%c1_97, %c0_98, %c0_99] : memref<2x1x4xf32, #tpu.memory_space<vmem>>, vector<1x1x4xf32>
    %55 = vector.shape_cast %54 : vector<1x1x4xf32> to vector<1x4xf32>
    %c0_100 = arith.constant 0 : index
    %c7_101 = arith.constant 7 : index
    %c0_102 = arith.constant 0 : index
    %56 = vector.load %arg6[%c0_100, %c7_101, %c0_102] : memref<18x32x4xbf16, #tpu.memory_space<vmem>>, vector<16x16x4xbf16>
    %c0_103 = arith.constant 0 : index
    %c0_104 = arith.constant 0 : index
    %c0_105 = arith.constant 0 : index
    %57 = vector.load %arg7[%c0_103, %c0_104, %c0_105] : memref<16x16x128xbf16, #tpu.memory_space<vmem>>, vector<16x16x4xbf16>
    tpu.vector_store %arg7[%c0_103, %c0_104, %c0_105], %56 {strides = array<i32>} : memref<16x16x128xbf16, #tpu.memory_space<vmem>>, vector<16x16x4xbf16>,
    %c0_106 = arith.constant 0 : index
    %c8_107 = arith.constant 8 : index
    %c0_108 = arith.constant 0 : index
    %58 = vector.load %arg6[%c0_106, %c8_107, %c0_108] : memref<18x32x4xbf16, #tpu.memory_space<vmem>>, vector<16x16x4xbf16>
    %c0_109 = arith.constant 0 : index
    %c0_110 = arith.constant 0 : index
    %c4_111 = arith.constant 4 : index
    %59 = vector.load %arg7[%c0_109, %c0_110, %c4_111] : memref<16x16x128xbf16, #tpu.memory_space<vmem>>, vector<16x16x4xbf16>
    tpu.vector_store %arg7[%c0_109, %c0_110, %c4_111], %58 {strides = array<i32>} : memref<16x16x128xbf16, #tpu.memory_space<vmem>>, vector<16x16x4xbf16>,
    %c0_112 = arith.constant 0 : index
    %c9_113 = arith.constant 9 : index
    %c0_114 = arith.constant 0 : index
    %60 = vector.load %arg6[%c0_112, %c9_113, %c0_114] : memref<18x32x4xbf16, #tpu.memory_space<vmem>>, vector<16x16x4xbf16>
    %c0_115 = arith.constant 0 : index
    %c0_116 = arith.constant 0 : index
    %c8_117 = arith.constant 8 : index
    %61 = vector.load %arg7[%c0_115, %c0_116, %c8_117] : memref<16x16x128xbf16, #tpu.memory_space<vmem>>, vector<16x16x4xbf16>
    tpu.vector_store %arg7[%c0_115, %c0_116, %c8_117], %60 {strides = array<i32>} : memref<16x16x128xbf16, #tpu.memory_space<vmem>>, vector<16x16x4xbf16>,
    %c1_118 = arith.constant 1 : index
    %c7_119 = arith.constant 7 : index
    %c0_120 = arith.constant 0 : index
    %62 = vector.load %arg6[%c1_118, %c7_119, %c0_120] : memref<18x32x4xbf16, #tpu.memory_space<vmem>>, vector<16x16x4xbf16>
    %c0_121 = arith.constant 0 : index
    %c0_122 = arith.constant 0 : index
    %c12_123 = arith.constant 12 : index
    %63 = vector.load %arg7[%c0_121, %c0_122, %c12_123] : memref<16x16x128xbf16, #tpu.memory_space<vmem>>, vector<16x16x4xbf16>
    tpu.vector_store %arg7[%c0_121, %c0_122, %c12_123], %62 {strides = array<i32>} : memref<16x16x128xbf16, #tpu.memory_space<vmem>>, vector<16x16x4xbf16>,
    %c1_124 = arith.constant 1 : index
    %c8_125 = arith.constant 8 : index
    %c0_126 = arith.constant 0 : index
    %64 = vector.load %arg6[%c1_124, %c8_125, %c0_126] : memref<18x32x4xbf16, #tpu.memory_space<vmem>>, vector<16x16x4xbf16>
    %c0_127 = arith.constant 0 : index
    %c0_128 = arith.constant 0 : index
    %c16_129 = arith.constant 16 : index
    %65 = vector.load %arg7[%c0_127, %c0_128, %c16_129] : memref<16x16x128xbf16, #tpu.memory_space<vmem>>, vector<16x16x4xbf16>
    tpu.vector_store %arg7[%c0_127, %c0_128, %c16_129], %64 {strides = array<i32>} : memref<16x16x128xbf16, #tpu.memory_space<vmem>>, vector<16x16x4xbf16>,
    %c1_130 = arith.constant 1 : index
    %c9_131 = arith.constant 9 : index
    %c0_132 = arith.constant 0 : index
    %66 = vector.load %arg6[%c1_130, %c9_131, %c0_132] : memref<18x32x4xbf16, #tpu.memory_space<vmem>>, vector<16x16x4xbf16>
    %c0_133 = arith.constant 0 : index
    %c0_134 = arith.constant 0 : index
    %c20_135 = arith.constant 20 : index
    %67 = vector.load %arg7[%c0_133, %c0_134, %c20_135] : memref<16x16x128xbf16, #tpu.memory_space<vmem>>, vector<16x16x4xbf16>
    tpu.vector_store %arg7[%c0_133, %c0_134, %c20_135], %66 {strides = array<i32>} : memref<16x16x128xbf16, #tpu.memory_space<vmem>>, vector<16x16x4xbf16>,
    %c2_136 = arith.constant 2 : index
    %c7_137 = arith.constant 7 : index
    %c0_138 = arith.constant 0 : index
    %68 = vector.load %arg6[%c2_136, %c7_137, %c0_138] : memref<18x32x4xbf16, #tpu.memory_space<vmem>>, vector<16x16x4xbf16>
    %c0_139 = arith.constant 0 : index
    %c0_140 = arith.constant 0 : index
    %c24_141 = arith.constant 24 : index
    %69 = vector.load %arg7[%c0_139, %c0_140, %c24_141] : memref<16x16x128xbf16, #tpu.memory_space<vmem>>, vector<16x16x4xbf16>
    tpu.vector_store %arg7[%c0_139, %c0_140, %c24_141], %68 {strides = array<i32>} : memref<16x16x128xbf16, #tpu.memory_space<vmem>>, vector<16x16x4xbf16>,
    %c2_142 = arith.constant 2 : index
    %c8_143 = arith.constant 8 : index
    %c0_144 = arith.constant 0 : index
    %70 = vector.load %arg6[%c2_142, %c8_143, %c0_144] : memref<18x32x4xbf16, #tpu.memory_space<vmem>>, vector<16x16x4xbf16>
    %c0_145 = arith.constant 0 : index
    %c0_146 = arith.constant 0 : index
    %c28_147 = arith.constant 28 : index
    %71 = vector.load %arg7[%c0_145, %c0_146, %c28_147] : memref<16x16x128xbf16, #tpu.memory_space<vmem>>, vector<16x16x4xbf16>
    tpu.vector_store %arg7[%c0_145, %c0_146, %c28_147], %70 {strides = array<i32>} : memref<16x16x128xbf16, #tpu.memory_space<vmem>>, vector<16x16x4xbf16>,
    %c2_148 = arith.constant 2 : index
    %c9_149 = arith.constant 9 : index
    %c0_150 = arith.constant 0 : index
    %72 = vector.load %arg6[%c2_148, %c9_149, %c0_150] : memref<18x32x4xbf16, #tpu.memory_space<vmem>>, vector<16x16x4xbf16>
    %c0_151 = arith.constant 0 : index
    %c0_152 = arith.constant 0 : index
    %c32_153 = arith.constant 32 : index
    %73 = vector.load %arg7[%c0_151, %c0_152, %c32_153] : memref<16x16x128xbf16, #tpu.memory_space<vmem>>, vector<16x16x4xbf16>
    tpu.vector_store %arg7[%c0_151, %c0_152, %c32_153], %72 {strides = array<i32>} : memref<16x16x128xbf16, #tpu.memory_space<vmem>>, vector<16x16x4xbf16>,
    %c0_154 = arith.constant 0 : index
    %c0_155 = arith.constant 0 : index
    %c0_156 = arith.constant 0 : index
    %74 = vector.load %arg7[%c0_154, %c0_155, %c0_156] : memref<16x16x128xbf16, #tpu.memory_space<vmem>>, vector<16x16x128xbf16>
    %75 = vector.shape_cast %74 : vector<16x16x128xbf16> to vector<256x128xbf16>
    %cst_157 = arith.constant dense<0.000000e+00> : vector<256x4xf32>
    %76 = tpu.matmul %75, %53, %cst_157 {dimension_numbers = #tpu.dot_dimension_numbers<[1], [0], [0], [1], [0, 0, 1, 1], [], []>} : vector<256x128xbf16>, vector<128x4xbf16>, vector<256x4xf32> -> vector<256x4xf32>
    %77 = vector.broadcast %55 : vector<1x4xf32> to vector<256x4xf32>
    %78 = arith.addf %76, %77 : vector<256x4xf32>
    %79 = vector.shape_cast %78 : vector<256x4xf32> to vector<16x16x4xf32>
    %c0_158 = arith.constant 0 : index
    %c0_159 = arith.constant 0 : index
    %c0_160 = arith.constant 0 : index
    %c0_161 = arith.constant 0 : index
    %80 = vector.load %arg1[%c0_158, %c0_159, %c0_160, %c0_161] : memref<1x16x16x4xf32, #tpu.memory_space<vmem>>, vector<1x16x16x4xf32>
    %81 = vector.shape_cast %80 : vector<1x16x16x4xf32> to vector<16x16x4xf32>
    %82 = arith.addf %79, %81 : vector<16x16x4xf32>
    %cst_162 = arith.constant 0.000000e+00 : f32
    %83 = vector.broadcast %cst_162 : f32 to vector<16x16x4xf32>
    %84 = arith.cmpf ogt, %82, %83 : vector<16x16x4xf32>
    %cst_163 = arith.constant 2.000000e-02 : f32
    %85 = vector.broadcast %cst_163 : f32 to vector<16x16x4xf32>
    %86 = arith.mulf %85, %82 : vector<16x16x4xf32>
    %87 = arith.select %84, %82, %86 : vector<16x16x4xi1>, vector<16x16x4xf32>
    %c0_164 = arith.constant 0 : index
    %c0_165 = arith.constant 0 : index
    %c0_166 = arith.constant 0 : index
    %c0_167 = arith.constant 0 : index
    %88 = vector.load %arg4[%c0_164, %c0_165, %c0_166, %c0_167] : memref<1x16x16x4xf32, #tpu.memory_space<vmem>>, vector<1x16x16x4xf32>
    %89 = vector.shape_cast %88 : vector<1x16x16x4xf32> to vector<16x16x4xf32>
    %90 = vector.shape_cast %87 : vector<16x16x4xf32> to vector<1x16x16x4xf32>
    tpu.vector_store %arg4[%c0_164, %c0_165, %c0_166, %c0_167], %90 {strides = array<i32>} : memref<1x16x16x4xf32, #tpu.memory_space<vmem>>, vector<1x16x16x4xf32>,
    return
  }
  func.func @transform_0(%arg0: i32) -> (i32, i32, i32, i32) {
    %c0_i32 = arith.constant 0 : i32
    %c0_i32_0 = arith.constant 0 : i32
    %c0_i32_1 = arith.constant 0 : i32
    %c0_i32_2 = arith.constant 0 : i32
    return %arg0, %c0_i32, %c0_i32_0, %c0_i32_1 : i32, i32, i32, i32
  }
  func.func @transform_1(%arg0: i32) -> (i32, i32, i32) {
    %c0_i32 = arith.constant 0 : i32
    %c0_i32_0 = arith.constant 0 : i32
    %c0_i32_1 = arith.constant 0 : i32
    %c0_i32_2 = arith.constant 0 : i32
    return %c0_i32, %c0_i32_0, %c0_i32_1 : i32, i32, i32
  }
  func.func @transform_2(%arg0: i32) -> (i32, i32, i32) {
    %c0_i32 = arith.constant 0 : i32
    %c0_i32_0 = arith.constant 0 : i32
    %c0_i32_1 = arith.constant 0 : i32
    %c0_i32_2 = arith.constant 0 : i32
    return %c0_i32, %c0_i32_0, %c0_i32_1 : i32, i32, i32
  }
  func.func @transform_3(%arg0: i32) -> (i32, i32, i32, i32) {
    %c0_i32 = arith.constant 0 : i32
    %c0_i32_0 = arith.constant 0 : i32
    %c0_i32_1 = arith.constant 0 : i32
    %c0_i32_2 = arith.constant 0 : i32
    return %arg0, %c0_i32, %c0_i32_0, %c0_i32_1 : i32, i32, i32, i32
  }
}

</mosaic_0001>

<llo_original>
// kernel: residual_block_forward.1
$region0: #{residual_block_forward.1}
  #allocation0 [shape = 'u32[]', space=smem, size = 0x4, offset = 0x4, fixed_abs, tag = 'smem constant byte address 0x4 - core index']
  #allocation1 [shape = 'u32[144,128]{1,0:T(1,128)}', space=vmem, size = 0x12000, scoped, tag = 'internal scratch']
  #allocation2 [shape = 'bf16[18,32,4]{2,1,0:T(16,128)(2,1)}', space=vmem, size = 0x24000, scoped, tag = 'scratch operand']
  #allocation3 [shape = 'bf16[18,32,4]{2,1,0:T(16,128)(2,1)}', space=vmem, size = 0x24000, scoped, tag = 'scratch operand']
  #allocation4 [shape = 'bf16[16,16,128]{2,1,0:T(16,128)(2,1)}', space=vmem, size = 0x10000, scoped, tag = 'scratch operand']
  %s0 = inlined_call_operand.vmem [shape: f32[2,16,16,4], index: 0, kind: input, shape index: {}]
  %s1 = inlined_call_operand.vmem [shape: bf16[2,128,4], index: 1, kind: input, shape index: {}]
  %s2 = inlined_call_operand.vmem [shape: f32[2,1,4], index: 2, kind: input, shape index: {}]
  %s3 = inlined_call_operand.vmem [shape: f32[2,16,16,4], index: 3, kind: output, shape index: {}]
  %s4 = sld [smem:[#allocation0]]
  $region45: #{residual_block_forward.1} parent=0
    _
  %s6 = ssub.s32 1, %s4
  %s7 = scalar_select 0, %s6, %s4
  loop: start=0, step=1, limit=4
  $region2: #{residual_block_forward.1} parent=0 // loop_pre_header
    _
  $region3: #{residual_block_forward.1} parent=0 // loop_header
    %s9 = sphi 0, %s13
    %p10 = scmp.ge.s32.totalorder %s9, 4
    %s19 = sphi 0, %s21
    %s22 = sphi 0, %s19
    %s23 = sphi 0, %s22
    %s39 = sphi 0, %s23
    %s43 = sphi 0, %s43
    %s45 = sphi 0, %s43
    %s46 = sphi 0, %s45
    %s60 = sphi 0, %s46
    %s64 = sphi 0, %s64
    %s66 = sphi 0, %s64
    %s67 = sphi 0, %s66
    %s81 = sphi 0, %s67
    %s87 = sphi 0, %s89
    %s90 = sphi 0, %s87
    %s91 = sphi 0, %s90
    %s107 = sphi 0, %s91
  $region4: #{residual_block_forward.1} parent=0 // loop_header_branch
    %12 = sbr.rel (%p10) target = $region8
  $region5: #{residual_block_forward.1} parent=0 // loop_body
    %s14 = ssub.s32 %s9, 1
    %s15 = ssub.s32 %s9, 2
    %s16 = sadd.s32 %s9, 1
    %s17 = ssub.s32 %s9, %s16
    %p18 = scmp.eq.s32.totalorder %s17, 0
    %s20 = sadd.s32 %s19, 1
    %s21 = scalar_select %p18, %s19, %s20
    %p24 = pneg %p18
    %p25 = scmp.eq.s32.totalorder %s9, 1
    %p26 = por %p24, %p25
    %p27 = scmp.ne.s32.totalorder %s19, %s22
    %p28 = scmp.eq.s32.totalorder %s9, 0
    %p29 = por %p27, %p28
    %p30 = scmp.ne.s32.totalorder %s19, %s22
    %p31 = scmp.eq.s32.totalorder %s14, 1
    %p32 = por %p30, %p31
    %p33 = scmp.ne.s32.totalorder %s22, %s23
    %p34 = scmp.eq.s32.totalorder %s14, 0
    %p35 = por %p33, %p34
    %p36 = scmp.ne.s32.totalorder %s22, %s23
    %p37 = scmp.eq.s32.totalorder %s15, 1
    %p38 = por %p36, %p37
    %p40 = scmp.ne.s32.totalorder %s23, %s39
    %p41 = scmp.eq.s32.totalorder %s15, 0
    %p42 = por %p40, %p41
    %s44 = sadd.s32 %s43, 1
    %p47 = scmp.eq.s32.totalorder %s9, 1
    %p48 = scmp.ne.s32.totalorder %s43, %s45
    %p49 = scmp.eq.s32.totalorder %s9, 0
    %p50 = por %p48, %p49
    %p51 = scmp.ne.s32.totalorder %s43, %s45
    %p52 = scmp.eq.s32.totalorder %s14, 1
    %p53 = por %p51, %p52
    %p54 = scmp.ne.s32.totalorder %s45, %s46
    %p55 = scmp.eq.s32.totalorder %s14, 0
    %p56 = por %p54, %p55
    %p57 = scmp.ne.s32.totalorder %s45, %s46
    %p58 = scmp.eq.s32.totalorder %s15, 1
    %p59 = por %p57, %p58
    %p61 = scmp.ne.s32.totalorder %s46, %s60
    %p62 = scmp.eq.s32.totalorder %s15, 0
    %p63 = por %p61, %p62
    %s65 = sadd.s32 %s64, 1
    %p68 = scmp.eq.s32.totalorder %s9, 1
    %p69 = scmp.ne.s32.totalorder %s64, %s66
    %p70 = scmp.eq.s32.totalorder %s9, 0
    %p71 = por %p69, %p70
    %p72 = scmp.ne.s32.totalorder %s64, %s66
    %p73 = scmp.eq.s32.totalorder %s14, 1
    %p74 = por %p72, %p73
    %p75 = scmp.ne.s32.totalorder %s66, %s67
    %p76 = scmp.eq.s32.totalorder %s14, 0
    %p77 = por %p75, %p76
    %p78 = scmp.ne.s32.totalorder %s66, %s67
    %p79 = scmp.eq.s32.totalorder %s15, 1
    %p80 = por %p78, %p79
    %p82 = scmp.ne.s32.totalorder %s67, %s81
    %p83 = scmp.eq.s32.totalorder %s15, 0
    %p84 = por %p82, %p83
    %s85 = ssub.s32 %s9, %s16
    %p86 = scmp.eq.s32.totalorder %s85, 0
    %s88 = sadd.s32 %s87, 1
    %s89 = scalar_select %p86, %s87, %s88
    %p92 = pneg %p86
    %p93 = scmp.eq.s32.totalorder %s9, 1
    %p94 = por %p92, %p93
    %p95 = scmp.ne.s32.totalorder %s87, %s90
    %p96 = scmp.eq.s32.totalorder %s9, 0
    %p97 = por %p95, %p96
    %p98 = scmp.ne.s32.totalorder %s87, %s90
    %p99 = scmp.eq.s32.totalorder %s14, 1
    %p100 = por %p98, %p99
    %p101 = scmp.ne.s32.totalorder %s90, %s91
    %p102 = scmp.eq.s32.totalorder %s14, 0
    %p103 = por %p101, %p102
    %p104 = scmp.ne.s32.totalorder %s90, %s91
    %p105 = scmp.eq.s32.totalorder %s15, 1
    %p106 = por %p104, %p105
    %p108 = scmp.ne.s32.totalorder %s91, %s107
    %p109 = scmp.eq.s32.totalorder %s15, 0
    %p110 = por %p108, %p109
    %p111 = scmp.le.s32.totalorder 1, %s9
    %p112 = scmp.lt.s32.totalorder %s9, 3
    %p113 = pnand %p111, %p112
    %p114 = pneg %p113
    // Predicated region
    $region9: #{residual_block_forward.1} parent=5 // pred_check
      _
    $region10: #{residual_block_forward.1} parent=5 // pred_check_branch
      %116 = sbr.rel (%p113) target = $region12
    $region11: #{residual_block_forward.1} parent=5 // pred_region
      %s117 = ssub.s32 %s9, 1
      // Predicated region
      $region13: #{residual_block_forward.1} parent=11 // pred_check
        %p118 = pneg %p56
      $region14: #{residual_block_forward.1} parent=11 // pred_check_branch
        %120 = sbr.rel (%p118) target = $region16
      $region15: #{residual_block_forward.1} parent=11 // pred_region
        _
      $region16: #{residual_block_forward.1} parent=11 // pred_fallthru
        _
      // Predicated region
      $region17: #{residual_block_forward.1} parent=11 // pred_check
        %p121 = pneg %p77
      $region18: #{residual_block_forward.1} parent=11 // pred_check_branch
        %123 = sbr.rel (%p121) target = $region20
      $region19: #{residual_block_forward.1} parent=11 // pred_region
        _
      $region20: #{residual_block_forward.1} parent=11 // pred_fallthru
        _
    $region12: #{residual_block_forward.1} parent=5 // pred_fallthru
      _
    %p124 = scmp.lt.s32.totalorder %s9, 2
    // Predicated region
    $region21: #{residual_block_forward.1} parent=5 // pred_check
      %p125 = pneg %p124
    $region22: #{residual_block_forward.1} parent=5 // pred_check_branch
      %127 = sbr.rel (%p125) target = $region24
    $region23: #{residual_block_forward.1} parent=5 // pred_region
      // Predicated region
      $region25: #{residual_block_forward.1} parent=23 // pred_check
        %p128 = pneg %p29
      $region26: #{residual_block_forward.1} parent=23 // pred_check_branch
        %130 = sbr.rel (%p128) target = $region28
      $region27: #{residual_block_forward.1} parent=23 // pred_region
        %p131 = scmp.lt.s32.totalorder %s9, 1
        %s132 = scalar_select %p131, %s9, 1
        %s133 = smul.addr %s132, 32
        %s134 = smul.addr %s133, 8
        %s135 = scalar_lea.vmem %s0, %s134
      $region28: #{residual_block_forward.1} parent=23 // pred_fallthru
        _
    $region24: #{residual_block_forward.1} parent=5 // pred_fallthru
      _
    %p136 = scmp.le.s32.totalorder 1, %s9
    %p137 = scmp.lt.s32.totalorder %s9, 3
    %p138 = pnand %p136, %p137
    %p139 = pneg %p138
    // Predicated region
    $region29: #{residual_block_forward.1} parent=5 // pred_check
      _
    $region30: #{residual_block_forward.1} parent=5 // pred_check_branch
      %141 = sbr.rel (%p138) target = $region32
    $region31: #{residual_block_forward.1} parent=5 // pred_region
      %s142 = ssub.s32 %s9, 1
      %p143 = scmp.lt.s32.totalorder %s14, 1
      %s144 = scalar_select %p143, %s14, 1
      %s145 = smul.addr %s144, 32
      %s146 = smul.addr %s145, 8
      %s147 = scalar_lea.vmem %s0, %s146
      %p148 = pneg %p35
      %p149 = pneg %p32
      %p150 = pneg %p56
      %p151 = pneg %p53
      %p152 = pneg %p77
      %p153 = pneg %p74
      %p154 = pneg %p103
      %p155 = pneg %p100
      %p156 = scmp.lt.s32.totalorder %s14, 1
      %s157 = scalar_select %p156, %s14, 1
      %s158 = smul.addr %s157, 32
      %s159 = smul.addr %s158, 8
      %s160 = scalar_lea.vmem %s3, %s159
      %p161 = scmp.lt.s32.totalorder %s14, 1
      %s162 = scalar_select %p161, %s14, 1
      %s163 = smul.addr %s162, 32
      %s164 = smul.addr %s163, 8
      %s165 = scalar_lea.vmem %s0, %s164
      %p166 = scmp.lt.s32.totalorder %s14, 1
      %s167 = scalar_select %p166, %s14, 1
      %s168 = smul.addr %s167, 32
      %s169 = smul.addr %s168, 8
      %s170 = scalar_lea.vmem %s3, %s169
      %vm172 = vcmask 31744
      %173 = vst.msk [vmem:[#allocation2] sm:$0xff] %vm172, 0
      %174 = vst.msk [vmem:[#allocation2 + $0x8] sm:$0xff] %vm172, 0
      %s175 = scalar_lea.vmem [#allocation2], 272
      %176 = vst.msk [vmem:[%s175] sm:$0xff] %vm172, 0
      %177 = vst.msk [vmem:[%s175 + $0x8] sm:$0xff] %vm172, 0
      %vm178 = vcmask 27651
      %vm179 = vsmask.f32 7950
      %vm180 = vmand %vm178, %vm179
      %v181 = vld [vmem:[#allocation2] sm:$0x8]
      %v182 = vsel %vm180, 0, %v181
      %183 = vst [vmem:[#allocation2] sm:$0x8] %v182
      %v184 = vld [vmem:[#allocation2 + $0x10] sm:$0x8]
      %v185 = vsel %vm180, 0, %v184
      %186 = vst [vmem:[#allocation2 + $0x10] sm:$0x8] %v185
      %v187 = vld [vmem:[#allocation2 + $0x20] sm:$0x8]
      %v188 = vsel %vm180, 0, %v187
      %189 = vst [vmem:[#allocation2 + $0x20] sm:$0x8] %v188
      %v190 = vld [vmem:[#allocation2 + $0x30] sm:$0x8]
      %v191 = vsel %vm180, 0, %v190
      %192 = vst [vmem:[#allocation2 + $0x30] sm:$0x8] %v191
      %v193 = vld [vmem:[#allocation2 + $0x40] sm:$0x8]
      %v194 = vsel %vm180, 0, %v193
      %195 = vst [vmem:[#allocation2 + $0x40] sm:$0x8] %v194
      %v196 = vld [vmem:[#allocation2 + $0x50] sm:$0x8]
      %v197 = vsel %vm180, 0, %v196
      %198 = vst [vmem:[#allocation2 + $0x50] sm:$0x8] %v197
      %v199 = vld [vmem:[#allocation2 + $0x60] sm:$0x8]
      %v200 = vsel %vm180, 0, %v199
      %201 = vst [vmem:[#allocation2 + $0x60] sm:$0x8] %v200
      %v202 = vld [vmem:[#allocation2 + $0x70] sm:$0x8]
      %v203 = vsel %vm180, 0, %v202
      %204 = vst [vmem:[#allocation2 + $0x70] sm:$0x8] %v203
      %v205 = vld [vmem:[#allocation2 + $0x80] sm:$0x8]
      %v206 = vsel %vm180, 0, %v205
      %207 = vst [vmem:[#allocation2 + $0x80] sm:$0x8] %v206
      %v208 = vld [vmem:[#allocation2 + $0x90] sm:$0x8]
      %v209 = vsel %vm180, 0, %v208
      %210 = vst [vmem:[#allocation2 + $0x90] sm:$0x8] %v209
      %v211 = vld [vmem:[#allocation2 + $0xa0] sm:$0x8]
      %v212 = vsel %vm180, 0, %v211
      %213 = vst [vmem:[#allocation2 + $0xa0] sm:$0x8] %v212
      %v214 = vld [vmem:[#allocation2 + $0xb0] sm:$0x8]
      %v215 = vsel %vm180, 0, %v214
      %216 = vst [vmem:[#allocation2 + $0xb0] sm:$0x8] %v215
      %v217 = vld [vmem:[#allocation2 + $0xc0] sm:$0x8]
      %v218 = vsel %vm180, 0, %v217
      %219 = vst [vmem:[#allocation2 + $0xc0] sm:$0x8] %v218
      %v220 = vld [vmem:[#allocation2 + $0xd0] sm:$0x8]
      %v221 = vsel %vm180, 0, %v220
      %222 = vst [vmem:[#allocation2 + $0xd0] sm:$0x8] %v221
      %v223 = vld [vmem:[#allocation2 + $0xe0] sm:$0x8]
      %v224 = vsel %vm180, 0, %v223
      %225 = vst [vmem:[#allocation2 + $0xe0] sm:$0x8] %v224
      %v226 = vld [vmem:[#allocation2 + $0xf0] sm:$0x8]
      %v227 = vsel %vm180, 0, %v226
      %228 = vst [vmem:[#allocation2 + $0xf0] sm:$0x8] %v227
      %v229 = vld [vmem:[#allocation2 + $0x100] sm:$0x8]
      %v230 = vsel %vm180, 0, %v229
      %231 = vst [vmem:[#allocation2 + $0x100] sm:$0x8] %v230
      %v232 = vld [vmem:[#allocation2 + $0x110] sm:$0x8]
      %v233 = vsel %vm180, 0, %v232
      %234 = vst [vmem:[#allocation2 + $0x110] sm:$0x8] %v233
      %vm235 = vcmask 28676
      %vm236 = vsmask.f32 4352
      %vm237 = vmand %vm235, %vm236
      %v238 = vld [vmem:[#allocation2 + $0x8] sm:$0x10]
      %v239 = vsel %vm237, 0, %v238
      %240 = vst [vmem:[#allocation2 + $0x8] sm:$0x10] %v239
      %v241 = vld [vmem:[#allocation2 + $0x18] sm:$0x10]
      %v242 = vsel %vm237, 0, %v241
      %243 = vst [vmem:[#allocation2 + $0x18] sm:$0x10] %v242
      %v244 = vld [vmem:[#allocation2 + $0x28] sm:$0x10]
      %v245 = vsel %vm237, 0, %v244
      %246 = vst [vmem:[#allocation2 + $0x28] sm:$0x10] %v245
      %v247 = vld [vmem:[#allocation2 + $0x38] sm:$0x10]
      %v248 = vsel %vm237, 0, %v247
      %249 = vst [vmem:[#allocation2 + $0x38] sm:$0x10] %v248
      %v250 = vld [vmem:[#allocation2 + $0x48] sm:$0x10]
      %v251 = vsel %vm237, 0, %v250
      %252 = vst [vmem:[#allocation2 + $0x48] sm:$0x10] %v251
      %v253 = vld [vmem:[#allocation2 + $0x58] sm:$0x10]
      %v254 = vsel %vm237, 0, %v253
      %255 = vst [vmem:[#allocation2 + $0x58] sm:$0x10] %v254
      %v256 = vld [vmem:[#allocation2 + $0x68] sm:$0x10]
      %v257 = vsel %vm237, 0, %v256
      %258 = vst [vmem:[#allocation2 + $0x68] sm:$0x10] %v257
      %v259 = vld [vmem:[#allocation2 + $0x78] sm:$0x10]
      %v260 = vsel %vm237, 0, %v259
      %261 = vst [vmem:[#allocation2 + $0x78] sm:$0x10] %v260
      %v262 = vld [vmem:[#allocation2 + $0x88] sm:$0x10]
      %v263 = vsel %vm237, 0, %v262
      %264 = vst [vmem:[#allocation2 + $0x88] sm:$0x10] %v263
      %v265 = vld [vmem:[#allocation2 + $0x98] sm:$0x10]
      %v266 = vsel %vm237, 0, %v265
      %267 = vst [vmem:[#allocation2 + $0x98] sm:$0x10] %v266
      %v268 = vld [vmem:[#allocation2 + $0xa8] sm:$0x10]
      %v269 = vsel %vm237, 0, %v268
      %270 = vst [vmem:[#allocation2 + $0xa8] sm:$0x10] %v269
      %v271 = vld [vmem:[#allocation2 + $0xb8] sm:$0x10]
      %v272 = vsel %vm237, 0, %v271
      %273 = vst [vmem:[#allocation2 + $0xb8] sm:$0x10] %v272
      %v274 = vld [vmem:[#allocation2 + $0xc8] sm:$0x10]
      %v275 = vsel %vm237, 0, %v274
      %276 = vst [vmem:[#allocation2 + $0xc8] sm:$0x10] %v275
      %v277 = vld [vmem:[#allocation2 + $0xd8] sm:$0x10]
      %v278 = vsel %vm237, 0, %v277
      %279 = vst [vmem:[#allocation2 + $0xd8] sm:$0x10] %v278
      %v280 = vld [vmem:[#allocation2 + $0xe8] sm:$0x10]
      %v281 = vsel %vm237, 0, %v280
      %282 = vst [vmem:[#allocation2 + $0xe8] sm:$0x10] %v281
      %v283 = vld [vmem:[#allocation2 + $0xf8] sm:$0x10]
      %v284 = vsel %vm237, 0, %v283
      %285 = vst [vmem:[#allocation2 + $0xf8] sm:$0x10] %v284
      %v286 = vld [vmem:[#allocation2 + $0x108] sm:$0x10]
      %v287 = vsel %vm237, 0, %v286
      %288 = vst [vmem:[#allocation2 + $0x108] sm:$0x10] %v287
      %v289 = vld [vmem:[#allocation2 + $0x118] sm:$0x10]
      %v290 = vsel %vm237, 0, %v289
      %291 = vst [vmem:[#allocation2 + $0x118] sm:$0x10] %v290
      %292 = vst.msk [vmem:[#allocation3] sm:$0xff] %vm172, 0
      %293 = vst.msk [vmem:[#allocation3 + $0x8] sm:$0xff] %vm172, 0
      %s294 = scalar_lea.vmem [#allocation3], 272
      %295 = vst.msk [vmem:[%s294] sm:$0xff] %vm172, 0
      %296 = vst.msk [vmem:[%s294 + $0x8] sm:$0xff] %vm172, 0
      %v297 = vld [vmem:[#allocation3] sm:$0x8]
      %v298 = vsel %vm180, 0, %v297
      %299 = vst [vmem:[#allocation3] sm:$0x8] %v298
      %v300 = vld [vmem:[#allocation3 + $0x10] sm:$0x8]
      %v301 = vsel %vm180, 0, %v300
      %302 = vst [vmem:[#allocation3 + $0x10] sm:$0x8] %v301
      %v303 = vld [vmem:[#allocation3 + $0x20] sm:$0x8]
      %v304 = vsel %vm180, 0, %v303
      %305 = vst [vmem:[#allocation3 + $0x20] sm:$0x8] %v304
      %v306 = vld [vmem:[#allocation3 + $0x30] sm:$0x8]
      %v307 = vsel %vm180, 0, %v306
      %308 = vst [vmem:[#allocation3 + $0x30] sm:$0x8] %v307
      %v309 = vld [vmem:[#allocation3 + $0x40] sm:$0x8]
      %v310 = vsel %vm180, 0, %v309
      %311 = vst [vmem:[#allocation3 + $0x40] sm:$0x8] %v310
      %v312 = vld [vmem:[#allocation3 + $0x50] sm:$0x8]
      %v313 = vsel %vm180, 0, %v312
      %314 = vst [vmem:[#allocation3 + $0x50] sm:$0x8] %v313
      %v315 = vld [vmem:[#allocation3 + $0x60] sm:$0x8]
      %v316 = vsel %vm180, 0, %v315
      %317 = vst [vmem:[#allocation3 + $0x60] sm:$0x8] %v316
      %v318 = vld [vmem:[#allocation3 + $0x70] sm:$0x8]
      %v319 = vsel %vm180, 0, %v318
      %320 = vst [vmem:[#allocation3 + $0x70] sm:$0x8] %v319
      %v321 = vld [vmem:[#allocation3 + $0x80] sm:$0x8]
      %v322 = vsel %vm180, 0, %v321
      %323 = vst [vmem:[#allocation3 + $0x80] sm:$0x8] %v322
      %v324 = vld [vmem:[#allocation3 + $0x90] sm:$0x8]
      %v325 = vsel %vm180, 0, %v324
      %326 = vst [vmem:[#allocation3 + $0x90] sm:$0x8] %v325
      %v327 = vld [vmem:[#allocation3 + $0xa0] sm:$0x8]
      %v328 = vsel %vm180, 0, %v327
      %329 = vst [vmem:[#allocation3 + $0xa0] sm:$0x8] %v328
      %v330 = vld [vmem:[#allocation3 + $0xb0] sm:$0x8]
      %v331 = vsel %vm180, 0, %v330
      %332 = vst [vmem:[#allocation3 + $0xb0] sm:$0x8] %v331
      %v333 = vld [vmem:[#allocation3 + $0xc0] sm:$0x8]
      %v334 = vsel %vm180, 0, %v333
      %335 = vst [vmem:[#allocation3 + $0xc0] sm:$0x8] %v334
      %v336 = vld [vmem:[#allocation3 + $0xd0] sm:$0x8]
      %v337 = vsel %vm180, 0, %v336
      %338 = vst [vmem:[#allocation3 + $0xd0] sm:$0x8] %v337
      %v339 = vld [vmem:[#allocation3 + $0xe0] sm:$0x8]
      %v340 = vsel %vm180, 0, %v339
      %341 = vst [vmem:[#allocation3 + $0xe0] sm:$0x8] %v340
      %v342 = vld [vmem:[#allocation3 + $0xf0] sm:$0x8]
      %v343 = vsel %vm180, 0, %v342
      %344 = vst [vmem:[#allocation3 + $0xf0] sm:$0x8] %v343
      %v345 = vld [vmem:[#allocation3 + $0x100] sm:$0x8]
      %v346 = vsel %vm180, 0, %v345
      %347 = vst [vmem:[#allocation3 + $0x100] sm:$0x8] %v346
      %v348 = vld [vmem:[#allocation3 + $0x110] sm:$0x8]
      %v349 = vsel %vm180, 0, %v348
      %350 = vst [vmem:[#allocation3 + $0x110] sm:$0x8] %v349
      %v351 = vld [vmem:[#allocation3 + $0x8] sm:$0x10]
      %v352 = vsel %vm237, 0, %v351
      %353 = vst [vmem:[#allocation3 + $0x8] sm:$0x10] %v352
      %v354 = vld [vmem:[#allocation3 + $0x18] sm:$0x10]
      %v355 = vsel %vm237, 0, %v354
      %356 = vst [vmem:[#allocation3 + $0x18] sm:$0x10] %v355
      %v357 = vld [vmem:[#allocation3 + $0x28] sm:$0x10]
      %v358 = vsel %vm237, 0, %v357
      %359 = vst [vmem:[#allocation3 + $0x28] sm:$0x10] %v358
      %v360 = vld [vmem:[#allocation3 + $0x38] sm:$0x10]
      %v361 = vsel %vm237, 0, %v360
      %362 = vst [vmem:[#allocation3 + $0x38] sm:$0x10] %v361
      %v363 = vld [vmem:[#allocation3 + $0x48] sm:$0x10]
      %v364 = vsel %vm237, 0, %v363
      %365 = vst [vmem:[#allocation3 + $0x48] sm:$0x10] %v364
      %v366 = vld [vmem:[#allocation3 + $0x58] sm:$0x10]
      %v367 = vsel %vm237, 0, %v366
      %368 = vst [vmem:[#allocation3 + $0x58] sm:$0x10] %v367
      %v369 = vld [vmem:[#allocation3 + $0x68] sm:$0x10]
      %v370 = vsel %vm237, 0, %v369
      %371 = vst [vmem:[#allocation3 + $0x68] sm:$0x10] %v370
      %v372 = vld [vmem:[#allocation3 + $0x78] sm:$0x10]
      %v373 = vsel %vm237, 0, %v372
      %374 = vst [vmem:[#allocation3 + $0x78] sm:$0x10] %v373
      %v375 = vld [vmem:[#allocation3 + $0x88] sm:$0x10]
      %v376 = vsel %vm237, 0, %v375
      %377 = vst [vmem:[#allocation3 + $0x88] sm:$0x10] %v376
      %v378 = vld [vmem:[#allocation3 + $0x98] sm:$0x10]
      %v379 = vsel %vm237, 0, %v378
      %380 = vst [vmem:[#allocation3 + $0x98] sm:$0x10] %v379
      %v381 = vld [vmem:[#allocation3 + $0xa8] sm:$0x10]
      %v382 = vsel %vm237, 0, %v381
      %383 = vst [vmem:[#allocation3 + $0xa8] sm:$0x10] %v382
      %v384 = vld [vmem:[#allocation3 + $0xb8] sm:$0x10]
      %v385 = vsel %vm237, 0, %v384
      %386 = vst [vmem:[#allocation3 + $0xb8] sm:$0x10] %v385
      %v387 = vld [vmem:[#allocation3 + $0xc8] sm:$0x10]
      %v388 = vsel %vm237, 0, %v387
      %389 = vst [vmem:[#allocation3 + $0xc8] sm:$0x10] %v388
      %v390 = vld [vmem:[#allocation3 + $0xd8] sm:$0x10]
      %v391 = vsel %vm237, 0, %v390
      %392 = vst [vmem:[#allocation3 + $0xd8] sm:$0x10] %v391
      %v393 = vld [vmem:[#allocation3 + $0xe8] sm:$0x10]
      %v394 = vsel %vm237, 0, %v393
      %395 = vst [vmem:[#allocation3 + $0xe8] sm:$0x10] %v394
      %v396 = vld [vmem:[#allocation3 + $0xf8] sm:$0x10]
      %v397 = vsel %vm237, 0, %v396
      %398 = vst [vmem:[#allocation3 + $0xf8] sm:$0x10] %v397
      %v399 = vld [vmem:[#allocation3 + $0x108] sm:$0x10]
      %v400 = vsel %vm237, 0, %v399
      %401 = vst [vmem:[#allocation3 + $0x108] sm:$0x10] %v400
      %v402 = vld [vmem:[#allocation3 + $0x118] sm:$0x10]
      %v403 = vsel %vm237, 0, %v402
      %404 = vst [vmem:[#allocation3 + $0x118] sm:$0x10] %v403
      %vm405 = vcmask 1047840
      %406 = vst.msk [vmem:[#allocation4] sm:$0xff] %vm405, 0
      %407 = vst.msk [vmem:[#allocation4 + $0x8] sm:$0xff] %vm405, 0
      %408 = vst.msk [vmem:[#allocation4 + $0x10] sm:$0xff] %vm405, 0
      %409 = vst.msk [vmem:[#allocation4 + $0x18] sm:$0xff] %vm405, 0
      %410 = vst.msk [vmem:[#allocation4 + $0x20] sm:$0xff] %vm405, 0
      %411 = vst.msk [vmem:[#allocation4 + $0x28] sm:$0xff] %vm405, 0
      %412 = vst.msk [vmem:[#allocation4 + $0x30] sm:$0xff] %vm405, 0
      %413 = vst.msk [vmem:[#allocation4 + $0x38] sm:$0xff] %vm405, 0
      %414 = vst.msk [vmem:[#allocation4 + $0x40] sm:$0xff] %vm405, 0
      %415 = vst.msk [vmem:[#allocation4 + $0x48] sm:$0xff] %vm405, 0
      %416 = vst.msk [vmem:[#allocation4 + $0x50] sm:$0xff] %vm405, 0
      %417 = vst.msk [vmem:[#allocation4 + $0x58] sm:$0xff] %vm405, 0
      %418 = vst.msk [vmem:[#allocation4 + $0x60] sm:$0xff] %vm405, 0
      %419 = vst.msk [vmem:[#allocation4 + $0x68] sm:$0xff] %vm405, 0
      %420 = vst.msk [vmem:[#allocation4 + $0x70] sm:$0xff] %vm405, 0
      %421 = vst.msk [vmem:[#allocation4 + $0x78] sm:$0xff] %vm405, 0
      %v422 = vld [vmem:[%s165] sm:$0xff]
      %v423 = vld [vmem:[%s165 + $0x8] sm:$0xff]
      %v424 = vld [vmem:[%s165 + $0x10] sm:$0xff]
      %v425 = vld [vmem:[%s165 + $0x18] sm:$0xff]
      %v426 = vld [vmem:[%s165 + $0x20] sm:$0xff]
      %v427 = vld [vmem:[%s165 + $0x28] sm:$0xff]
      %v428 = vld [vmem:[%s165 + $0x30] sm:$0xff]
      %v429 = vld [vmem:[%s165 + $0x38] sm:$0xff]
      %v430 = vld [vmem:[%s165 + $0x40] sm:$0xff]
      %v431 = vld [vmem:[%s165 + $0x48] sm:$0xff]
      %v432 = vld [vmem:[%s165 + $0x50] sm:$0xff]
      %v433 = vld [vmem:[%s165 + $0x58] sm:$0xff]
      %v434 = vld [vmem:[%s165 + $0x60] sm:$0xff]
      %v435 = vld [vmem:[%s165 + $0x68] sm:$0xff]
      %v436 = vld [vmem:[%s165 + $0x70] sm:$0xff]
      %v437 = vld [vmem:[%s165 + $0x78] sm:$0xff]
      %v438 = vld [vmem:[%s165 + $0x80] sm:$0xff]
      %v439 = vld [vmem:[%s165 + $0x88] sm:$0xff]
      %v440 = vld [vmem:[%s165 + $0x90] sm:$0xff]
      %v441 = vld [vmem:[%s165 + $0x98] sm:$0xff]
      %v442 = vld [vmem:[%s165 + $0xa0] sm:$0xff]
      %v443 = vld [vmem:[%s165 + $0xa8] sm:$0xff]
      %v444 = vld [vmem:[%s165 + $0xb0] sm:$0xff]
      %v445 = vld [vmem:[%s165 + $0xb8] sm:$0xff]
      %v446 = vld [vmem:[%s165 + $0xc0] sm:$0xff]
      %v447 = vld [vmem:[%s165 + $0xc8] sm:$0xff]
      %v448 = vld [vmem:[%s165 + $0xd0] sm:$0xff]
      %v449 = vld [vmem:[%s165 + $0xd8] sm:$0xff]
      %v450 = vld [vmem:[%s165 + $0xe0] sm:$0xff]
      %v451 = vld [vmem:[%s165 + $0xe8] sm:$0xff]
      %v452 = vld [vmem:[%s165 + $0xf0] sm:$0xff]
      %v453 = vld [vmem:[%s165 + $0xf8] sm:$0xff]
      %v454 = vpack.c.bf16 %v423, %v422
      %v455 = vpack.c.bf16 %v425, %v424
      %v456 = vpack.c.bf16 %v427, %v426
      %v457 = vpack.c.bf16 %v429, %v428
      %v458 = vpack.c.bf16 %v431, %v430
      %v459 = vpack.c.bf16 %v433, %v432
      %v460 = vpack.c.bf16 %v435, %v434
      %v461 = vpack.c.bf16 %v437, %v436
      %v462 = vpack.c.bf16 %v439, %v438
      %v463 = vpack.c.bf16 %v441, %v440
      %v464 = vpack.c.bf16 %v443, %v442
      %v465 = vpack.c.bf16 %v445, %v444
      %v466 = vpack.c.bf16 %v447, %v446
      %v467 = vpack.c.bf16 %v449, %v448
      %v468 = vpack.c.bf16 %v451, %v450
      %v469 = vpack.c.bf16 %v453, %v452
      %v486 = vrot.slane %v454, 4
      %v487 = vrot.slane %v455, 4
      %v488 = vrot.slane %v456, 4
      %v489 = vrot.slane %v457, 4
      %v490 = vrot.slane %v458, 4
      %v491 = vrot.slane %v459, 4
      %v492 = vrot.slane %v460, 4
      %v493 = vrot.slane %v461, 4
      %v494 = vrot.slane %v462, 4
      %v495 = vrot.slane %v463, 4
      %v496 = vrot.slane %v464, 4
      %v497 = vrot.slane %v465, 4
      %v498 = vrot.slane %v466, 4
      %v499 = vrot.slane %v467, 4
      %v500 = vrot.slane %v468, 4
      %v501 = vrot.slane %v469, 4
      %s518 = scalar_lea.vmem [#allocation2], 16
      %vm519 = vcmask 31748
      %520 = vst.msk [vmem:[%s518] sm:$0xf0] %vm519, %v486
      %vm521 = vcmask 27648
      %522 = vst.msk [vmem:[%s518 + $0x8] sm:$0xf] %vm521, %v486
      %523 = vst.msk [vmem:[%s518 + $0x10] sm:$0xf0] %vm519, %v487
      %524 = vst.msk [vmem:[%s518 + $0x18] sm:$0xf] %vm521, %v487
      %525 = vst.msk [vmem:[%s518 + $0x20] sm:$0xf0] %vm519, %v488
      %526 = vst.msk [vmem:[%s518 + $0x28] sm:$0xf] %vm521, %v488
      %527 = vst.msk [vmem:[%s518 + $0x30] sm:$0xf0] %vm519, %v489
      %528 = vst.msk [vmem:[%s518 + $0x38] sm:$0xf] %vm521, %v489
      %529 = vst.msk [vmem:[%s518 + $0x40] sm:$0xf0] %vm519, %v490
      %530 = vst.msk [vmem:[%s518 + $0x48] sm:$0xf] %vm521, %v490
      %531 = vst.msk [vmem:[%s518 + $0x50] sm:$0xf0] %vm519, %v491
      %532 = vst.msk [vmem:[%s518 + $0x58] sm:$0xf] %vm521, %v491
      %533 = vst.msk [vmem:[%s518 + $0x60] sm:$0xf0] %vm519, %v492
      %534 = vst.msk [vmem:[%s518 + $0x68] sm:$0xf] %vm521, %v492
      %535 = vst.msk [vmem:[%s518 + $0x70] sm:$0xf0] %vm519, %v493
      %536 = vst.msk [vmem:[%s518 + $0x78] sm:$0xf] %vm521, %v493
      %537 = vst.msk [vmem:[%s518 + $0x80] sm:$0xf0] %vm519, %v494
      %538 = vst.msk [vmem:[%s518 + $0x88] sm:$0xf] %vm521, %v494
      %539 = vst.msk [vmem:[%s518 + $0x90] sm:$0xf0] %vm519, %v495
      %540 = vst.msk [vmem:[%s518 + $0x98] sm:$0xf] %vm521, %v495
      %541 = vst.msk [vmem:[%s518 + $0xa0] sm:$0xf0] %vm519, %v496
      %542 = vst.msk [vmem:[%s518 + $0xa8] sm:$0xf] %vm521, %v496
      %543 = vst.msk [vmem:[%s518 + $0xb0] sm:$0xf0] %vm519, %v497
      %544 = vst.msk [vmem:[%s518 + $0xb8] sm:$0xf] %vm521, %v497
      %545 = vst.msk [vmem:[%s518 + $0xc0] sm:$0xf0] %vm519, %v498
      %546 = vst.msk [vmem:[%s518 + $0xc8] sm:$0xf] %vm521, %v498
      %547 = vst.msk [vmem:[%s518 + $0xd0] sm:$0xf0] %vm519, %v499
      %548 = vst.msk [vmem:[%s518 + $0xd8] sm:$0xf] %vm521, %v499
      %549 = vst.msk [vmem:[%s518 + $0xe0] sm:$0xf0] %vm519, %v500
      %550 = vst.msk [vmem:[%s518 + $0xe8] sm:$0xf] %vm521, %v500
      %551 = vst.msk [vmem:[%s518 + $0xf0] sm:$0xf0] %vm519, %v501
      %552 = vst.msk [vmem:[%s518 + $0xf8] sm:$0xf] %vm521, %v501
      %v553 = vld [vmem:[%s1] sm:$0xf]
      %v554 = vld [vmem:[%s1 + $0x4] sm:$0xf]
      %v555 = vld [vmem:[%s1 + $0x8] sm:$0xf]
      %v556 = vld [vmem:[%s1 + $0xc] sm:$0xf]
      %v557 = vld [vmem:[%s1 + $0x10] sm:$0xf]
      %v558 = vld [vmem:[%s1 + $0x14] sm:$0xf]
      %v559 = vld [vmem:[%s1 + $0x18] sm:$0xf]
      %v560 = vld [vmem:[%s1 + $0x1c] sm:$0xf]
      %v561 = vld [vmem:[%s1 + $0x20] sm:$0xf]
      %v562 = vld [vmem:[%s1 + $0x24] sm:$0xf]
      %v563 = vld [vmem:[%s1 + $0x28] sm:$0xf]
      %v564 = vld [vmem:[%s1 + $0x2c] sm:$0xf]
      %v565 = vld [vmem:[%s1 + $0x30] sm:$0xf]
      %v566 = vld [vmem:[%s1 + $0x34] sm:$0xf]
      %v567 = vld [vmem:[%s1 + $0x38] sm:$0xf]
      %v568 = vld [vmem:[%s1 + $0x3c] sm:$0xf]
      %v569 = vld [vmem:[%s2] sm:$0x1]
      %v570 = vld [vmem:[#allocation2] sm:$0xf8]
      %v571 = vld [vmem:[#allocation2 + $0x8] sm:$0xf]
      %v572 = vld [vmem:[#allocation2 + $0x10] sm:$0xf8]
      %v573 = vld [vmem:[#allocation2 + $0x18] sm:$0xf]
      %v574 = vld [vmem:[#allocation2 + $0x20] sm:$0xf8]
      %v575 = vld [vmem:[#allocation2 + $0x28] sm:$0xf]
      %v576 = vld [vmem:[#allocation2 + $0x30] sm:$0xf8]
      %v577 = vld [vmem:[#allocation2 + $0x38] sm:$0xf]
      %v578 = vld [vmem:[#allocation2 + $0x40] sm:$0xf8]
      %v579 = vld [vmem:[#allocation2 + $0x48] sm:$0xf]
      %v580 = vld [vmem:[#allocation2 + $0x50] sm:$0xf8]
      %v581 = vld [vmem:[#allocation2 + $0x58] sm:$0xf]
      %v582 = vld [vmem:[#allocation2 + $0x60] sm:$0xf8]
      %v583 = vld [vmem:[#allocation2 + $0x68] sm:$0xf]
      %v584 = vld [vmem:[#allocation2 + $0x70] sm:$0xf8]
      %v585 = vld [vmem:[#allocation2 + $0x78] sm:$0xf]
      %v586 = vld [vmem:[#allocation2 + $0x80] sm:$0xf8]
      %v587 = vld [vmem:[#allocation2 + $0x88] sm:$0xf]
      %v588 = vld [vmem:[#allocation2 + $0x90] sm:$0xf8]
      %v589 = vld [vmem:[#allocation2 + $0x98] sm:$0xf]
      %v590 = vld [vmem:[#allocation2 + $0xa0] sm:$0xf8]
      %v591 = vld [vmem:[#allocation2 + $0xa8] sm:$0xf]
      %v592 = vld [vmem:[#allocation2 + $0xb0] sm:$0xf8]
      %v593 = vld [vmem:[#allocation2 + $0xb8] sm:$0xf]
      %v594 = vld [vmem:[#allocation2 + $0xc0] sm:$0xf8]
      %v595 = vld [vmem:[#allocation2 + $0xc8] sm:$0xf]
      %v596 = vld [vmem:[#allocation2 + $0xd0] sm:$0xf8]
      %v597 = vld [vmem:[#allocation2 + $0xd8] sm:$0xf]
      %v598 = vld [vmem:[#allocation2 + $0xe0] sm:$0xf8]
      %v599 = vld [vmem:[#allocation2 + $0xe8] sm:$0xf]
      %v600 = vld [vmem:[#allocation2 + $0xf0] sm:$0xf8]
      %v601 = vld [vmem:[#allocation2 + $0xf8] sm:$0xf]
      %v603 = vshrl.u32 %v570, 16
      %v605 = vrot.slane %v603, 3
      %v606 = vshll.u32 %v570, 16
      %v608 = vrot.slane %v606, 4
      %v609 = vor.u32 %v605, %v608
      %v611 = vshrl.u32 %v571, 16
      %v613 = vrot.slane %v611, 3
      %v614 = vshll.u32 %v571, 16
      %v616 = vrot.slane %v614, 4
      %v617 = vor.u32 %v613, %v616
      %v618 = vsel %vm236, %v609, %v617
      %v620 = vshrl.u32 %v572, 16
      %v622 = vrot.slane %v620, 3
      %v623 = vshll.u32 %v572, 16
      %v625 = vrot.slane %v623, 4
      %v626 = vor.u32 %v622, %v625
      %v628 = vshrl.u32 %v573, 16
      %v630 = vrot.slane %v628, 3
      %v631 = vshll.u32 %v573, 16
      %v633 = vrot.slane %v631, 4
      %v634 = vor.u32 %v630, %v633
      %v635 = vsel %vm236, %v626, %v634
      %v637 = vshrl.u32 %v574, 16
      %v639 = vrot.slane %v637, 3
      %v640 = vshll.u32 %v574, 16
      %v642 = vrot.slane %v640, 4
      %v643 = vor.u32 %v639, %v642
      %v645 = vshrl.u32 %v575, 16
      %v647 = vrot.slane %v645, 3
      %v648 = vshll.u32 %v575, 16
      %v650 = vrot.slane %v648, 4
      %v651 = vor.u32 %v647, %v650
      %v652 = vsel %vm236, %v643, %v651
      %v654 = vshrl.u32 %v576, 16
      %v656 = vrot.slane %v654, 3
      %v657 = vshll.u32 %v576, 16
      %v659 = vrot.slane %v657, 4
      %v660 = vor.u32 %v656, %v659
      %v662 = vshrl.u32 %v577, 16
      %v664 = vrot.slane %v662, 3
      %v665 = vshll.u32 %v577, 16
      %v667 = vrot.slane %v665, 4
      %v668 = vor.u32 %v664, %v667
      %v669 = vsel %vm236, %v660, %v668
      %v671 = vshrl.u32 %v578, 16
      %v673 = vrot.slane %v671, 3
      %v674 = vshll.u32 %v578, 16
      %v676 = vrot.slane %v674, 4
      %v677 = vor.u32 %v673, %v676
      %v679 = vshrl.u32 %v579, 16
      %v681 = vrot.slane %v679, 3
      %v682 = vshll.u32 %v579, 16
      %v684 = vrot.slane %v682, 4
      %v685 = vor.u32 %v681, %v684
      %v686 = vsel %vm236, %v677, %v685
      %v688 = vshrl.u32 %v580, 16
      %v690 = vrot.slane %v688, 3
      %v691 = vshll.u32 %v580, 16
      %v693 = vrot.slane %v691, 4
      %v694 = vor.u32 %v690, %v693
      %v696 = vshrl.u32 %v581, 16
      %v698 = vrot.slane %v696, 3
      %v699 = vshll.u32 %v581, 16
      %v701 = vrot.slane %v699, 4
      %v702 = vor.u32 %v698, %v701
      %v703 = vsel %vm236, %v694, %v702
      %v705 = vshrl.u32 %v582, 16
      %v707 = vrot.slane %v705, 3
      %v708 = vshll.u32 %v582, 16
      %v710 = vrot.slane %v708, 4
      %v711 = vor.u32 %v707, %v710
      %v713 = vshrl.u32 %v583, 16
      %v715 = vrot.slane %v713, 3
      %v716 = vshll.u32 %v583, 16
      %v718 = vrot.slane %v716, 4
      %v719 = vor.u32 %v715, %v718
      %v720 = vsel %vm236, %v711, %v719
      %v722 = vshrl.u32 %v584, 16
      %v724 = vrot.slane %v722, 3
      %v725 = vshll.u32 %v584, 16
      %v727 = vrot.slane %v725, 4
      %v728 = vor.u32 %v724, %v727
      %v730 = vshrl.u32 %v585, 16
      %v732 = vrot.slane %v730, 3
      %v733 = vshll.u32 %v585, 16
      %v735 = vrot.slane %v733, 4
      %v736 = vor.u32 %v732, %v735
      %v737 = vsel %vm236, %v728, %v736
      %v739 = vshrl.u32 %v586, 16
      %v741 = vrot.slane %v739, 3
      %v742 = vshll.u32 %v586, 16
      %v744 = vrot.slane %v742, 4
      %v745 = vor.u32 %v741, %v744
      %v747 = vshrl.u32 %v587, 16
      %v749 = vrot.slane %v747, 3
      %v750 = vshll.u32 %v587, 16
      %v752 = vrot.slane %v750, 4
      %v753 = vor.u32 %v749, %v752
      %v754 = vsel %vm236, %v745, %v753
      %v756 = vshrl.u32 %v588, 16
      %v758 = vrot.slane %v756, 3
      %v759 = vshll.u32 %v588, 16
      %v761 = vrot.slane %v759, 4
      %v762 = vor.u32 %v758, %v761
      %v764 = vshrl.u32 %v589, 16
      %v766 = vrot.slane %v764, 3
      %v767 = vshll.u32 %v589, 16
      %v769 = vrot.slane %v767, 4
      %v770 = vor.u32 %v766, %v769
      %v771 = vsel %vm236, %v762, %v770
      %v773 = vshrl.u32 %v590, 16
      %v775 = vrot.slane %v773, 3
      %v776 = vshll.u32 %v590, 16
      %v778 = vrot.slane %v776, 4
      %v779 = vor.u32 %v775, %v778
      %v781 = vshrl.u32 %v591, 16
      %v783 = vrot.slane %v781, 3
      %v784 = vshll.u32 %v591, 16
      %v786 = vrot.slane %v784, 4
      %v787 = vor.u32 %v783, %v786
      %v788 = vsel %vm236, %v779, %v787
      %v790 = vshrl.u32 %v592, 16
      %v792 = vrot.slane %v790, 3
      %v793 = vshll.u32 %v592, 16
      %v795 = vrot.slane %v793, 4
      %v796 = vor.u32 %v792, %v795
      %v798 = vshrl.u32 %v593, 16
      %v800 = vrot.slane %v798, 3
      %v801 = vshll.u32 %v593, 16
      %v803 = vrot.slane %v801, 4
      %v804 = vor.u32 %v800, %v803
      %v805 = vsel %vm236, %v796, %v804
      %v807 = vshrl.u32 %v594, 16
      %v809 = vrot.slane %v807, 3
      %v810 = vshll.u32 %v594, 16
      %v812 = vrot.slane %v810, 4
      %v813 = vor.u32 %v809, %v812
      %v815 = vshrl.u32 %v595, 16
      %v817 = vrot.slane %v815, 3
      %v818 = vshll.u32 %v595, 16
      %v820 = vrot.slane %v818, 4
      %v821 = vor.u32 %v817, %v820
      %v822 = vsel %vm236, %v813, %v821
      %v824 = vshrl.u32 %v596, 16
      %v826 = vrot.slane %v824, 3
      %v827 = vshll.u32 %v596, 16
      %v829 = vrot.slane %v827, 4
      %v830 = vor.u32 %v826, %v829
      %v832 = vshrl.u32 %v597, 16
      %v834 = vrot.slane %v832, 3
      %v835 = vshll.u32 %v597, 16
      %v837 = vrot.slane %v835, 4
      %v838 = vor.u32 %v834, %v837
      %v839 = vsel %vm236, %v830, %v838
      %v841 = vshrl.u32 %v598, 16
      %v843 = vrot.slane %v841, 3
      %v844 = vshll.u32 %v598, 16
      %v846 = vrot.slane %v844, 4
      %v847 = vor.u32 %v843, %v846
      %v849 = vshrl.u32 %v599, 16
      %v851 = vrot.slane %v849, 3
      %v852 = vshll.u32 %v599, 16
      %v854 = vrot.slane %v852, 4
      %v855 = vor.u32 %v851, %v854
      %v856 = vsel %vm236, %v847, %v855
      %v858 = vshrl.u32 %v600, 16
      %v860 = vrot.slane %v858, 3
      %v861 = vshll.u32 %v600, 16
      %v863 = vrot.slane %v861, 4
      %v864 = vor.u32 %v860, %v863
      %v866 = vshrl.u32 %v601, 16
      %v868 = vrot.slane %v866, 3
      %v869 = vshll.u32 %v601, 16
      %v871 = vrot.slane %v869, 4
      %v872 = vor.u32 %v868, %v871
      %v873 = vsel %vm236, %v864, %v872
      %890 = vst.msk [vmem:[#allocation4] sm:$0xff] %vm172, %v618
      %891 = vst.msk [vmem:[#allocation4 + $0x8] sm:$0xff] %vm172, %v635
      %892 = vst.msk [vmem:[#allocation4 + $0x10] sm:$0xff] %vm172, %v652
      %893 = vst.msk [vmem:[#allocation4 + $0x18] sm:$0xff] %vm172, %v669
      %894 = vst.msk [vmem:[#allocation4 + $0x20] sm:$0xff] %vm172, %v686
      %895 = vst.msk [vmem:[#allocation4 + $0x28] sm:$0xff] %vm172, %v703
      %896 = vst.msk [vmem:[#allocation4 + $0x30] sm:$0xff] %vm172, %v720
      %897 = vst.msk [vmem:[#allocation4 + $0x38] sm:$0xff] %vm172, %v737
      %898 = vst.msk [vmem:[#allocation4 + $0x40] sm:$0xff] %vm172, %v754
      %899 = vst.msk [vmem:[#allocation4 + $0x48] sm:$0xff] %vm172, %v771
      %900 = vst.msk [vmem:[#allocation4 + $0x50] sm:$0xff] %vm172, %v788
      %901 = vst.msk [vmem:[#allocation4 + $0x58] sm:$0xff] %vm172, %v805
      %902 = vst.msk [vmem:[#allocation4 + $0x60] sm:$0xff] %vm172, %v822
      %903 = vst.msk [vmem:[#allocation4 + $0x68] sm:$0xff] %vm172, %v839
      %904 = vst.msk [vmem:[#allocation4 + $0x70] sm:$0xff] %vm172, %v856
      %905 = vst.msk [vmem:[#allocation4 + $0x78] sm:$0xff] %vm172, %v873
      %v906 = vld [vmem:[#allocation2] sm:$0xf0]
      %v907 = vld [vmem:[#allocation2 + $0x8] sm:$0xf]
      %v908 = vld [vmem:[#allocation2 + $0x10] sm:$0xf0]
      %v909 = vld [vmem:[#allocation2 + $0x18] sm:$0xf]
      %v910 = vld [vmem:[#allocation2 + $0x20] sm:$0xf0]
      %v911 = vld [vmem:[#allocation2 + $0x28] sm:$0xf]
      %v912 = vld [vmem:[#allocation2 + $0x30] sm:$0xf0]
      %v913 = vld [vmem:[#allocation2 + $0x38] sm:$0xf]
      %v914 = vld [vmem:[#allocation2 + $0x40] sm:$0xf0]
      %v915 = vld [vmem:[#allocation2 + $0x48] sm:$0xf]
      %v916 = vld [vmem:[#allocation2 + $0x50] sm:$0xf0]
      %v917 = vld [vmem:[#allocation2 + $0x58] sm:$0xf]
      %v918 = vld [vmem:[#allocation2 + $0x60] sm:$0xf0]
      %v919 = vld [vmem:[#allocation2 + $0x68] sm:$0xf]
      %v920 = vld [vmem:[#allocation2 + $0x70] sm:$0xf0]
      %v921 = vld [vmem:[#allocation2 + $0x78] sm:$0xf]
      %v922 = vld [vmem:[#allocation2 + $0x80] sm:$0xf0]
      %v923 = vld [vmem:[#allocation2 + $0x88] sm:$0xf]
      %v924 = vld [vmem:[#allocation2 + $0x90] sm:$0xf0]
      %v925 = vld [vmem:[#allocation2 + $0x98] sm:$0xf]
      %v926 = vld [vmem:[#allocation2 + $0xa0] sm:$0xf0]
      %v927 = vld [vmem:[#allocation2 + $0xa8] sm:$0xf]
      %v928 = vld [vmem:[#allocation2 + $0xb0] sm:$0xf0]
      %v929 = vld [vmem:[#allocation2 + $0xb8] sm:$0xf]
      %v930 = vld [vmem:[#allocation2 + $0xc0] sm:$0xf0]
      %v931 = vld [vmem:[#allocation2 + $0xc8] sm:$0xf]
      %v932 = vld [vmem:[#allocation2 + $0xd0] sm:$0xf0]
      %v933 = vld [vmem:[#allocation2 + $0xd8] sm:$0xf]
      %v934 = vld [vmem:[#allocation2 + $0xe0] sm:$0xf0]
      %v935 = vld [vmem:[#allocation2 + $0xe8] sm:$0xf]
      %v936 = vld [vmem:[#allocation2 + $0xf0] sm:$0xf0]
      %v937 = vld [vmem:[#allocation2 + $0xf8] sm:$0xf]
      %vm970 = vcmask 1043456
      %v971 = vrot.slane %v906, 4
      %v972 = vrot.slane %v907, 4
      %v973 = vsel %vm970, %v971, %v972
      %v974 = vrot.slane %v908, 4
      %v975 = vrot.slane %v909, 4
      %v976 = vsel %vm970, %v974, %v975
      %v977 = vrot.slane %v910, 4
      %v978 = vrot.slane %v911, 4
      %v979 = vsel %vm970, %v977, %v978
      %v980 = vrot.slane %v912, 4
      %v981 = vrot.slane %v913, 4
      %v982 = vsel %vm970, %v980, %v981
      %v983 = vrot.slane %v914, 4
      %v984 = vrot.slane %v915, 4
      %v985 = vsel %vm970, %v983, %v984
      %v986 = vrot.slane %v916, 4
      %v987 = vrot.slane %v917, 4
      %v988 = vsel %vm970, %v986, %v987
      %v989 = vrot.slane %v918, 4
      %v990 = vrot.slane %v919, 4
      %v991 = vsel %vm970, %v989, %v990
      %v992 = vrot.slane %v920, 4
      %v993 = vrot.slane %v921, 4
      %v994 = vsel %vm970, %v992, %v993
      %v995 = vrot.slane %v922, 4
      %v996 = vrot.slane %v923, 4
      %v997 = vsel %vm970, %v995, %v996
      %v998 = vrot.slane %v924, 4
      %v999 = vrot.slane %v925, 4
      %v1000 = vsel %vm970, %v998, %v999
      %v1001 = vrot.slane %v926, 4
      %v1002 = vrot.slane %v927, 4
      %v1003 = vsel %vm970, %v1001, %v1002
      %v1004 = vrot.slane %v928, 4
      %v1005 = vrot.slane %v929, 4
      %v1006 = vsel %vm970, %v1004, %v1005
      %v1007 = vrot.slane %v930, 4
      %v1008 = vrot.slane %v931, 4
      %v1009 = vsel %vm970, %v1007, %v1008
      %v1010 = vrot.slane %v932, 4
      %v1011 = vrot.slane %v933, 4
      %v1012 = vsel %vm970, %v1010, %v1011
      %v1013 = vrot.slane %v934, 4
      %v1014 = vrot.slane %v935, 4
      %v1015 = vsel %vm970, %v1013, %v1014
      %v1016 = vrot.slane %v936, 4
      %v1017 = vrot.slane %v937, 4
      %v1018 = vsel %vm970, %v1016, %v1017
      %1019 = vrot.lane.b32.xlu0 %v973, 4
      %v1020 = vpop.permute.xlu0 %1019
      %1021 = vrot.lane.b32.xlu0 %v976, 4
      %v1022 = vpop.permute.xlu0 %1021
      %1023 = vrot.lane.b32.xlu0 %v979, 4
      %v1024 = vpop.permute.xlu0 %1023
      %1025 = vrot.lane.b32.xlu0 %v982, 4
      %v1026 = vpop.permute.xlu0 %1025
      %1027 = vrot.lane.b32.xlu0 %v985, 4
      %v1028 = vpop.permute.xlu0 %1027
      %1029 = vrot.lane.b32.xlu0 %v988, 4
      %v1030 = vpop.permute.xlu0 %1029
      %1031 = vrot.lane.b32.xlu0 %v991, 4
      %v1032 = vpop.permute.xlu0 %1031
      %1033 = vrot.lane.b32.xlu0 %v994, 4
      %v1034 = vpop.permute.xlu0 %1033
      %1035 = vrot.lane.b32.xlu0 %v997, 4
      %v1036 = vpop.permute.xlu0 %1035
      %1037 = vrot.lane.b32.xlu0 %v1000, 4
      %v1038 = vpop.permute.xlu0 %1037
      %1039 = vrot.lane.b32.xlu0 %v1003, 4
      %v1040 = vpop.permute.xlu0 %1039
      %1041 = vrot.lane.b32.xlu0 %v1006, 4
      %v1042 = vpop.permute.xlu0 %1041
      %1043 = vrot.lane.b32.xlu0 %v1009, 4
      %v1044 = vpop.permute.xlu0 %1043
      %1045 = vrot.lane.b32.xlu0 %v1012, 4
      %v1046 = vpop.permute.xlu0 %1045
      %1047 = vrot.lane.b32.xlu0 %v1015, 4
      %v1048 = vpop.permute.xlu0 %1047
      %1049 = vrot.lane.b32.xlu0 %v1018, 4
      %v1050 = vpop.permute.xlu0 %1049
      %vm1067 = vcmask 64544
      %1068 = vst.msk [vmem:[#allocation4] sm:$0xff] %vm1067, %v1020
      %1069 = vst.msk [vmem:[#allocation4 + $0x8] sm:$0xff] %vm1067, %v1022
      %1070 = vst.msk [vmem:[#allocation4 + $0x10] sm:$0xff] %vm1067, %v1024
      %1071 = vst.msk [vmem:[#allocation4 + $0x18] sm:$0xff] %vm1067, %v1026
      %1072 = vst.msk [vmem:[#allocation4 + $0x20] sm:$0xff] %vm1067, %v1028
      %1073 = vst.msk [vmem:[#allocation4 + $0x28] sm:$0xff] %vm1067, %v1030
      %1074 = vst.msk [vmem:[#allocation4 + $0x30] sm:$0xff] %vm1067, %v1032
      %1075 = vst.msk [vmem:[#allocation4 + $0x38] sm:$0xff] %vm1067, %v1034
      %1076 = vst.msk [vmem:[#allocation4 + $0x40] sm:$0xff] %vm1067, %v1036
      %1077 = vst.msk [vmem:[#allocation4 + $0x48] sm:$0xff] %vm1067, %v1038
      %1078 = vst.msk [vmem:[#allocation4 + $0x50] sm:$0xff] %vm1067, %v1040
      %1079 = vst.msk [vmem:[#allocation4 + $0x58] sm:$0xff] %vm1067, %v1042
      %1080 = vst.msk [vmem:[#allocation4 + $0x60] sm:$0xff] %vm1067, %v1044
      %1081 = vst.msk [vmem:[#allocation4 + $0x68] sm:$0xff] %vm1067, %v1046
      %1082 = vst.msk [vmem:[#allocation4 + $0x70] sm:$0xff] %vm1067, %v1048
      %1083 = vst.msk [vmem:[#allocation4 + $0x78] sm:$0xff] %vm1067, %v1050
      %v1084 = vld [vmem:[#allocation2] sm:$0xf0]
      %v1085 = vld [vmem:[#allocation2 + $0x8] sm:$0x1f]
      %v1086 = vld [vmem:[#allocation2 + $0x10] sm:$0xf0]
      %v1087 = vld [vmem:[#allocation2 + $0x18] sm:$0x1f]
      %v1088 = vld [vmem:[#allocation2 + $0x20] sm:$0xf0]
      %v1089 = vld [vmem:[#allocation2 + $0x28] sm:$0x1f]
      %v1090 = vld [vmem:[#allocation2 + $0x30] sm:$0xf0]
      %v1091 = vld [vmem:[#allocation2 + $0x38] sm:$0x1f]
      %v1092 = vld [vmem:[#allocation2 + $0x40] sm:$0xf0]
      %v1093 = vld [vmem:[#allocation2 + $0x48] sm:$0x1f]
      %v1094 = vld [vmem:[#allocation2 + $0x50] sm:$0xf0]
      %v1095 = vld [vmem:[#allocation2 + $0x58] sm:$0x1f]
      %v1096 = vld [vmem:[#allocation2 + $0x60] sm:$0xf0]
      %v1097 = vld [vmem:[#allocation2 + $0x68] sm:$0x1f]
      %v1098 = vld [vmem:[#allocation2 + $0x70] sm:$0xf0]
      %v1099 = vld [vmem:[#allocation2 + $0x78] sm:$0x1f]
      %v1100 = vld [vmem:[#allocation2 + $0x80] sm:$0xf0]
      %v1101 = vld [vmem:[#allocation2 + $0x88] sm:$0x1f]
      %v1102 = vld [vmem:[#allocation2 + $0x90] sm:$0xf0]
      %v1103 = vld [vmem:[#allocation2 + $0x98] sm:$0x1f]
      %v1104 = vld [vmem:[#allocation2 + $0xa0] sm:$0xf0]
      %v1105 = vld [vmem:[#allocation2 + $0xa8] sm:$0x1f]
      %v1106 = vld [vmem:[#allocation2 + $0xb0] sm:$0xf0]
      %v1107 = vld [vmem:[#allocation2 + $0xb8] sm:$0x1f]
      %v1108 = vld [vmem:[#allocation2 + $0xc0] sm:$0xf0]
      %v1109 = vld [vmem:[#allocation2 + $0xc8] sm:$0x1f]
      %v1110 = vld [vmem:[#allocation2 + $0xd0] sm:$0xf0]
      %v1111 = vld [vmem:[#allocation2 + $0xd8] sm:$0x1f]
      %v1112 = vld [vmem:[#allocation2 + $0xe0] sm:$0xf0]
      %v1113 = vld [vmem:[#allocation2 + $0xe8] sm:$0x1f]
      %v1114 = vld [vmem:[#allocation2 + $0xf0] sm:$0xf0]
      %v1115 = vld [vmem:[#allocation2 + $0xf8] sm:$0x1f]
      %vm1116 = vsmask.f32 3328
      %v1118 = vshrl.u32 %v1084, 16
      %v1120 = vrot.slane %v1118, 4
      %v1121 = vshll.u32 %v1084, 16
      %v1123 = vrot.slane %v1121, 5
      %v1124 = vor.u32 %v1120, %v1123
      %v1126 = vshrl.u32 %v1085, 16
      %v1128 = vrot.slane %v1126, 4
      %v1129 = vshll.u32 %v1085, 16
      %v1131 = vrot.slane %v1129, 5
      %v1132 = vor.u32 %v1128, %v1131
      %v1133 = vsel %vm1116, %v1124, %v1132
      %v1135 = vshrl.u32 %v1086, 16
      %v1137 = vrot.slane %v1135, 4
      %v1138 = vshll.u32 %v1086, 16
      %v1140 = vrot.slane %v1138, 5
      %v1141 = vor.u32 %v1137, %v1140
      %v1143 = vshrl.u32 %v1087, 16
      %v1145 = vrot.slane %v1143, 4
      %v1146 = vshll.u32 %v1087, 16
      %v1148 = vrot.slane %v1146, 5
      %v1149 = vor.u32 %v1145, %v1148
      %v1150 = vsel %vm1116, %v1141, %v1149
      %v1152 = vshrl.u32 %v1088, 16
      %v1154 = vrot.slane %v1152, 4
      %v1155 = vshll.u32 %v1088, 16
      %v1157 = vrot.slane %v1155, 5
      %v1158 = vor.u32 %v1154, %v1157
      %v1160 = vshrl.u32 %v1089, 16
      %v1162 = vrot.slane %v1160, 4
      %v1163 = vshll.u32 %v1089, 16
      %v1165 = vrot.slane %v1163, 5
      %v1166 = vor.u32 %v1162, %v1165
      %v1167 = vsel %vm1116, %v1158, %v1166
      %v1169 = vshrl.u32 %v1090, 16
      %v1171 = vrot.slane %v1169, 4
      %v1172 = vshll.u32 %v1090, 16
      %v1174 = vrot.slane %v1172, 5
      %v1175 = vor.u32 %v1171, %v1174
      %v1177 = vshrl.u32 %v1091, 16
      %v1179 = vrot.slane %v1177, 4
      %v1180 = vshll.u32 %v1091, 16
      %v1182 = vrot.slane %v1180, 5
      %v1183 = vor.u32 %v1179, %v1182
      %v1184 = vsel %vm1116, %v1175, %v1183
      %v1186 = vshrl.u32 %v1092, 16
      %v1188 = vrot.slane %v1186, 4
      %v1189 = vshll.u32 %v1092, 16
      %v1191 = vrot.slane %v1189, 5
      %v1192 = vor.u32 %v1188, %v1191
      %v1194 = vshrl.u32 %v1093, 16
      %v1196 = vrot.slane %v1194, 4
      %v1197 = vshll.u32 %v1093, 16
      %v1199 = vrot.slane %v1197, 5
      %v1200 = vor.u32 %v1196, %v1199
      %v1201 = vsel %vm1116, %v1192, %v1200
      %v1203 = vshrl.u32 %v1094, 16
      %v1205 = vrot.slane %v1203, 4
      %v1206 = vshll.u32 %v1094, 16
      %v1208 = vrot.slane %v1206, 5
      %v1209 = vor.u32 %v1205, %v1208
      %v1211 = vshrl.u32 %v1095, 16
      %v1213 = vrot.slane %v1211, 4
      %v1214 = vshll.u32 %v1095, 16
      %v1216 = vrot.slane %v1214, 5
      %v1217 = vor.u32 %v1213, %v1216
      %v1218 = vsel %vm1116, %v1209, %v1217
      %v1220 = vshrl.u32 %v1096, 16
      %v1222 = vrot.slane %v1220, 4
      %v1223 = vshll.u32 %v1096, 16
      %v1225 = vrot.slane %v1223, 5
      %v1226 = vor.u32 %v1222, %v1225
      %v1228 = vshrl.u32 %v1097, 16
      %v1230 = vrot.slane %v1228, 4
      %v1231 = vshll.u32 %v1097, 16
      %v1233 = vrot.slane %v1231, 5
      %v1234 = vor.u32 %v1230, %v1233
      %v1235 = vsel %vm1116, %v1226, %v1234
      %v1237 = vshrl.u32 %v1098, 16
      %v1239 = vrot.slane %v1237, 4
      %v1240 = vshll.u32 %v1098, 16
      %v1242 = vrot.slane %v1240, 5
      %v1243 = vor.u32 %v1239, %v1242
      %v1245 = vshrl.u32 %v1099, 16
      %v1247 = vrot.slane %v1245, 4
      %v1248 = vshll.u32 %v1099, 16
      %v1250 = vrot.slane %v1248, 5
      %v1251 = vor.u32 %v1247, %v1250
      %v1252 = vsel %vm1116, %v1243, %v1251
      %v1254 = vshrl.u32 %v1100, 16
      %v1256 = vrot.slane %v1254, 4
      %v1257 = vshll.u32 %v1100, 16
      %v1259 = vrot.slane %v1257, 5
      %v1260 = vor.u32 %v1256, %v1259
      %v1262 = vshrl.u32 %v1101, 16
      %v1264 = vrot.slane %v1262, 4
      %v1265 = vshll.u32 %v1101, 16
      %v1267 = vrot.slane %v1265, 5
      %v1268 = vor.u32 %v1264, %v1267
      %v1269 = vsel %vm1116, %v1260, %v1268
      %v1271 = vshrl.u32 %v1102, 16
      %v1273 = vrot.slane %v1271, 4
      %v1274 = vshll.u32 %v1102, 16
      %v1276 = vrot.slane %v1274, 5
      %v1277 = vor.u32 %v1273, %v1276
      %v1279 = vshrl.u32 %v1103, 16
      %v1281 = vrot.slane %v1279, 4
      %v1282 = vshll.u32 %v1103, 16
      %v1284 = vrot.slane %v1282, 5
      %v1285 = vor.u32 %v1281, %v1284
      %v1286 = vsel %vm1116, %v1277, %v1285
      %v1288 = vshrl.u32 %v1104, 16
      %v1290 = vrot.slane %v1288, 4
      %v1291 = vshll.u32 %v1104, 16
      %v1293 = vrot.slane %v1291, 5
      %v1294 = vor.u32 %v1290, %v1293
      %v1296 = vshrl.u32 %v1105, 16
      %v1298 = vrot.slane %v1296, 4
      %v1299 = vshll.u32 %v1105, 16
      %v1301 = vrot.slane %v1299, 5
      %v1302 = vor.u32 %v1298, %v1301
      %v1303 = vsel %vm1116, %v1294, %v1302
      %v1305 = vshrl.u32 %v1106, 16
      %v1307 = vrot.slane %v1305, 4
      %v1308 = vshll.u32 %v1106, 16
      %v1310 = vrot.slane %v1308, 5
      %v1311 = vor.u32 %v1307, %v1310
      %v1313 = vshrl.u32 %v1107, 16
      %v1315 = vrot.slane %v1313, 4
      %v1316 = vshll.u32 %v1107, 16
      %v1318 = vrot.slane %v1316, 5
      %v1319 = vor.u32 %v1315, %v1318
      %v1320 = vsel %vm1116, %v1311, %v1319
      %v1322 = vshrl.u32 %v1108, 16
      %v1324 = vrot.slane %v1322, 4
      %v1325 = vshll.u32 %v1108, 16
      %v1327 = vrot.slane %v1325, 5
      %v1328 = vor.u32 %v1324, %v1327
      %v1330 = vshrl.u32 %v1109, 16
      %v1332 = vrot.slane %v1330, 4
      %v1333 = vshll.u32 %v1109, 16
      %v1335 = vrot.slane %v1333, 5
      %v1336 = vor.u32 %v1332, %v1335
      %v1337 = vsel %vm1116, %v1328, %v1336
      %v1339 = vshrl.u32 %v1110, 16
      %v1341 = vrot.slane %v1339, 4
      %v1342 = vshll.u32 %v1110, 16
      %v1344 = vrot.slane %v1342, 5
      %v1345 = vor.u32 %v1341, %v1344
      %v1347 = vshrl.u32 %v1111, 16
      %v1349 = vrot.slane %v1347, 4
      %v1350 = vshll.u32 %v1111, 16
      %v1352 = vrot.slane %v1350, 5
      %v1353 = vor.u32 %v1349, %v1352
      %v1354 = vsel %vm1116, %v1345, %v1353
      %v1356 = vshrl.u32 %v1112, 16
      %v1358 = vrot.slane %v1356, 4
      %v1359 = vshll.u32 %v1112, 16
      %v1361 = vrot.slane %v1359, 5
      %v1362 = vor.u32 %v1358, %v1361
      %v1364 = vshrl.u32 %v1113, 16
      %v1366 = vrot.slane %v1364, 4
      %v1367 = vshll.u32 %v1113, 16
      %v1369 = vrot.slane %v1367, 5
      %v1370 = vor.u32 %v1366, %v1369
      %v1371 = vsel %vm1116, %v1362, %v1370
      %v1373 = vshrl.u32 %v1114, 16
      %v1375 = vrot.slane %v1373, 4
      %v1376 = vshll.u32 %v1114, 16
      %v1378 = vrot.slane %v1376, 5
      %v1379 = vor.u32 %v1375, %v1378
      %v1381 = vshrl.u32 %v1115, 16
      %v1383 = vrot.slane %v1381, 4
      %v1384 = vshll.u32 %v1115, 16
      %v1386 = vrot.slane %v1384, 5
      %v1387 = vor.u32 %v1383, %v1386
      %v1388 = vsel %vm1116, %v1379, %v1387
      %1389 = vrot.lane.b32.xlu0 %v1133, 8
      %v1390 = vpop.permute.xlu0 %1389
      %1391 = vrot.lane.b32.xlu0 %v1150, 8
      %v1392 = vpop.permute.xlu0 %1391
      %1393 = vrot.lane.b32.xlu0 %v1167, 8
      %v1394 = vpop.permute.xlu0 %1393
      %1395 = vrot.lane.b32.xlu0 %v1184, 8
      %v1396 = vpop.permute.xlu0 %1395
      %1397 = vrot.lane.b32.xlu0 %v1201, 8
      %v1398 = vpop.permute.xlu0 %1397
      %1399 = vrot.lane.b32.xlu0 %v1218, 8
      %v1400 = vpop.permute.xlu0 %1399
      %1401 = vrot.lane.b32.xlu0 %v1235, 8
      %v1402 = vpop.permute.xlu0 %1401
      %1403 = vrot.lane.b32.xlu0 %v1252, 8
      %v1404 = vpop.permute.xlu0 %1403
      %1405 = vrot.lane.b32.xlu0 %v1269, 8
      %v1406 = vpop.permute.xlu0 %1405
      %1407 = vrot.lane.b32.xlu0 %v1286, 8
      %v1408 = vpop.permute.xlu0 %1407
      %1409 = vrot.lane.b32.xlu0 %v1303, 8
      %v1410 = vpop.permute.xlu0 %1409
      %1411 = vrot.lane.b32.xlu0 %v1320, 8
      %v1412 = vpop.permute.xlu0 %1411
      %1413 = vrot.lane.b32.xlu0 %v1337, 8
      %v1414 = vpop.permute.xlu0 %1413
      %1415 = vrot.lane.b32.xlu0 %v1354, 8
      %v1416 = vpop.permute.xlu0 %1415
      %1417 = vrot.lane.b32.xlu0 %v1371, 8
      %v1418 = vpop.permute.xlu0 %1417
      %1419 = vrot.lane.b32.xlu0 %v1388, 8
      %v1420 = vpop.permute.xlu0 %1419
      %vm1437 = vcmask 97344
      %1438 = vst.msk [vmem:[#allocation4] sm:$0xff] %vm1437, %v1390
      %1439 = vst.msk [vmem:[#allocation4 + $0x8] sm:$0xff] %vm1437, %v1392
      %1440 = vst.msk [vmem:[#allocation4 + $0x10] sm:$0xff] %vm1437, %v1394
      %1441 = vst.msk [vmem:[#allocation4 + $0x18] sm:$0xff] %vm1437, %v1396
      %1442 = vst.msk [vmem:[#allocation4 + $0x20] sm:$0xff] %vm1437, %v1398
      %1443 = vst.msk [vmem:[#allocation4 + $0x28] sm:$0xff] %vm1437, %v1400
      %1444 = vst.msk [vmem:[#allocation4 + $0x30] sm:$0xff] %vm1437, %v1402
      %1445 = vst.msk [vmem:[#allocation4 + $0x38] sm:$0xff] %vm1437, %v1404
      %1446 = vst.msk [vmem:[#allocation4 + $0x40] sm:$0xff] %vm1437, %v1406
      %1447 = vst.msk [vmem:[#allocation4 + $0x48] sm:$0xff] %vm1437, %v1408
      %1448 = vst.msk [vmem:[#allocation4 + $0x50] sm:$0xff] %vm1437, %v1410
      %1449 = vst.msk [vmem:[#allocation4 + $0x58] sm:$0xff] %vm1437, %v1412
      %1450 = vst.msk [vmem:[#allocation4 + $0x60] sm:$0xff] %vm1437, %v1414
      %1451 = vst.msk [vmem:[#allocation4 + $0x68] sm:$0xff] %vm1437, %v1416
      %1452 = vst.msk [vmem:[#allocation4 + $0x70] sm:$0xff] %vm1437, %v1418
      %1453 = vst.msk [vmem:[#allocation4 + $0x78] sm:$0xff] %vm1437, %v1420
      %v1454 = vld [vmem:[%s518] sm:$0xf8]
      %v1455 = vld [vmem:[%s518 + $0x8] sm:$0xf]
      %v1456 = vld [vmem:[%s518 + $0x10] sm:$0xf8]
      %v1457 = vld [vmem:[%s518 + $0x18] sm:$0xf]
      %v1458 = vld [vmem:[%s518 + $0x20] sm:$0xf8]
      %v1459 = vld [vmem:[%s518 + $0x28] sm:$0xf]
      %v1460 = vld [vmem:[%s518 + $0x30] sm:$0xf8]
      %v1461 = vld [vmem:[%s518 + $0x38] sm:$0xf]
      %v1462 = vld [vmem:[%s518 + $0x40] sm:$0xf8]
      %v1463 = vld [vmem:[%s518 + $0x48] sm:$0xf]
      %v1464 = vld [vmem:[%s518 + $0x50] sm:$0xf8]
      %v1465 = vld [vmem:[%s518 + $0x58] sm:$0xf]
      %v1466 = vld [vmem:[%s518 + $0x60] sm:$0xf8]
      %v1467 = vld [vmem:[%s518 + $0x68] sm:$0xf]
      %v1468 = vld [vmem:[%s518 + $0x70] sm:$0xf8]
      %v1469 = vld [vmem:[%s518 + $0x78] sm:$0xf]
      %v1470 = vld [vmem:[%s518 + $0x80] sm:$0xf8]
      %v1471 = vld [vmem:[%s518 + $0x88] sm:$0xf]
      %v1472 = vld [vmem:[%s518 + $0x90] sm:$0xf8]
      %v1473 = vld [vmem:[%s518 + $0x98] sm:$0xf]
      %v1474 = vld [vmem:[%s518 + $0xa0] sm:$0xf8]
      %v1475 = vld [vmem:[%s518 + $0xa8] sm:$0xf]
      %v1476 = vld [vmem:[%s518 + $0xb0] sm:$0xf8]
      %v1477 = vld [vmem:[%s518 + $0xb8] sm:$0xf]
      %v1478 = vld [vmem:[%s518 + $0xc0] sm:$0xf8]
      %v1479 = vld [vmem:[%s518 + $0xc8] sm:$0xf]
      %v1480 = vld [vmem:[%s518 + $0xd0] sm:$0xf8]
      %v1481 = vld [vmem:[%s518 + $0xd8] sm:$0xf]
      %v1482 = vld [vmem:[%s518 + $0xe0] sm:$0xf8]
      %v1483 = vld [vmem:[%s518 + $0xe8] sm:$0xf]
      %v1484 = vld [vmem:[%s518 + $0xf0] sm:$0xf8]
      %v1485 = vld [vmem:[%s518 + $0xf8] sm:$0xf]
      %v1487 = vshrl.u32 %v1454, 16
      %v1489 = vrot.slane %v1487, 3
      %v1490 = vshll.u32 %v1454, 16
      %v1492 = vrot.slane %v1490, 4
      %v1493 = vor.u32 %v1489, %v1492
      %v1495 = vshrl.u32 %v1455, 16
      %v1497 = vrot.slane %v1495, 3
      %v1498 = vshll.u32 %v1455, 16
      %v1500 = vrot.slane %v1498, 4
      %v1501 = vor.u32 %v1497, %v1500
      %v1502 = vsel %vm236, %v1493, %v1501
      %v1504 = vshrl.u32 %v1456, 16
      %v1506 = vrot.slane %v1504, 3
      %v1507 = vshll.u32 %v1456, 16
      %v1509 = vrot.slane %v1507, 4
      %v1510 = vor.u32 %v1506, %v1509
      %v1512 = vshrl.u32 %v1457, 16
      %v1514 = vrot.slane %v1512, 3
      %v1515 = vshll.u32 %v1457, 16
      %v1517 = vrot.slane %v1515, 4
      %v1518 = vor.u32 %v1514, %v1517
      %v1519 = vsel %vm236, %v1510, %v1518
      %v1521 = vshrl.u32 %v1458, 16
      %v1523 = vrot.slane %v1521, 3
      %v1524 = vshll.u32 %v1458, 16
      %v1526 = vrot.slane %v1524, 4
      %v1527 = vor.u32 %v1523, %v1526
      %v1529 = vshrl.u32 %v1459, 16
      %v1531 = vrot.slane %v1529, 3
      %v1532 = vshll.u32 %v1459, 16
      %v1534 = vrot.slane %v1532, 4
      %v1535 = vor.u32 %v1531, %v1534
      %v1536 = vsel %vm236, %v1527, %v1535
      %v1538 = vshrl.u32 %v1460, 16
      %v1540 = vrot.slane %v1538, 3
      %v1541 = vshll.u32 %v1460, 16
      %v1543 = vrot.slane %v1541, 4
      %v1544 = vor.u32 %v1540, %v1543
      %v1546 = vshrl.u32 %v1461, 16
      %v1548 = vrot.slane %v1546, 3
      %v1549 = vshll.u32 %v1461, 16
      %v1551 = vrot.slane %v1549, 4
      %v1552 = vor.u32 %v1548, %v1551
      %v1553 = vsel %vm236, %v1544, %v1552
      %v1555 = vshrl.u32 %v1462, 16
      %v1557 = vrot.slane %v1555, 3
      %v1558 = vshll.u32 %v1462, 16
      %v1560 = vrot.slane %v1558, 4
      %v1561 = vor.u32 %v1557, %v1560
      %v1563 = vshrl.u32 %v1463, 16
      %v1565 = vrot.slane %v1563, 3
      %v1566 = vshll.u32 %v1463, 16
      %v1568 = vrot.slane %v1566, 4
      %v1569 = vor.u32 %v1565, %v1568
      %v1570 = vsel %vm236, %v1561, %v1569
      %v1572 = vshrl.u32 %v1464, 16
      %v1574 = vrot.slane %v1572, 3
      %v1575 = vshll.u32 %v1464, 16
      %v1577 = vrot.slane %v1575, 4
      %v1578 = vor.u32 %v1574, %v1577
      %v1580 = vshrl.u32 %v1465, 16
      %v1582 = vrot.slane %v1580, 3
      %v1583 = vshll.u32 %v1465, 16
      %v1585 = vrot.slane %v1583, 4
      %v1586 = vor.u32 %v1582, %v1585
      %v1587 = vsel %vm236, %v1578, %v1586
      %v1589 = vshrl.u32 %v1466, 16
      %v1591 = vrot.slane %v1589, 3
      %v1592 = vshll.u32 %v1466, 16
      %v1594 = vrot.slane %v1592, 4
      %v1595 = vor.u32 %v1591, %v1594
      %v1597 = vshrl.u32 %v1467, 16
      %v1599 = vrot.slane %v1597, 3
      %v1600 = vshll.u32 %v1467, 16
      %v1602 = vrot.slane %v1600, 4
      %v1603 = vor.u32 %v1599, %v1602
      %v1604 = vsel %vm236, %v1595, %v1603
      %v1606 = vshrl.u32 %v1468, 16
      %v1608 = vrot.slane %v1606, 3
      %v1609 = vshll.u32 %v1468, 16
      %v1611 = vrot.slane %v1609, 4
      %v1612 = vor.u32 %v1608, %v1611
      %v1614 = vshrl.u32 %v1469, 16
      %v1616 = vrot.slane %v1614, 3
      %v1617 = vshll.u32 %v1469, 16
      %v1619 = vrot.slane %v1617, 4
      %v1620 = vor.u32 %v1616, %v1619
      %v1621 = vsel %vm236, %v1612, %v1620
      %v1623 = vshrl.u32 %v1470, 16
      %v1625 = vrot.slane %v1623, 3
      %v1626 = vshll.u32 %v1470, 16
      %v1628 = vrot.slane %v1626, 4
      %v1629 = vor.u32 %v1625, %v1628
      %v1631 = vshrl.u32 %v1471, 16
      %v1633 = vrot.slane %v1631, 3
      %v1634 = vshll.u32 %v1471, 16
      %v1636 = vrot.slane %v1634, 4
      %v1637 = vor.u32 %v1633, %v1636
      %v1638 = vsel %vm236, %v1629, %v1637
      %v1640 = vshrl.u32 %v1472, 16
      %v1642 = vrot.slane %v1640, 3
      %v1643 = vshll.u32 %v1472, 16
      %v1645 = vrot.slane %v1643, 4
      %v1646 = vor.u32 %v1642, %v1645
      %v1648 = vshrl.u32 %v1473, 16
      %v1650 = vrot.slane %v1648, 3
      %v1651 = vshll.u32 %v1473, 16
      %v1653 = vrot.slane %v1651, 4
      %v1654 = vor.u32 %v1650, %v1653
      %v1655 = vsel %vm236, %v1646, %v1654
      %v1657 = vshrl.u32 %v1474, 16
      %v1659 = vrot.slane %v1657, 3
      %v1660 = vshll.u32 %v1474, 16
      %v1662 = vrot.slane %v1660, 4
      %v1663 = vor.u32 %v1659, %v1662
      %v1665 = vshrl.u32 %v1475, 16
      %v1667 = vrot.slane %v1665, 3
      %v1668 = vshll.u32 %v1475, 16
      %v1670 = vrot.slane %v1668, 4
      %v1671 = vor.u32 %v1667, %v1670
      %v1672 = vsel %vm236, %v1663, %v1671
      %v1674 = vshrl.u32 %v1476, 16
      %v1676 = vrot.slane %v1674, 3
      %v1677 = vshll.u32 %v1476, 16
      %v1679 = vrot.slane %v1677, 4
      %v1680 = vor.u32 %v1676, %v1679
      %v1682 = vshrl.u32 %v1477, 16
      %v1684 = vrot.slane %v1682, 3
      %v1685 = vshll.u32 %v1477, 16
      %v1687 = vrot.slane %v1685, 4
      %v1688 = vor.u32 %v1684, %v1687
      %v1689 = vsel %vm236, %v1680, %v1688
      %v1691 = vshrl.u32 %v1478, 16
      %v1693 = vrot.slane %v1691, 3
      %v1694 = vshll.u32 %v1478, 16
      %v1696 = vrot.slane %v1694, 4
      %v1697 = vor.u32 %v1693, %v1696
      %v1699 = vshrl.u32 %v1479, 16
      %v1701 = vrot.slane %v1699, 3
      %v1702 = vshll.u32 %v1479, 16
      %v1704 = vrot.slane %v1702, 4
      %v1705 = vor.u32 %v1701, %v1704
      %v1706 = vsel %vm236, %v1697, %v1705
      %v1708 = vshrl.u32 %v1480, 16
      %v1710 = vrot.slane %v1708, 3
      %v1711 = vshll.u32 %v1480, 16
      %v1713 = vrot.slane %v1711, 4
      %v1714 = vor.u32 %v1710, %v1713
      %v1716 = vshrl.u32 %v1481, 16
      %v1718 = vrot.slane %v1716, 3
      %v1719 = vshll.u32 %v1481, 16
      %v1721 = vrot.slane %v1719, 4
      %v1722 = vor.u32 %v1718, %v1721
      %v1723 = vsel %vm236, %v1714, %v1722
      %v1725 = vshrl.u32 %v1482, 16
      %v1727 = vrot.slane %v1725, 3
      %v1728 = vshll.u32 %v1482, 16
      %v1730 = vrot.slane %v1728, 4
      %v1731 = vor.u32 %v1727, %v1730
      %v1733 = vshrl.u32 %v1483, 16
      %v1735 = vrot.slane %v1733, 3
      %v1736 = vshll.u32 %v1483, 16
      %v1738 = vrot.slane %v1736, 4
      %v1739 = vor.u32 %v1735, %v1738
      %v1740 = vsel %vm236, %v1731, %v1739
      %v1742 = vshrl.u32 %v1484, 16
      %v1744 = vrot.slane %v1742, 3
      %v1745 = vshll.u32 %v1484, 16
      %v1747 = vrot.slane %v1745, 4
      %v1748 = vor.u32 %v1744, %v1747
      %v1750 = vshrl.u32 %v1485, 16
      %v1752 = vrot.slane %v1750, 3
      %v1753 = vshll.u32 %v1485, 16
      %v1755 = vrot.slane %v1753, 4
      %v1756 = vor.u32 %v1752, %v1755
      %v1757 = vsel %vm236, %v1748, %v1756
      %1758 = vrot.lane.b32.xlu0 %v1502, 12
      %v1759 = vpop.permute.xlu0 %1758
      %1760 = vrot.lane.b32.xlu0 %v1519, 12
      %v1761 = vpop.permute.xlu0 %1760
      %1762 = vrot.lane.b32.xlu0 %v1536, 12
      %v1763 = vpop.permute.xlu0 %1762
      %1764 = vrot.lane.b32.xlu0 %v1553, 12
      %v1765 = vpop.permute.xlu0 %1764
      %1766 = vrot.lane.b32.xlu0 %v1570, 12
      %v1767 = vpop.permute.xlu0 %1766
      %1768 = vrot.lane.b32.xlu0 %v1587, 12
      %v1769 = vpop.permute.xlu0 %1768
      %1770 = vrot.lane.b32.xlu0 %v1604, 12
      %v1771 = vpop.permute.xlu0 %1770
      %1772 = vrot.lane.b32.xlu0 %v1621, 12
      %v1773 = vpop.permute.xlu0 %1772
      %1774 = vrot.lane.b32.xlu0 %v1638, 12
      %v1775 = vpop.permute.xlu0 %1774
      %1776 = vrot.lane.b32.xlu0 %v1655, 12
      %v1777 = vpop.permute.xlu0 %1776
      %1778 = vrot.lane.b32.xlu0 %v1672, 12
      %v1779 = vpop.permute.xlu0 %1778
      %1780 = vrot.lane.b32.xlu0 %v1689, 12
      %v1781 = vpop.permute.xlu0 %1780
      %1782 = vrot.lane.b32.xlu0 %v1706, 12
      %v1783 = vpop.permute.xlu0 %1782
      %1784 = vrot.lane.b32.xlu0 %v1723, 12
      %v1785 = vpop.permute.xlu0 %1784
      %1786 = vrot.lane.b32.xlu0 %v1740, 12
      %v1787 = vpop.permute.xlu0 %1786
      %1788 = vrot.lane.b32.xlu0 %v1757, 12
      %v1789 = vpop.permute.xlu0 %1788
      %vm1806 = vcmask 130144
      %1807 = vst.msk [vmem:[#allocation4] sm:$0xff] %vm1806, %v1759
      %1808 = vst.msk [vmem:[#allocation4 + $0x8] sm:$0xff] %vm1806, %v1761
      %1809 = vst.msk [vmem:[#allocation4 + $0x10] sm:$0xff] %vm1806, %v1763
      %1810 = vst.msk [vmem:[#allocation4 + $0x18] sm:$0xff] %vm1806, %v1765
      %1811 = vst.msk [vmem:[#allocation4 + $0x20] sm:$0xff] %vm1806, %v1767
      %1812 = vst.msk [vmem:[#allocation4 + $0x28] sm:$0xff] %vm1806, %v1769
      %1813 = vst.msk [vmem:[#allocation4 + $0x30] sm:$0xff] %vm1806, %v1771
      %1814 = vst.msk [vmem:[#allocation4 + $0x38] sm:$0xff] %vm1806, %v1773
      %1815 = vst.msk [vmem:[#allocation4 + $0x40] sm:$0xff] %vm1806, %v1775
      %1816 = vst.msk [vmem:[#allocation4 + $0x48] sm:$0xff] %vm1806, %v1777
      %1817 = vst.msk [vmem:[#allocation4 + $0x50] sm:$0xff] %vm1806, %v1779
      %1818 = vst.msk [vmem:[#allocation4 + $0x58] sm:$0xff] %vm1806, %v1781
      %1819 = vst.msk [vmem:[#allocation4 + $0x60] sm:$0xff] %vm1806, %v1783
      %1820 = vst.msk [vmem:[#allocation4 + $0x68] sm:$0xff] %vm1806, %v1785
      %1821 = vst.msk [vmem:[#allocation4 + $0x70] sm:$0xff] %vm1806, %v1787
      %1822 = vst.msk [vmem:[#allocation4 + $0x78] sm:$0xff] %vm1806, %v1789
      %v1823 = vld [vmem:[%s518] sm:$0xf0]
      %v1824 = vld [vmem:[%s518 + $0x8] sm:$0xf]
      %v1825 = vld [vmem:[%s518 + $0x10] sm:$0xf0]
      %v1826 = vld [vmem:[%s518 + $0x18] sm:$0xf]
      %v1827 = vld [vmem:[%s518 + $0x20] sm:$0xf0]
      %v1828 = vld [vmem:[%s518 + $0x28] sm:$0xf]
      %v1829 = vld [vmem:[%s518 + $0x30] sm:$0xf0]
      %v1830 = vld [vmem:[%s518 + $0x38] sm:$0xf]
      %v1831 = vld [vmem:[%s518 + $0x40] sm:$0xf0]
      %v1832 = vld [vmem:[%s518 + $0x48] sm:$0xf]
      %v1833 = vld [vmem:[%s518 + $0x50] sm:$0xf0]
      %v1834 = vld [vmem:[%s518 + $0x58] sm:$0xf]
      %v1835 = vld [vmem:[%s518 + $0x60] sm:$0xf0]
      %v1836 = vld [vmem:[%s518 + $0x68] sm:$0xf]
      %v1837 = vld [vmem:[%s518 + $0x70] sm:$0xf0]
      %v1838 = vld [vmem:[%s518 + $0x78] sm:$0xf]
      %v1839 = vld [vmem:[%s518 + $0x80] sm:$0xf0]
      %v1840 = vld [vmem:[%s518 + $0x88] sm:$0xf]
      %v1841 = vld [vmem:[%s518 + $0x90] sm:$0xf0]
      %v1842 = vld [vmem:[%s518 + $0x98] sm:$0xf]
      %v1843 = vld [vmem:[%s518 + $0xa0] sm:$0xf0]
      %v1844 = vld [vmem:[%s518 + $0xa8] sm:$0xf]
      %v1845 = vld [vmem:[%s518 + $0xb0] sm:$0xf0]
      %v1846 = vld [vmem:[%s518 + $0xb8] sm:$0xf]
      %v1847 = vld [vmem:[%s518 + $0xc0] sm:$0xf0]
      %v1848 = vld [vmem:[%s518 + $0xc8] sm:$0xf]
      %v1849 = vld [vmem:[%s518 + $0xd0] sm:$0xf0]
      %v1850 = vld [vmem:[%s518 + $0xd8] sm:$0xf]
      %v1851 = vld [vmem:[%s518 + $0xe0] sm:$0xf0]
      %v1852 = vld [vmem:[%s518 + $0xe8] sm:$0xf]
      %v1853 = vld [vmem:[%s518 + $0xf0] sm:$0xf0]
      %v1854 = vld [vmem:[%s518 + $0xf8] sm:$0xf]
      %v1887 = vrot.slane %v1823, 4
      %v1888 = vrot.slane %v1824, 4
      %v1889 = vsel %vm970, %v1887, %v1888
      %v1890 = vrot.slane %v1825, 4
      %v1891 = vrot.slane %v1826, 4
      %v1892 = vsel %vm970, %v1890, %v1891
      %v1893 = vrot.slane %v1827, 4
      %v1894 = vrot.slane %v1828, 4
      %v1895 = vsel %vm970, %v1893, %v1894
      %v1896 = vrot.slane %v1829, 4
      %v1897 = vrot.slane %v1830, 4
      %v1898 = vsel %vm970, %v1896, %v1897
      %v1899 = vrot.slane %v1831, 4
      %v1900 = vrot.slane %v1832, 4
      %v1901 = vsel %vm970, %v1899, %v1900
      %v1902 = vrot.slane %v1833, 4
      %v1903 = vrot.slane %v1834, 4
      %v1904 = vsel %vm970, %v1902, %v1903
      %v1905 = vrot.slane %v1835, 4
      %v1906 = vrot.slane %v1836, 4
      %v1907 = vsel %vm970, %v1905, %v1906
      %v1908 = vrot.slane %v1837, 4
      %v1909 = vrot.slane %v1838, 4
      %v1910 = vsel %vm970, %v1908, %v1909
      %v1911 = vrot.slane %v1839, 4
      %v1912 = vrot.slane %v1840, 4
      %v1913 = vsel %vm970, %v1911, %v1912
      %v1914 = vrot.slane %v1841, 4
      %v1915 = vrot.slane %v1842, 4
      %v1916 = vsel %vm970, %v1914, %v1915
      %v1917 = vrot.slane %v1843, 4
      %v1918 = vrot.slane %v1844, 4
      %v1919 = vsel %vm970, %v1917, %v1918
      %v1920 = vrot.slane %v1845, 4
      %v1921 = vrot.slane %v1846, 4
      %v1922 = vsel %vm970, %v1920, %v1921
      %v1923 = vrot.slane %v1847, 4
      %v1924 = vrot.slane %v1848, 4
      %v1925 = vsel %vm970, %v1923, %v1924
      %v1926 = vrot.slane %v1849, 4
      %v1927 = vrot.slane %v1850, 4
      %v1928 = vsel %vm970, %v1926, %v1927
      %v1929 = vrot.slane %v1851, 4
      %v1930 = vrot.slane %v1852, 4
      %v1931 = vsel %vm970, %v1929, %v1930
      %v1932 = vrot.slane %v1853, 4
      %v1933 = vrot.slane %v1854, 4
      %v1934 = vsel %vm970, %v1932, %v1933
      %1935 = vrot.lane.b32.xlu0 %v1889, 16
      %v1936 = vpop.permute.xlu0 %1935
      %1937 = vrot.lane.b32.xlu0 %v1892, 16
      %v1938 = vpop.permute.xlu0 %1937
      %1939 = vrot.lane.b32.xlu0 %v1895, 16
      %v1940 = vpop.permute.xlu0 %1939
      %1941 = vrot.lane.b32.xlu0 %v1898, 16
      %v1942 = vpop.permute.xlu0 %1941
      %1943 = vrot.lane.b32.xlu0 %v1901, 16
      %v1944 = vpop.permute.xlu0 %1943
      %1945 = vrot.lane.b32.xlu0 %v1904, 16
      %v1946 = vpop.permute.xlu0 %1945
      %1947 = vrot.lane.b32.xlu0 %v1907, 16
      %v1948 = vpop.permute.xlu0 %1947
      %1949 = vrot.lane.b32.xlu0 %v1910, 16
      %v1950 = vpop.permute.xlu0 %1949
      %1951 = vrot.lane.b32.xlu0 %v1913, 16
      %v1952 = vpop.permute.xlu0 %1951
      %1953 = vrot.lane.b32.xlu0 %v1916, 16
      %v1954 = vpop.permute.xlu0 %1953
      %1955 = vrot.lane.b32.xlu0 %v1919, 16
      %v1956 = vpop.permute.xlu0 %1955
      %1957 = vrot.lane.b32.xlu0 %v1922, 16
      %v1958 = vpop.permute.xlu0 %1957
      %1959 = vrot.lane.b32.xlu0 %v1925, 16
      %v1960 = vpop.permute.xlu0 %1959
      %1961 = vrot.lane.b32.xlu0 %v1928, 16
      %v1962 = vpop.permute.xlu0 %1961
      %1963 = vrot.lane.b32.xlu0 %v1931, 16
      %v1964 = vpop.permute.xlu0 %1963
      %1965 = vrot.lane.b32.xlu0 %v1934, 16
      %v1966 = vpop.permute.xlu0 %1965
      %vm1983 = vcmask 162944
      %1984 = vst.msk [vmem:[#allocation4] sm:$0xff] %vm1983, %v1936
      %1985 = vst.msk [vmem:[#allocation4 + $0x8] sm:$0xff] %vm1983, %v1938
      %1986 = vst.msk [vmem:[#allocation4 + $0x10] sm:$0xff] %vm1983, %v1940
      %1987 = vst.msk [vmem:[#allocation4 + $0x18] sm:$0xff] %vm1983, %v1942
      %1988 = vst.msk [vmem:[#allocation4 + $0x20] sm:$0xff] %vm1983, %v1944
      %1989 = vst.msk [vmem:[#allocation4 + $0x28] sm:$0xff] %vm1983, %v1946
      %1990 = vst.msk [vmem:[#allocation4 + $0x30] sm:$0xff] %vm1983, %v1948
      %1991 = vst.msk [vmem:[#allocation4 + $0x38] sm:$0xff] %vm1983, %v1950
      %1992 = vst.msk [vmem:[#allocation4 + $0x40] sm:$0xff] %vm1983, %v1952
      %1993 = vst.msk [vmem:[#allocation4 + $0x48] sm:$0xff] %vm1983, %v1954
      %1994 = vst.msk [vmem:[#allocation4 + $0x50] sm:$0xff] %vm1983, %v1956
      %1995 = vst.msk [vmem:[#allocation4 + $0x58] sm:$0xff] %vm1983, %v1958
      %1996 = vst.msk [vmem:[#allocation4 + $0x60] sm:$0xff] %vm1983, %v1960
      %1997 = vst.msk [vmem:[#allocation4 + $0x68] sm:$0xff] %vm1983, %v1962
      %1998 = vst.msk [vmem:[#allocation4 + $0x70] sm:$0xff] %vm1983, %v1964
      %1999 = vst.msk [vmem:[#allocation4 + $0x78] sm:$0xff] %vm1983, %v1966
      %v2000 = vld [vmem:[%s518] sm:$0xf0]
      %v2001 = vld [vmem:[%s518 + $0x8] sm:$0x1f]
      %v2002 = vld [vmem:[%s518 + $0x10] sm:$0xf0]
      %v2003 = vld [vmem:[%s518 + $0x18] sm:$0x1f]
      %v2004 = vld [vmem:[%s518 + $0x20] sm:$0xf0]
      %v2005 = vld [vmem:[%s518 + $0x28] sm:$0x1f]
      %v2006 = vld [vmem:[%s518 + $0x30] sm:$0xf0]
      %v2007 = vld [vmem:[%s518 + $0x38] sm:$0x1f]
      %v2008 = vld [vmem:[%s518 + $0x40] sm:$0xf0]
      %v2009 = vld [vmem:[%s518 + $0x48] sm:$0x1f]
      %v2010 = vld [vmem:[%s518 + $0x50] sm:$0xf0]
      %v2011 = vld [vmem:[%s518 + $0x58] sm:$0x1f]
      %v2012 = vld [vmem:[%s518 + $0x60] sm:$0xf0]
      %v2013 = vld [vmem:[%s518 + $0x68] sm:$0x1f]
      %v2014 = vld [vmem:[%s518 + $0x70] sm:$0xf0]
      %v2015 = vld [vmem:[%s518 + $0x78] sm:$0x1f]
      %v2016 = vld [vmem:[%s518 + $0x80] sm:$0xf0]
      %v2017 = vld [vmem:[%s518 + $0x88] sm:$0x1f]
      %v2018 = vld [vmem:[%s518 + $0x90] sm:$0xf0]
      %v2019 = vld [vmem:[%s518 + $0x98] sm:$0x1f]
      %v2020 = vld [vmem:[%s518 + $0xa0] sm:$0xf0]
      %v2021 = vld [vmem:[%s518 + $0xa8] sm:$0x1f]
      %v2022 = vld [vmem:[%s518 + $0xb0] sm:$0xf0]
      %v2023 = vld [vmem:[%s518 + $0xb8] sm:$0x1f]
      %v2024 = vld [vmem:[%s518 + $0xc0] sm:$0xf0]
      %v2025 = vld [vmem:[%s518 + $0xc8] sm:$0x1f]
      %v2026 = vld [vmem:[%s518 + $0xd0] sm:$0xf0]
      %v2027 = vld [vmem:[%s518 + $0xd8] sm:$0x1f]
      %v2028 = vld [vmem:[%s518 + $0xe0] sm:$0xf0]
      %v2029 = vld [vmem:[%s518 + $0xe8] sm:$0x1f]
      %v2030 = vld [vmem:[%s518 + $0xf0] sm:$0xf0]
      %v2031 = vld [vmem:[%s518 + $0xf8] sm:$0x1f]
      %v2033 = vshrl.u32 %v2000, 16
      %v2035 = vrot.slane %v2033, 4
      %v2036 = vshll.u32 %v2000, 16
      %v2038 = vrot.slane %v2036, 5
      %v2039 = vor.u32 %v2035, %v2038
      %v2041 = vshrl.u32 %v2001, 16
      %v2043 = vrot.slane %v2041, 4
      %v2044 = vshll.u32 %v2001, 16
      %v2046 = vrot.slane %v2044, 5
      %v2047 = vor.u32 %v2043, %v2046
      %v2048 = vsel %vm1116, %v2039, %v2047
      %v2050 = vshrl.u32 %v2002, 16
      %v2052 = vrot.slane %v2050, 4
      %v2053 = vshll.u32 %v2002, 16
      %v2055 = vrot.slane %v2053, 5
      %v2056 = vor.u32 %v2052, %v2055
      %v2058 = vshrl.u32 %v2003, 16
      %v2060 = vrot.slane %v2058, 4
      %v2061 = vshll.u32 %v2003, 16
      %v2063 = vrot.slane %v2061, 5
      %v2064 = vor.u32 %v2060, %v2063
      %v2065 = vsel %vm1116, %v2056, %v2064
      %v2067 = vshrl.u32 %v2004, 16
      %v2069 = vrot.slane %v2067, 4
      %v2070 = vshll.u32 %v2004, 16
      %v2072 = vrot.slane %v2070, 5
      %v2073 = vor.u32 %v2069, %v2072
      %v2075 = vshrl.u32 %v2005, 16
      %v2077 = vrot.slane %v2075, 4
      %v2078 = vshll.u32 %v2005, 16
      %v2080 = vrot.slane %v2078, 5
      %v2081 = vor.u32 %v2077, %v2080
      %v2082 = vsel %vm1116, %v2073, %v2081
      %v2084 = vshrl.u32 %v2006, 16
      %v2086 = vrot.slane %v2084, 4
      %v2087 = vshll.u32 %v2006, 16
      %v2089 = vrot.slane %v2087, 5
      %v2090 = vor.u32 %v2086, %v2089
      %v2092 = vshrl.u32 %v2007, 16
      %v2094 = vrot.slane %v2092, 4
      %v2095 = vshll.u32 %v2007, 16
      %v2097 = vrot.slane %v2095, 5
      %v2098 = vor.u32 %v2094, %v2097
      %v2099 = vsel %vm1116, %v2090, %v2098
      %v2101 = vshrl.u32 %v2008, 16
      %v2103 = vrot.slane %v2101, 4
      %v2104 = vshll.u32 %v2008, 16
      %v2106 = vrot.slane %v2104, 5
      %v2107 = vor.u32 %v2103, %v2106
      %v2109 = vshrl.u32 %v2009, 16
      %v2111 = vrot.slane %v2109, 4
      %v2112 = vshll.u32 %v2009, 16
      %v2114 = vrot.slane %v2112, 5
      %v2115 = vor.u32 %v2111, %v2114
      %v2116 = vsel %vm1116, %v2107, %v2115
      %v2118 = vshrl.u32 %v2010, 16
      %v2120 = vrot.slane %v2118, 4
      %v2121 = vshll.u32 %v2010, 16
      %v2123 = vrot.slane %v2121, 5
      %v2124 = vor.u32 %v2120, %v2123
      %v2126 = vshrl.u32 %v2011, 16
      %v2128 = vrot.slane %v2126, 4
      %v2129 = vshll.u32 %v2011, 16
      %v2131 = vrot.slane %v2129, 5
      %v2132 = vor.u32 %v2128, %v2131
      %v2133 = vsel %vm1116, %v2124, %v2132
      %v2135 = vshrl.u32 %v2012, 16
      %v2137 = vrot.slane %v2135, 4
      %v2138 = vshll.u32 %v2012, 16
      %v2140 = vrot.slane %v2138, 5
      %v2141 = vor.u32 %v2137, %v2140
      %v2143 = vshrl.u32 %v2013, 16
      %v2145 = vrot.slane %v2143, 4
      %v2146 = vshll.u32 %v2013, 16
      %v2148 = vrot.slane %v2146, 5
      %v2149 = vor.u32 %v2145, %v2148
      %v2150 = vsel %vm1116, %v2141, %v2149
      %v2152 = vshrl.u32 %v2014, 16
      %v2154 = vrot.slane %v2152, 4
      %v2155 = vshll.u32 %v2014, 16
      %v2157 = vrot.slane %v2155, 5
      %v2158 = vor.u32 %v2154, %v2157
      %v2160 = vshrl.u32 %v2015, 16
      %v2162 = vrot.slane %v2160, 4
      %v2163 = vshll.u32 %v2015, 16
      %v2165 = vrot.slane %v2163, 5
      %v2166 = vor.u32 %v2162, %v2165
      %v2167 = vsel %vm1116, %v2158, %v2166
      %v2169 = vshrl.u32 %v2016, 16
      %v2171 = vrot.slane %v2169, 4
      %v2172 = vshll.u32 %v2016, 16
      %v2174 = vrot.slane %v2172, 5
      %v2175 = vor.u32 %v2171, %v2174
      %v2177 = vshrl.u32 %v2017, 16
      %v2179 = vrot.slane %v2177, 4
      %v2180 = vshll.u32 %v2017, 16
      %v2182 = vrot.slane %v2180, 5
      %v2183 = vor.u32 %v2179, %v2182
      %v2184 = vsel %vm1116, %v2175, %v2183
      %v2186 = vshrl.u32 %v2018, 16
      %v2188 = vrot.slane %v2186, 4
      %v2189 = vshll.u32 %v2018, 16
      %v2191 = vrot.slane %v2189, 5
      %v2192 = vor.u32 %v2188, %v2191
      %v2194 = vshrl.u32 %v2019, 16
      %v2196 = vrot.slane %v2194, 4
      %v2197 = vshll.u32 %v2019, 16
      %v2199 = vrot.slane %v2197, 5
      %v2200 = vor.u32 %v2196, %v2199
      %v2201 = vsel %vm1116, %v2192, %v2200
      %v2203 = vshrl.u32 %v2020, 16
      %v2205 = vrot.slane %v2203, 4
      %v2206 = vshll.u32 %v2020, 16
      %v2208 = vrot.slane %v2206, 5
      %v2209 = vor.u32 %v2205, %v2208
      %v2211 = vshrl.u32 %v2021, 16
      %v2213 = vrot.slane %v2211, 4
      %v2214 = vshll.u32 %v2021, 16
      %v2216 = vrot.slane %v2214, 5
      %v2217 = vor.u32 %v2213, %v2216
      %v2218 = vsel %vm1116, %v2209, %v2217
      %v2220 = vshrl.u32 %v2022, 16
      %v2222 = vrot.slane %v2220, 4
      %v2223 = vshll.u32 %v2022, 16
      %v2225 = vrot.slane %v2223, 5
      %v2226 = vor.u32 %v2222, %v2225
      %v2228 = vshrl.u32 %v2023, 16
      %v2230 = vrot.slane %v2228, 4
      %v2231 = vshll.u32 %v2023, 16
      %v2233 = vrot.slane %v2231, 5
      %v2234 = vor.u32 %v2230, %v2233
      %v2235 = vsel %vm1116, %v2226, %v2234
      %v2237 = vshrl.u32 %v2024, 16
      %v2239 = vrot.slane %v2237, 4
      %v2240 = vshll.u32 %v2024, 16
      %v2242 = vrot.slane %v2240, 5
      %v2243 = vor.u32 %v2239, %v2242
      %v2245 = vshrl.u32 %v2025, 16
      %v2247 = vrot.slane %v2245, 4
      %v2248 = vshll.u32 %v2025, 16
      %v2250 = vrot.slane %v2248, 5
      %v2251 = vor.u32 %v2247, %v2250
      %v2252 = vsel %vm1116, %v2243, %v2251
      %v2254 = vshrl.u32 %v2026, 16
      %v2256 = vrot.slane %v2254, 4
      %v2257 = vshll.u32 %v2026, 16
      %v2259 = vrot.slane %v2257, 5
      %v2260 = vor.u32 %v2256, %v2259
      %v2262 = vshrl.u32 %v2027, 16
      %v2264 = vrot.slane %v2262, 4
      %v2265 = vshll.u32 %v2027, 16
      %v2267 = vrot.slane %v2265, 5
      %v2268 = vor.u32 %v2264, %v2267
      %v2269 = vsel %vm1116, %v2260, %v2268
      %v2271 = vshrl.u32 %v2028, 16
      %v2273 = vrot.slane %v2271, 4
      %v2274 = vshll.u32 %v2028, 16
      %v2276 = vrot.slane %v2274, 5
      %v2277 = vor.u32 %v2273, %v2276
      %v2279 = vshrl.u32 %v2029, 16
      %v2281 = vrot.slane %v2279, 4
      %v2282 = vshll.u32 %v2029, 16
      %v2284 = vrot.slane %v2282, 5
      %v2285 = vor.u32 %v2281, %v2284
      %v2286 = vsel %vm1116, %v2277, %v2285
      %v2288 = vshrl.u32 %v2030, 16
      %v2290 = vrot.slane %v2288, 4
      %v2291 = vshll.u32 %v2030, 16
      %v2293 = vrot.slane %v2291, 5
      %v2294 = vor.u32 %v2290, %v2293
      %v2296 = vshrl.u32 %v2031, 16
      %v2298 = vrot.slane %v2296, 4
      %v2299 = vshll.u32 %v2031, 16
      %v2301 = vrot.slane %v2299, 5
      %v2302 = vor.u32 %v2298, %v2301
      %v2303 = vsel %vm1116, %v2294, %v2302
      %2304 = vrot.lane.b32.xlu0 %v2048, 20
      %v2305 = vpop.permute.xlu0 %2304
      %2306 = vrot.lane.b32.xlu0 %v2065, 20
      %v2307 = vpop.permute.xlu0 %2306
      %2308 = vrot.lane.b32.xlu0 %v2082, 20
      %v2309 = vpop.permute.xlu0 %2308
      %2310 = vrot.lane.b32.xlu0 %v2099, 20
      %v2311 = vpop.permute.xlu0 %2310
      %2312 = vrot.lane.b32.xlu0 %v2116, 20
      %v2313 = vpop.permute.xlu0 %2312
      %2314 = vrot.lane.b32.xlu0 %v2133, 20
      %v2315 = vpop.permute.xlu0 %2314
      %2316 = vrot.lane.b32.xlu0 %v2150, 20
      %v2317 = vpop.permute.xlu0 %2316
      %2318 = vrot.lane.b32.xlu0 %v2167, 20
      %v2319 = vpop.permute.xlu0 %2318
      %2320 = vrot.lane.b32.xlu0 %v2184, 20
      %v2321 = vpop.permute.xlu0 %2320
      %2322 = vrot.lane.b32.xlu0 %v2201, 20
      %v2323 = vpop.permute.xlu0 %2322
      %2324 = vrot.lane.b32.xlu0 %v2218, 20
      %v2325 = vpop.permute.xlu0 %2324
      %2326 = vrot.lane.b32.xlu0 %v2235, 20
      %v2327 = vpop.permute.xlu0 %2326
      %2328 = vrot.lane.b32.xlu0 %v2252, 20
      %v2329 = vpop.permute.xlu0 %2328
      %2330 = vrot.lane.b32.xlu0 %v2269, 20
      %v2331 = vpop.permute.xlu0 %2330
      %2332 = vrot.lane.b32.xlu0 %v2286, 20
      %v2333 = vpop.permute.xlu0 %2332
      %2334 = vrot.lane.b32.xlu0 %v2303, 20
      %v2335 = vpop.permute.xlu0 %2334
      %vm2352 = vcmask 195744
      %2353 = vst.msk [vmem:[#allocation4] sm:$0xff] %vm2352, %v2305
      %2354 = vst.msk [vmem:[#allocation4 + $0x8] sm:$0xff] %vm2352, %v2307
      %2355 = vst.msk [vmem:[#allocation4 + $0x10] sm:$0xff] %vm2352, %v2309
      %2356 = vst.msk [vmem:[#allocation4 + $0x18] sm:$0xff] %vm2352, %v2311
      %2357 = vst.msk [vmem:[#allocation4 + $0x20] sm:$0xff] %vm2352, %v2313
      %2358 = vst.msk [vmem:[#allocation4 + $0x28] sm:$0xff] %vm2352, %v2315
      %2359 = vst.msk [vmem:[#allocation4 + $0x30] sm:$0xff] %vm2352, %v2317
      %2360 = vst.msk [vmem:[#allocation4 + $0x38] sm:$0xff] %vm2352, %v2319
      %2361 = vst.msk [vmem:[#allocation4 + $0x40] sm:$0xff] %vm2352, %v2321
      %2362 = vst.msk [vmem:[#allocation4 + $0x48] sm:$0xff] %vm2352, %v2323
      %2363 = vst.msk [vmem:[#allocation4 + $0x50] sm:$0xff] %vm2352, %v2325
      %2364 = vst.msk [vmem:[#allocation4 + $0x58] sm:$0xff] %vm2352, %v2327
      %2365 = vst.msk [vmem:[#allocation4 + $0x60] sm:$0xff] %vm2352, %v2329
      %2366 = vst.msk [vmem:[#allocation4 + $0x68] sm:$0xff] %vm2352, %v2331
      %2367 = vst.msk [vmem:[#allocation4 + $0x70] sm:$0xff] %vm2352, %v2333
      %2368 = vst.msk [vmem:[#allocation4 + $0x78] sm:$0xff] %vm2352, %v2335
      %s2369 = scalar_lea.vmem [#allocation2], 32
      %v2370 = vld [vmem:[%s2369] sm:$0xf8]
      %v2371 = vld [vmem:[%s2369 + $0x8] sm:$0xf]
      %v2372 = vld [vmem:[%s2369 + $0x10] sm:$0xf8]
      %v2373 = vld [vmem:[%s2369 + $0x18] sm:$0xf]
      %v2374 = vld [vmem:[%s2369 + $0x20] sm:$0xf8]
      %v2375 = vld [vmem:[%s2369 + $0x28] sm:$0xf]
      %v2376 = vld [vmem:[%s2369 + $0x30] sm:$0xf8]
      %v2377 = vld [vmem:[%s2369 + $0x38] sm:$0xf]
      %v2378 = vld [vmem:[%s2369 + $0x40] sm:$0xf8]
      %v2379 = vld [vmem:[%s2369 + $0x48] sm:$0xf]
      %v2380 = vld [vmem:[%s2369 + $0x50] sm:$0xf8]
      %v2381 = vld [vmem:[%s2369 + $0x58] sm:$0xf]
      %v2382 = vld [vmem:[%s2369 + $0x60] sm:$0xf8]
      %v2383 = vld [vmem:[%s2369 + $0x68] sm:$0xf]
      %v2384 = vld [vmem:[%s2369 + $0x70] sm:$0xf8]
      %v2385 = vld [vmem:[%s2369 + $0x78] sm:$0xf]
      %v2386 = vld [vmem:[%s2369 + $0x80] sm:$0xf8]
      %v2387 = vld [vmem:[%s2369 + $0x88] sm:$0xf]
      %v2388 = vld [vmem:[%s2369 + $0x90] sm:$0xf8]
      %v2389 = vld [vmem:[%s2369 + $0x98] sm:$0xf]
      %v2390 = vld [vmem:[%s2369 + $0xa0] sm:$0xf8]
      %v2391 = vld [vmem:[%s2369 + $0xa8] sm:$0xf]
      %v2392 = vld [vmem:[%s2369 + $0xb0] sm:$0xf8]
      %v2393 = vld [vmem:[%s2369 + $0xb8] sm:$0xf]
      %v2394 = vld [vmem:[%s2369 + $0xc0] sm:$0xf8]
      %v2395 = vld [vmem:[%s2369 + $0xc8] sm:$0xf]
      %v2396 = vld [vmem:[%s2369 + $0xd0] sm:$0xf8]
      %v2397 = vld [vmem:[%s2369 + $0xd8] sm:$0xf]
      %v2398 = vld [vmem:[%s2369 + $0xe0] sm:$0xf8]
      %v2399 = vld [vmem:[%s2369 + $0xe8] sm:$0xf]
      %v2400 = vld [vmem:[%s2369 + $0xf0] sm:$0xf8]
      %v2401 = vld [vmem:[%s2369 + $0xf8] sm:$0xf]
      %v2403 = vshrl.u32 %v2370, 16
      %v2405 = vrot.slane %v2403, 3
      %v2406 = vshll.u32 %v2370, 16
      %v2408 = vrot.slane %v2406, 4
      %v2409 = vor.u32 %v2405, %v2408
      %v2411 = vshrl.u32 %v2371, 16
      %v2413 = vrot.slane %v2411, 3
      %v2414 = vshll.u32 %v2371, 16
      %v2416 = vrot.slane %v2414, 4
      %v2417 = vor.u32 %v2413, %v2416
      %v2418 = vsel %vm236, %v2409, %v2417
      %v2420 = vshrl.u32 %v2372, 16
      %v2422 = vrot.slane %v2420, 3
      %v2423 = vshll.u32 %v2372, 16
      %v2425 = vrot.slane %v2423, 4
      %v2426 = vor.u32 %v2422, %v2425
      %v2428 = vshrl.u32 %v2373, 16
      %v2430 = vrot.slane %v2428, 3
      %v2431 = vshll.u32 %v2373, 16
      %v2433 = vrot.slane %v2431, 4
      %v2434 = vor.u32 %v2430, %v2433
      %v2435 = vsel %vm236, %v2426, %v2434
      %v2437 = vshrl.u32 %v2374, 16
      %v2439 = vrot.slane %v2437, 3
      %v2440 = vshll.u32 %v2374, 16
      %v2442 = vrot.slane %v2440, 4
      %v2443 = vor.u32 %v2439, %v2442
      %v2445 = vshrl.u32 %v2375, 16
      %v2447 = vrot.slane %v2445, 3
      %v2448 = vshll.u32 %v2375, 16
      %v2450 = vrot.slane %v2448, 4
      %v2451 = vor.u32 %v2447, %v2450
      %v2452 = vsel %vm236, %v2443, %v2451
      %v2454 = vshrl.u32 %v2376, 16
      %v2456 = vrot.slane %v2454, 3
      %v2457 = vshll.u32 %v2376, 16
      %v2459 = vrot.slane %v2457, 4
      %v2460 = vor.u32 %v2456, %v2459
      %v2462 = vshrl.u32 %v2377, 16
      %v2464 = vrot.slane %v2462, 3
      %v2465 = vshll.u32 %v2377, 16
      %v2467 = vrot.slane %v2465, 4
      %v2468 = vor.u32 %v2464, %v2467
      %v2469 = vsel %vm236, %v2460, %v2468
      %v2471 = vshrl.u32 %v2378, 16
      %v2473 = vrot.slane %v2471, 3
      %v2474 = vshll.u32 %v2378, 16
      %v2476 = vrot.slane %v2474, 4
      %v2477 = vor.u32 %v2473, %v2476
      %v2479 = vshrl.u32 %v2379, 16
      %v2481 = vrot.slane %v2479, 3
      %v2482 = vshll.u32 %v2379, 16
      %v2484 = vrot.slane %v2482, 4
      %v2485 = vor.u32 %v2481, %v2484
      %v2486 = vsel %vm236, %v2477, %v2485
      %v2488 = vshrl.u32 %v2380, 16
      %v2490 = vrot.slane %v2488, 3
      %v2491 = vshll.u32 %v2380, 16
      %v2493 = vrot.slane %v2491, 4
      %v2494 = vor.u32 %v2490, %v2493
      %v2496 = vshrl.u32 %v2381, 16
      %v2498 = vrot.slane %v2496, 3
      %v2499 = vshll.u32 %v2381, 16
      %v2501 = vrot.slane %v2499, 4
      %v2502 = vor.u32 %v2498, %v2501
      %v2503 = vsel %vm236, %v2494, %v2502
      %v2505 = vshrl.u32 %v2382, 16
      %v2507 = vrot.slane %v2505, 3
      %v2508 = vshll.u32 %v2382, 16
      %v2510 = vrot.slane %v2508, 4
      %v2511 = vor.u32 %v2507, %v2510
      %v2513 = vshrl.u32 %v2383, 16
      %v2515 = vrot.slane %v2513, 3
      %v2516 = vshll.u32 %v2383, 16
      %v2518 = vrot.slane %v2516, 4
      %v2519 = vor.u32 %v2515, %v2518
      %v2520 = vsel %vm236, %v2511, %v2519
      %v2522 = vshrl.u32 %v2384, 16
      %v2524 = vrot.slane %v2522, 3
      %v2525 = vshll.u32 %v2384, 16
      %v2527 = vrot.slane %v2525, 4
      %v2528 = vor.u32 %v2524, %v2527
      %v2530 = vshrl.u32 %v2385, 16
      %v2532 = vrot.slane %v2530, 3
      %v2533 = vshll.u32 %v2385, 16
      %v2535 = vrot.slane %v2533, 4
      %v2536 = vor.u32 %v2532, %v2535
      %v2537 = vsel %vm236, %v2528, %v2536
      %v2539 = vshrl.u32 %v2386, 16
      %v2541 = vrot.slane %v2539, 3
      %v2542 = vshll.u32 %v2386, 16
      %v2544 = vrot.slane %v2542, 4
      %v2545 = vor.u32 %v2541, %v2544
      %v2547 = vshrl.u32 %v2387, 16
      %v2549 = vrot.slane %v2547, 3
      %v2550 = vshll.u32 %v2387, 16
      %v2552 = vrot.slane %v2550, 4
      %v2553 = vor.u32 %v2549, %v2552
      %v2554 = vsel %vm236, %v2545, %v2553
      %v2556 = vshrl.u32 %v2388, 16
      %v2558 = vrot.slane %v2556, 3
      %v2559 = vshll.u32 %v2388, 16
      %v2561 = vrot.slane %v2559, 4
      %v2562 = vor.u32 %v2558, %v2561
      %v2564 = vshrl.u32 %v2389, 16
      %v2566 = vrot.slane %v2564, 3
      %v2567 = vshll.u32 %v2389, 16
      %v2569 = vrot.slane %v2567, 4
      %v2570 = vor.u32 %v2566, %v2569
      %v2571 = vsel %vm236, %v2562, %v2570
      %v2573 = vshrl.u32 %v2390, 16
      %v2575 = vrot.slane %v2573, 3
      %v2576 = vshll.u32 %v2390, 16
      %v2578 = vrot.slane %v2576, 4
      %v2579 = vor.u32 %v2575, %v2578
      %v2581 = vshrl.u32 %v2391, 16
      %v2583 = vrot.slane %v2581, 3
      %v2584 = vshll.u32 %v2391, 16
      %v2586 = vrot.slane %v2584, 4
      %v2587 = vor.u32 %v2583, %v2586
      %v2588 = vsel %vm236, %v2579, %v2587
      %v2590 = vshrl.u32 %v2392, 16
      %v2592 = vrot.slane %v2590, 3
      %v2593 = vshll.u32 %v2392, 16
      %v2595 = vrot.slane %v2593, 4
      %v2596 = vor.u32 %v2592, %v2595
      %v2598 = vshrl.u32 %v2393, 16
      %v2600 = vrot.slane %v2598, 3
      %v2601 = vshll.u32 %v2393, 16
      %v2603 = vrot.slane %v2601, 4
      %v2604 = vor.u32 %v2600, %v2603
      %v2605 = vsel %vm236, %v2596, %v2604
      %v2607 = vshrl.u32 %v2394, 16
      %v2609 = vrot.slane %v2607, 3
      %v2610 = vshll.u32 %v2394, 16
      %v2612 = vrot.slane %v2610, 4
      %v2613 = vor.u32 %v2609, %v2612
      %v2615 = vshrl.u32 %v2395, 16
      %v2617 = vrot.slane %v2615, 3
      %v2618 = vshll.u32 %v2395, 16
      %v2620 = vrot.slane %v2618, 4
      %v2621 = vor.u32 %v2617, %v2620
      %v2622 = vsel %vm236, %v2613, %v2621
      %v2624 = vshrl.u32 %v2396, 16
      %v2626 = vrot.slane %v2624, 3
      %v2627 = vshll.u32 %v2396, 16
      %v2629 = vrot.slane %v2627, 4
      %v2630 = vor.u32 %v2626, %v2629
      %v2632 = vshrl.u32 %v2397, 16
      %v2634 = vrot.slane %v2632, 3
      %v2635 = vshll.u32 %v2397, 16
      %v2637 = vrot.slane %v2635, 4
      %v2638 = vor.u32 %v2634, %v2637
      %v2639 = vsel %vm236, %v2630, %v2638
      %v2641 = vshrl.u32 %v2398, 16
      %v2643 = vrot.slane %v2641, 3
      %v2644 = vshll.u32 %v2398, 16
      %v2646 = vrot.slane %v2644, 4
      %v2647 = vor.u32 %v2643, %v2646
      %v2649 = vshrl.u32 %v2399, 16
      %v2651 = vrot.slane %v2649, 3
      %v2652 = vshll.u32 %v2399, 16
      %v2654 = vrot.slane %v2652, 4
      %v2655 = vor.u32 %v2651, %v2654
      %v2656 = vsel %vm236, %v2647, %v2655
      %v2658 = vshrl.u32 %v2400, 16
      %v2660 = vrot.slane %v2658, 3
      %v2661 = vshll.u32 %v2400, 16
      %v2663 = vrot.slane %v2661, 4
      %v2664 = vor.u32 %v2660, %v2663
      %v2666 = vshrl.u32 %v2401, 16
      %v2668 = vrot.slane %v2666, 3
      %v2669 = vshll.u32 %v2401, 16
      %v2671 = vrot.slane %v2669, 4
      %v2672 = vor.u32 %v2668, %v2671
      %v2673 = vsel %vm236, %v2664, %v2672
      %2674 = vrot.lane.b32.xlu0 %v2418, 24
      %v2675 = vpop.permute.xlu0 %2674
      %2676 = vrot.lane.b32.xlu0 %v2435, 24
      %v2677 = vpop.permute.xlu0 %2676
      %2678 = vrot.lane.b32.xlu0 %v2452, 24
      %v2679 = vpop.permute.xlu0 %2678
      %2680 = vrot.lane.b32.xlu0 %v2469, 24
      %v2681 = vpop.permute.xlu0 %2680
      %2682 = vrot.lane.b32.xlu0 %v2486, 24
      %v2683 = vpop.permute.xlu0 %2682
      %2684 = vrot.lane.b32.xlu0 %v2503, 24
      %v2685 = vpop.permute.xlu0 %2684
      %2686 = vrot.lane.b32.xlu0 %v2520, 24
      %v2687 = vpop.permute.xlu0 %2686
      %2688 = vrot.lane.b32.xlu0 %v2537, 24
      %v2689 = vpop.permute.xlu0 %2688
      %2690 = vrot.lane.b32.xlu0 %v2554, 24
      %v2691 = vpop.permute.xlu0 %2690
      %2692 = vrot.lane.b32.xlu0 %v2571, 24
      %v2693 = vpop.permute.xlu0 %2692
      %2694 = vrot.lane.b32.xlu0 %v2588, 24
      %v2695 = vpop.permute.xlu0 %2694
      %2696 = vrot.lane.b32.xlu0 %v2605, 24
      %v2697 = vpop.permute.xlu0 %2696
      %2698 = vrot.lane.b32.xlu0 %v2622, 24
      %v2699 = vpop.permute.xlu0 %2698
      %2700 = vrot.lane.b32.xlu0 %v2639, 24
      %v2701 = vpop.permute.xlu0 %2700
      %2702 = vrot.lane.b32.xlu0 %v2656, 24
      %v2703 = vpop.permute.xlu0 %2702
      %2704 = vrot.lane.b32.xlu0 %v2673, 24
      %v2705 = vpop.permute.xlu0 %2704
      %vm2722 = vcmask 228544
      %2723 = vst.msk [vmem:[#allocation4] sm:$0xff] %vm2722, %v2675
      %2724 = vst.msk [vmem:[#allocation4 + $0x8] sm:$0xff] %vm2722, %v2677
      %2725 = vst.msk [vmem:[#allocation4 + $0x10] sm:$0xff] %vm2722, %v2679
      %2726 = vst.msk [vmem:[#allocation4 + $0x18] sm:$0xff] %vm2722, %v2681
      %2727 = vst.msk [vmem:[#allocation4 + $0x20] sm:$0xff] %vm2722, %v2683
      %2728 = vst.msk [vmem:[#allocation4 + $0x28] sm:$0xff] %vm2722, %v2685
      %2729 = vst.msk [vmem:[#allocation4 + $0x30] sm:$0xff] %vm2722, %v2687
      %2730 = vst.msk [vmem:[#allocation4 + $0x38] sm:$0xff] %vm2722, %v2689
      %2731 = vst.msk [vmem:[#allocation4 + $0x40] sm:$0xff] %vm2722, %v2691
      %2732 = vst.msk [vmem:[#allocation4 + $0x48] sm:$0xff] %vm2722, %v2693
      %2733 = vst.msk [vmem:[#allocation4 + $0x50] sm:$0xff] %vm2722, %v2695
      %2734 = vst.msk [vmem:[#allocation4 + $0x58] sm:$0xff] %vm2722, %v2697
      %2735 = vst.msk [vmem:[#allocation4 + $0x60] sm:$0xff] %vm2722, %v2699
      %2736 = vst.msk [vmem:[#allocation4 + $0x68] sm:$0xff] %vm2722, %v2701
      %2737 = vst.msk [vmem:[#allocation4 + $0x70] sm:$0xff] %vm2722, %v2703
      %2738 = vst.msk [vmem:[#allocation4 + $0x78] sm:$0xff] %vm2722, %v2705
      %v2739 = vld [vmem:[%s2369] sm:$0xf0]
      %v2740 = vld [vmem:[%s2369 + $0x8] sm:$0xf]
      %v2741 = vld [vmem:[%s2369 + $0x10] sm:$0xf0]
      %v2742 = vld [vmem:[%s2369 + $0x18] sm:$0xf]
      %v2743 = vld [vmem:[%s2369 + $0x20] sm:$0xf0]
      %v2744 = vld [vmem:[%s2369 + $0x28] sm:$0xf]
      %v2745 = vld [vmem:[%s2369 + $0x30] sm:$0xf0]
      %v2746 = vld [vmem:[%s2369 + $0x38] sm:$0xf]
      %v2747 = vld [vmem:[%s2369 + $0x40] sm:$0xf0]
      %v2748 = vld [vmem:[%s2369 + $0x48] sm:$0xf]
      %v2749 = vld [vmem:[%s2369 + $0x50] sm:$0xf0]
      %v2750 = vld [vmem:[%s2369 + $0x58] sm:$0xf]
      %v2751 = vld [vmem:[%s2369 + $0x60] sm:$0xf0]
      %v2752 = vld [vmem:[%s2369 + $0x68] sm:$0xf]
      %v2753 = vld [vmem:[%s2369 + $0x70] sm:$0xf0]
      %v2754 = vld [vmem:[%s2369 + $0x78] sm:$0xf]
      %v2755 = vld [vmem:[%s2369 + $0x80] sm:$0xf0]
      %v2756 = vld [vmem:[%s2369 + $0x88] sm:$0xf]
      %v2757 = vld [vmem:[%s2369 + $0x90] sm:$0xf0]
      %v2758 = vld [vmem:[%s2369 + $0x98] sm:$0xf]
      %v2759 = vld [vmem:[%s2369 + $0xa0] sm:$0xf0]
      %v2760 = vld [vmem:[%s2369 + $0xa8] sm:$0xf]
      %v2761 = vld [vmem:[%s2369 + $0xb0] sm:$0xf0]
      %v2762 = vld [vmem:[%s2369 + $0xb8] sm:$0xf]
      %v2763 = vld [vmem:[%s2369 + $0xc0] sm:$0xf0]
      %v2764 = vld [vmem:[%s2369 + $0xc8] sm:$0xf]
      %v2765 = vld [vmem:[%s2369 + $0xd0] sm:$0xf0]
      %v2766 = vld [vmem:[%s2369 + $0xd8] sm:$0xf]
      %v2767 = vld [vmem:[%s2369 + $0xe0] sm:$0xf0]
      %v2768 = vld [vmem:[%s2369 + $0xe8] sm:$0xf]
      %v2769 = vld [vmem:[%s2369 + $0xf0] sm:$0xf0]
      %v2770 = vld [vmem:[%s2369 + $0xf8] sm:$0xf]
      %v2803 = vrot.slane %v2739, 4
      %v2804 = vrot.slane %v2740, 4
      %v2805 = vsel %vm970, %v2803, %v2804
      %v2806 = vrot.slane %v2741, 4
      %v2807 = vrot.slane %v2742, 4
      %v2808 = vsel %vm970, %v2806, %v2807
      %v2809 = vrot.slane %v2743, 4
      %v2810 = vrot.slane %v2744, 4
      %v2811 = vsel %vm970, %v2809, %v2810
      %v2812 = vrot.slane %v2745, 4
      %v2813 = vrot.slane %v2746, 4
      %v2814 = vsel %vm970, %v2812, %v2813
      %v2815 = vrot.slane %v2747, 4
      %v2816 = vrot.slane %v2748, 4
      %v2817 = vsel %vm970, %v2815, %v2816
      %v2818 = vrot.slane %v2749, 4
      %v2819 = vrot.slane %v2750, 4
      %v2820 = vsel %vm970, %v2818, %v2819
      %v2821 = vrot.slane %v2751, 4
      %v2822 = vrot.slane %v2752, 4
      %v2823 = vsel %vm970, %v2821, %v2822
      %v2824 = vrot.slane %v2753, 4
      %v2825 = vrot.slane %v2754, 4
      %v2826 = vsel %vm970, %v2824, %v2825
      %v2827 = vrot.slane %v2755, 4
      %v2828 = vrot.slane %v2756, 4
      %v2829 = vsel %vm970, %v2827, %v2828
      %v2830 = vrot.slane %v2757, 4
      %v2831 = vrot.slane %v2758, 4
      %v2832 = vsel %vm970, %v2830, %v2831
      %v2833 = vrot.slane %v2759, 4
      %v2834 = vrot.slane %v2760, 4
      %v2835 = vsel %vm970, %v2833, %v2834
      %v2836 = vrot.slane %v2761, 4
      %v2837 = vrot.slane %v2762, 4
      %v2838 = vsel %vm970, %v2836, %v2837
      %v2839 = vrot.slane %v2763, 4
      %v2840 = vrot.slane %v2764, 4
      %v2841 = vsel %vm970, %v2839, %v2840
      %v2842 = vrot.slane %v2765, 4
      %v2843 = vrot.slane %v2766, 4
      %v2844 = vsel %vm970, %v2842, %v2843
      %v2845 = vrot.slane %v2767, 4
      %v2846 = vrot.slane %v2768, 4
      %v2847 = vsel %vm970, %v2845, %v2846
      %v2848 = vrot.slane %v2769, 4
      %v2849 = vrot.slane %v2770, 4
      %v2850 = vsel %vm970, %v2848, %v2849
      %2851 = vrot.lane.b32.xlu0 %v2805, 28
      %v2852 = vpop.permute.xlu0 %2851
      %2853 = vrot.lane.b32.xlu0 %v2808, 28
      %v2854 = vpop.permute.xlu0 %2853
      %2855 = vrot.lane.b32.xlu0 %v2811, 28
      %v2856 = vpop.permute.xlu0 %2855
      %2857 = vrot.lane.b32.xlu0 %v2814, 28
      %v2858 = vpop.permute.xlu0 %2857
      %2859 = vrot.lane.b32.xlu0 %v2817, 28
      %v2860 = vpop.permute.xlu0 %2859
      %2861 = vrot.lane.b32.xlu0 %v2820, 28
      %v2862 = vpop.permute.xlu0 %2861
      %2863 = vrot.lane.b32.xlu0 %v2823, 28
      %v2864 = vpop.permute.xlu0 %2863
      %2865 = vrot.lane.b32.xlu0 %v2826, 28
      %v2866 = vpop.permute.xlu0 %2865
      %2867 = vrot.lane.b32.xlu0 %v2829, 28
      %v2868 = vpop.permute.xlu0 %2867
      %2869 = vrot.lane.b32.xlu0 %v2832, 28
      %v2870 = vpop.permute.xlu0 %2869
      %2871 = vrot.lane.b32.xlu0 %v2835, 28
      %v2872 = vpop.permute.xlu0 %2871
      %2873 = vrot.lane.b32.xlu0 %v2838, 28
      %v2874 = vpop.permute.xlu0 %2873
      %2875 = vrot.lane.b32.xlu0 %v2841, 28
      %v2876 = vpop.permute.xlu0 %2875
      %2877 = vrot.lane.b32.xlu0 %v2844, 28
      %v2878 = vpop.permute.xlu0 %2877
      %2879 = vrot.lane.b32.xlu0 %v2847, 28
      %v2880 = vpop.permute.xlu0 %2879
      %2881 = vrot.lane.b32.xlu0 %v2850, 28
      %v2882 = vpop.permute.xlu0 %2881
      %vm2899 = vcmask 261344
      %2900 = vst.msk [vmem:[#allocation4] sm:$0xff] %vm2899, %v2852
      %2901 = vst.msk [vmem:[#allocation4 + $0x8] sm:$0xff] %vm2899, %v2854
      %2902 = vst.msk [vmem:[#allocation4 + $0x10] sm:$0xff] %vm2899, %v2856
      %2903 = vst.msk [vmem:[#allocation4 + $0x18] sm:$0xff] %vm2899, %v2858
      %2904 = vst.msk [vmem:[#allocation4 + $0x20] sm:$0xff] %vm2899, %v2860
      %2905 = vst.msk [vmem:[#allocation4 + $0x28] sm:$0xff] %vm2899, %v2862
      %2906 = vst.msk [vmem:[#allocation4 + $0x30] sm:$0xff] %vm2899, %v2864
      %2907 = vst.msk [vmem:[#allocation4 + $0x38] sm:$0xff] %vm2899, %v2866
      %2908 = vst.msk [vmem:[#allocation4 + $0x40] sm:$0xff] %vm2899, %v2868
      %2909 = vst.msk [vmem:[#allocation4 + $0x48] sm:$0xff] %vm2899, %v2870
      %2910 = vst.msk [vmem:[#allocation4 + $0x50] sm:$0xff] %vm2899, %v2872
      %2911 = vst.msk [vmem:[#allocation4 + $0x58] sm:$0xff] %vm2899, %v2874
      %2912 = vst.msk [vmem:[#allocation4 + $0x60] sm:$0xff] %vm2899, %v2876
      %2913 = vst.msk [vmem:[#allocation4 + $0x68] sm:$0xff] %vm2899, %v2878
      %2914 = vst.msk [vmem:[#allocation4 + $0x70] sm:$0xff] %vm2899, %v2880
      %2915 = vst.msk [vmem:[#allocation4 + $0x78] sm:$0xff] %vm2899, %v2882
      %v2916 = vld [vmem:[%s2369] sm:$0xf0]
      %v2917 = vld [vmem:[%s2369 + $0x8] sm:$0x1f]
      %v2918 = vld [vmem:[%s2369 + $0x10] sm:$0xf0]
      %v2919 = vld [vmem:[%s2369 + $0x18] sm:$0x1f]
      %v2920 = vld [vmem:[%s2369 + $0x20] sm:$0xf0]
      %v2921 = vld [vmem:[%s2369 + $0x28] sm:$0x1f]
      %v2922 = vld [vmem:[%s2369 + $0x30] sm:$0xf0]
      %v2923 = vld [vmem:[%s2369 + $0x38] sm:$0x1f]
      %v2924 = vld [vmem:[%s2369 + $0x40] sm:$0xf0]
      %v2925 = vld [vmem:[%s2369 + $0x48] sm:$0x1f]
      %v2926 = vld [vmem:[%s2369 + $0x50] sm:$0xf0]
      %v2927 = vld [vmem:[%s2369 + $0x58] sm:$0x1f]
      %v2928 = vld [vmem:[%s2369 + $0x60] sm:$0xf0]
      %v2929 = vld [vmem:[%s2369 + $0x68] sm:$0x1f]
      %v2930 = vld [vmem:[%s2369 + $0x70] sm:$0xf0]
      %v2931 = vld [vmem:[%s2369 + $0x78] sm:$0x1f]
      %v2932 = vld [vmem:[%s2369 + $0x80] sm:$0xf0]
      %v2933 = vld [vmem:[%s2369 + $0x88] sm:$0x1f]
      %v2934 = vld [vmem:[%s2369 + $0x90] sm:$0xf0]
      %v2935 = vld [vmem:[%s2369 + $0x98] sm:$0x1f]
      %v2936 = vld [vmem:[%s2369 + $0xa0] sm:$0xf0]
      %v2937 = vld [vmem:[%s2369 + $0xa8] sm:$0x1f]
      %v2938 = vld [vmem:[%s2369 + $0xb0] sm:$0xf0]
      %v2939 = vld [vmem:[%s2369 + $0xb8] sm:$0x1f]
      %v2940 = vld [vmem:[%s2369 + $0xc0] sm:$0xf0]
      %v2941 = vld [vmem:[%s2369 + $0xc8] sm:$0x1f]
      %v2942 = vld [vmem:[%s2369 + $0xd0] sm:$0xf0]
      %v2943 = vld [vmem:[%s2369 + $0xd8] sm:$0x1f]
      %v2944 = vld [vmem:[%s2369 + $0xe0] sm:$0xf0]
      %v2945 = vld [vmem:[%s2369 + $0xe8] sm:$0x1f]
      %v2946 = vld [vmem:[%s2369 + $0xf0] sm:$0xf0]
      %v2947 = vld [vmem:[%s2369 + $0xf8] sm:$0x1f]
      %v2949 = vshrl.u32 %v2916, 16
      %v2951 = vrot.slane %v2949, 4
      %v2952 = vshll.u32 %v2916, 16
      %v2954 = vrot.slane %v2952, 5
      %v2955 = vor.u32 %v2951, %v2954
      %v2957 = vshrl.u32 %v2917, 16
      %v2959 = vrot.slane %v2957, 4
      %v2960 = vshll.u32 %v2917, 16
      %v2962 = vrot.slane %v2960, 5
      %v2963 = vor.u32 %v2959, %v2962
      %v2964 = vsel %vm1116, %v2955, %v2963
      %v2966 = vshrl.u32 %v2918, 16
      %v2968 = vrot.slane %v2966, 4
      %v2969 = vshll.u32 %v2918, 16
      %v2971 = vrot.slane %v2969, 5
      %v2972 = vor.u32 %v2968, %v2971
      %v2974 = vshrl.u32 %v2919, 16
      %v2976 = vrot.slane %v2974, 4
      %v2977 = vshll.u32 %v2919, 16
      %v2979 = vrot.slane %v2977, 5
      %v2980 = vor.u32 %v2976, %v2979
      %v2981 = vsel %vm1116, %v2972, %v2980
      %v2983 = vshrl.u32 %v2920, 16
      %v2985 = vrot.slane %v2983, 4
      %v2986 = vshll.u32 %v2920, 16
      %v2988 = vrot.slane %v2986, 5
      %v2989 = vor.u32 %v2985, %v2988
      %v2991 = vshrl.u32 %v2921, 16
      %v2993 = vrot.slane %v2991, 4
      %v2994 = vshll.u32 %v2921, 16
      %v2996 = vrot.slane %v2994, 5
      %v2997 = vor.u32 %v2993, %v2996
      %v2998 = vsel %vm1116, %v2989, %v2997
      %v3000 = vshrl.u32 %v2922, 16
      %v3002 = vrot.slane %v3000, 4
      %v3003 = vshll.u32 %v2922, 16
      %v3005 = vrot.slane %v3003, 5
      %v3006 = vor.u32 %v3002, %v3005
      %v3008 = vshrl.u32 %v2923, 16
      %v3010 = vrot.slane %v3008, 4
      %v3011 = vshll.u32 %v2923, 16
      %v3013 = vrot.slane %v3011, 5
      %v3014 = vor.u32 %v3010, %v3013
      %v3015 = vsel %vm1116, %v3006, %v3014
      %v3017 = vshrl.u32 %v2924, 16
      %v3019 = vrot.slane %v3017, 4
      %v3020 = vshll.u32 %v2924, 16
      %v3022 = vrot.slane %v3020, 5
      %v3023 = vor.u32 %v3019, %v3022
      %v3025 = vshrl.u32 %v2925, 16
      %v3027 = vrot.slane %v3025, 4
      %v3028 = vshll.u32 %v2925, 16
      %v3030 = vrot.slane %v3028, 5
      %v3031 = vor.u32 %v3027, %v3030
      %v3032 = vsel %vm1116, %v3023, %v3031
      %v3034 = vshrl.u32 %v2926, 16
      %v3036 = vrot.slane %v3034, 4
      %v3037 = vshll.u32 %v2926, 16
      %v3039 = vrot.slane %v3037, 5
      %v3040 = vor.u32 %v3036, %v3039
      %v3042 = vshrl.u32 %v2927, 16
      %v3044 = vrot.slane %v3042, 4
      %v3045 = vshll.u32 %v2927, 16
      %v3047 = vrot.slane %v3045, 5
      %v3048 = vor.u32 %v3044, %v3047
      %v3049 = vsel %vm1116, %v3040, %v3048
      %v3051 = vshrl.u32 %v2928, 16
      %v3053 = vrot.slane %v3051, 4
      %v3054 = vshll.u32 %v2928, 16
      %v3056 = vrot.slane %v3054, 5
      %v3057 = vor.u32 %v3053, %v3056
      %v3059 = vshrl.u32 %v2929, 16
      %v3061 = vrot.slane %v3059, 4
      %v3062 = vshll.u32 %v2929, 16
      %v3064 = vrot.slane %v3062, 5
      %v3065 = vor.u32 %v3061, %v3064
      %v3066 = vsel %vm1116, %v3057, %v3065
      %v3068 = vshrl.u32 %v2930, 16
      %v3070 = vrot.slane %v3068, 4
      %v3071 = vshll.u32 %v2930, 16
      %v3073 = vrot.slane %v3071, 5
      %v3074 = vor.u32 %v3070, %v3073
      %v3076 = vshrl.u32 %v2931, 16
      %v3078 = vrot.slane %v3076, 4
      %v3079 = vshll.u32 %v2931, 16
      %v3081 = vrot.slane %v3079, 5
      %v3082 = vor.u32 %v3078, %v3081
      %v3083 = vsel %vm1116, %v3074, %v3082
      %v3085 = vshrl.u32 %v2932, 16
      %v3087 = vrot.slane %v3085, 4
      %v3088 = vshll.u32 %v2932, 16
      %v3090 = vrot.slane %v3088, 5
      %v3091 = vor.u32 %v3087, %v3090
      %v3093 = vshrl.u32 %v2933, 16
      %v3095 = vrot.slane %v3093, 4
      %v3096 = vshll.u32 %v2933, 16
      %v3098 = vrot.slane %v3096, 5
      %v3099 = vor.u32 %v3095, %v3098
      %v3100 = vsel %vm1116, %v3091, %v3099
      %v3102 = vshrl.u32 %v2934, 16
      %v3104 = vrot.slane %v3102, 4
      %v3105 = vshll.u32 %v2934, 16
      %v3107 = vrot.slane %v3105, 5
      %v3108 = vor.u32 %v3104, %v3107
      %v3110 = vshrl.u32 %v2935, 16
      %v3112 = vrot.slane %v3110, 4
      %v3113 = vshll.u32 %v2935, 16
      %v3115 = vrot.slane %v3113, 5
      %v3116 = vor.u32 %v3112, %v3115
      %v3117 = vsel %vm1116, %v3108, %v3116
      %v3119 = vshrl.u32 %v2936, 16
      %v3121 = vrot.slane %v3119, 4
      %v3122 = vshll.u32 %v2936, 16
      %v3124 = vrot.slane %v3122, 5
      %v3125 = vor.u32 %v3121, %v3124
      %v3127 = vshrl.u32 %v2937, 16
      %v3129 = vrot.slane %v3127, 4
      %v3130 = vshll.u32 %v2937, 16
      %v3132 = vrot.slane %v3130, 5
      %v3133 = vor.u32 %v3129, %v3132
      %v3134 = vsel %vm1116, %v3125, %v3133
      %v3136 = vshrl.u32 %v2938, 16
      %v3138 = vrot.slane %v3136, 4
      %v3139 = vshll.u32 %v2938, 16
      %v3141 = vrot.slane %v3139, 5
      %v3142 = vor.u32 %v3138, %v3141
      %v3144 = vshrl.u32 %v2939, 16
      %v3146 = vrot.slane %v3144, 4
      %v3147 = vshll.u32 %v2939, 16
      %v3149 = vrot.slane %v3147, 5
      %v3150 = vor.u32 %v3146, %v3149
      %v3151 = vsel %vm1116, %v3142, %v3150
      %v3153 = vshrl.u32 %v2940, 16
      %v3155 = vrot.slane %v3153, 4
      %v3156 = vshll.u32 %v2940, 16
      %v3158 = vrot.slane %v3156, 5
      %v3159 = vor.u32 %v3155, %v3158
      %v3161 = vshrl.u32 %v2941, 16
      %v3163 = vrot.slane %v3161, 4
      %v3164 = vshll.u32 %v2941, 16
      %v3166 = vrot.slane %v3164, 5
      %v3167 = vor.u32 %v3163, %v3166
      %v3168 = vsel %vm1116, %v3159, %v3167
      %v3170 = vshrl.u32 %v2942, 16
      %v3172 = vrot.slane %v3170, 4
      %v3173 = vshll.u32 %v2942, 16
      %v3175 = vrot.slane %v3173, 5
      %v3176 = vor.u32 %v3172, %v3175
      %v3178 = vshrl.u32 %v2943, 16
      %v3180 = vrot.slane %v3178, 4
      %v3181 = vshll.u32 %v2943, 16
      %v3183 = vrot.slane %v3181, 5
      %v3184 = vor.u32 %v3180, %v3183
      %v3185 = vsel %vm1116, %v3176, %v3184
      %v3187 = vshrl.u32 %v2944, 16
      %v3189 = vrot.slane %v3187, 4
      %v3190 = vshll.u32 %v2944, 16
      %v3192 = vrot.slane %v3190, 5
      %v3193 = vor.u32 %v3189, %v3192
      %v3195 = vshrl.u32 %v2945, 16
      %v3197 = vrot.slane %v3195, 4
      %v3198 = vshll.u32 %v2945, 16
      %v3200 = vrot.slane %v3198, 5
      %v3201 = vor.u32 %v3197, %v3200
      %v3202 = vsel %vm1116, %v3193, %v3201
      %v3204 = vshrl.u32 %v2946, 16
      %v3206 = vrot.slane %v3204, 4
      %v3207 = vshll.u32 %v2946, 16
      %v3209 = vrot.slane %v3207, 5
      %v3210 = vor.u32 %v3206, %v3209
      %v3212 = vshrl.u32 %v2947, 16
      %v3214 = vrot.slane %v3212, 4
      %v3215 = vshll.u32 %v2947, 16
      %v3217 = vrot.slane %v3215, 5
      %v3218 = vor.u32 %v3214, %v3217
      %v3219 = vsel %vm1116, %v3210, %v3218
      %3220 = vrot.lane.b32.xlu0 %v2964, 32
      %v3221 = vpop.permute.xlu0 %3220
      %3222 = vrot.lane.b32.xlu0 %v2981, 32
      %v3223 = vpop.permute.xlu0 %3222
      %3224 = vrot.lane.b32.xlu0 %v2998, 32
      %v3225 = vpop.permute.xlu0 %3224
      %3226 = vrot.lane.b32.xlu0 %v3015, 32
      %v3227 = vpop.permute.xlu0 %3226
      %3228 = vrot.lane.b32.xlu0 %v3032, 32
      %v3229 = vpop.permute.xlu0 %3228
      %3230 = vrot.lane.b32.xlu0 %v3049, 32
      %v3231 = vpop.permute.xlu0 %3230
      %3232 = vrot.lane.b32.xlu0 %v3066, 32
      %v3233 = vpop.permute.xlu0 %3232
      %3234 = vrot.lane.b32.xlu0 %v3083, 32
      %v3235 = vpop.permute.xlu0 %3234
      %3236 = vrot.lane.b32.xlu0 %v3100, 32
      %v3237 = vpop.permute.xlu0 %3236
      %3238 = vrot.lane.b32.xlu0 %v3117, 32
      %v3239 = vpop.permute.xlu0 %3238
      %3240 = vrot.lane.b32.xlu0 %v3134, 32
      %v3241 = vpop.permute.xlu0 %3240
      %3242 = vrot.lane.b32.xlu0 %v3151, 32
      %v3243 = vpop.permute.xlu0 %3242
      %3244 = vrot.lane.b32.xlu0 %v3168, 32
      %v3245 = vpop.permute.xlu0 %3244
      %3246 = vrot.lane.b32.xlu0 %v3185, 32
      %v3247 = vpop.permute.xlu0 %3246
      %3248 = vrot.lane.b32.xlu0 %v3202, 32
      %v3249 = vpop.permute.xlu0 %3248
      %3250 = vrot.lane.b32.xlu0 %v3219, 32
      %v3251 = vpop.permute.xlu0 %3250
      %vm3268 = vcmask 294144
      %3269 = vst.msk [vmem:[#allocation4] sm:$0xff] %vm3268, %v3221
      %3270 = vst.msk [vmem:[#allocation4 + $0x8] sm:$0xff] %vm3268, %v3223
      %3271 = vst.msk [vmem:[#allocation4 + $0x10] sm:$0xff] %vm3268, %v3225
      %3272 = vst.msk [vmem:[#allocation4 + $0x18] sm:$0xff] %vm3268, %v3227
      %3273 = vst.msk [vmem:[#allocation4 + $0x20] sm:$0xff] %vm3268, %v3229
      %3274 = vst.msk [vmem:[#allocation4 + $0x28] sm:$0xff] %vm3268, %v3231
      %3275 = vst.msk [vmem:[#allocation4 + $0x30] sm:$0xff] %vm3268, %v3233
      %3276 = vst.msk [vmem:[#allocation4 + $0x38] sm:$0xff] %vm3268, %v3235
      %3277 = vst.msk [vmem:[#allocation4 + $0x40] sm:$0xff] %vm3268, %v3237
      %3278 = vst.msk [vmem:[#allocation4 + $0x48] sm:$0xff] %vm3268, %v3239
      %3279 = vst.msk [vmem:[#allocation4 + $0x50] sm:$0xff] %vm3268, %v3241
      %3280 = vst.msk [vmem:[#allocation4 + $0x58] sm:$0xff] %vm3268, %v3243
      %3281 = vst.msk [vmem:[#allocation4 + $0x60] sm:$0xff] %vm3268, %v3245
      %3282 = vst.msk [vmem:[#allocation4 + $0x68] sm:$0xff] %vm3268, %v3247
      %3283 = vst.msk [vmem:[#allocation4 + $0x70] sm:$0xff] %vm3268, %v3249
      %3284 = vst.msk [vmem:[#allocation4 + $0x78] sm:$0xff] %vm3268, %v3251
      %v3285 = vld [vmem:[#allocation4] sm:$0xff]
      %v3286 = vld [vmem:[#allocation4 + $0x8] sm:$0xff]
      %v3287 = vld [vmem:[#allocation4 + $0x10] sm:$0xff]
      %v3288 = vld [vmem:[#allocation4 + $0x18] sm:$0xff]
      %v3289 = vld [vmem:[#allocation4 + $0x20] sm:$0xff]
      %v3290 = vld [vmem:[#allocation4 + $0x28] sm:$0xff]
      %v3291 = vld [vmem:[#allocation4 + $0x30] sm:$0xff]
      %v3292 = vld [vmem:[#allocation4 + $0x38] sm:$0xff]
      %v3293 = vld [vmem:[#allocation4 + $0x40] sm:$0xff]
      %v3294 = vld [vmem:[#allocation4 + $0x48] sm:$0xff]
      %v3295 = vld [vmem:[#allocation4 + $0x50] sm:$0xff]
      %v3296 = vld [vmem:[#allocation4 + $0x58] sm:$0xff]
      %v3297 = vld [vmem:[#allocation4 + $0x60] sm:$0xff]
      %v3298 = vld [vmem:[#allocation4 + $0x68] sm:$0xff]
      %v3299 = vld [vmem:[#allocation4 + $0x70] sm:$0xff]
      %v3300 = vld [vmem:[#allocation4 + $0x78] sm:$0xff]
      %v3302 = vlaneseq
      %v3303 = vshrl.u32 %v3302, 7
      %v3304 = vsub.s32 0, %v3303
      %v3305 = vrot.slane %v569, %v3304
      %v3323 = vunpack.c.l.b16 %v553
      %v3324 = vunpack.c.l.b16 %v554
      %v3325 = vunpack.c.l.b16 %v555
      %v3326 = vunpack.c.l.b16 %v556
      %v3327 = vunpack.c.l.b16 %v557
      %v3328 = vunpack.c.l.b16 %v558
      %v3329 = vunpack.c.l.b16 %v559
      %v3330 = vunpack.c.l.b16 %v560
      %v3331 = vunpack.c.l.b16 %v561
      %v3332 = vunpack.c.l.b16 %v562
      %v3333 = vunpack.c.l.b16 %v563
      %v3334 = vunpack.c.l.b16 %v564
      %v3335 = vunpack.c.l.b16 %v565
      %v3336 = vunpack.c.l.b16 %v566
      %v3337 = vunpack.c.l.b16 %v567
      %v3338 = vunpack.c.l.b16 %v568
      %v3339 = vpack.c.b16 %v3324, %v3323
      %v3340 = vpack.c.b16 %v3326, %v3325
      %v3341 = vpack.c.b16 %v3328, %v3327
      %v3342 = vpack.c.b16 %v3330, %v3329
      %v3343 = vpack.c.b16 %v3332, %v3331
      %v3344 = vpack.c.b16 %v3334, %v3333
      %v3345 = vpack.c.b16 %v3336, %v3335
      %v3346 = vpack.c.b16 %v3338, %v3337
      %3355 = vmatprep.subr.bf16.mxu0 0
      %3356 = vmatpush1.bf16.msra.mxu0 %v3339
      %3357 = vmatprep.subr.bf16.mxu0 0
      %3358 = vmatpush1.bf16.msra.mxu0 %v3340
      %3359 = vmatprep.subr.bf16.mxu0 0
      %3360 = vmatpush1.bf16.msra.mxu0 %v3341
      %3361 = vmatprep.subr.bf16.mxu0 0
      %3362 = vmatpush1.bf16.msra.mxu0 %v3342
      %3363 = vmatprep.subr.bf16.mxu0 0
      %3364 = vmatpush1.bf16.msra.mxu0 %v3343
      %3365 = vmatprep.subr.bf16.mxu0 0
      %3366 = vmatpush1.bf16.msra.mxu0 %v3344
      %3367 = vmatprep.subr.bf16.mxu0 0
      %3368 = vmatpush1.bf16.msra.mxu0 %v3345
      %3369 = vmatprep.subr.bf16.mxu0 0
      %3370 = vmatpush1.bf16.msra.mxu0 %v3346
      %3371 = vmatprep.subr.bf16.mxu0 0
      %3372 = vmatpush1.bf16.msra.mxu0 0
      %3373 = vmatprep.subr.bf16.mxu0 0
      %3374 = vmatpush1.bf16.msra.mxu0 0
      %3375 = vmatprep.subr.bf16.mxu0 0
      %3376 = vmatpush1.bf16.msra.mxu0 0
      %3377 = vmatprep.subr.bf16.mxu0 0
      %3378 = vmatpush1.bf16.msra.mxu0 0
      %3379 = vmatprep.subr.bf16.mxu0 0
      %3380 = vmatpush1.bf16.msra.mxu0 0
      %3381 = vmatprep.subr.bf16.mxu0 0
      %3382 = vmatpush1.bf16.msra.mxu0 0
      %3383 = vmatprep.subr.bf16.mxu0 0
      %3384 = vmatpush1.bf16.msra.mxu0 0
      %3385 = vmatprep.subr.bf16.mxu0 0
      %3386 = vmatpush1.bf16.msra.mxu0 0
      %3387 = vmatprep.mubr.bf16.mxu0 0
      %3388 = vmatmul.mubr.bf16.gmra.mrb[0].mxu0 %v3285
      %v3389 = vpop.f32.mrb[0].mxu0
      %v3390 = vadd.f32 %v3305, %v3389
      %v3391 = vpop.f32.mrb[0].mxu0
      %v3392 = vpop.f32.mrb[0].mxu0
      %v3393 = vadd.f32 %v3305, %v3392
      %v3394 = vpop.f32.mrb[0].mxu0
      %3395 = vmatprep.mubr.bf16.mxu0 0
      %3396 = vmatmul.mubr.bf16.gmra.mrb[0].mxu0 %v3286
      %v3397 = vpop.f32.mrb[0].mxu0
      %v3398 = vadd.f32 %v3305, %v3397
      %v3399 = vpop.f32.mrb[0].mxu0
      %v3400 = vpop.f32.mrb[0].mxu0
      %v3401 = vadd.f32 %v3305, %v3400
      %v3402 = vpop.f32.mrb[0].mxu0
      %3403 = vmatprep.mubr.bf16.mxu0 0
      %3404 = vmatmul.mubr.bf16.gmra.mrb[0].mxu0 %v3287
      %v3405 = vpop.f32.mrb[0].mxu0
      %v3406 = vadd.f32 %v3305, %v3405
      %v3407 = vpop.f32.mrb[0].mxu0
      %v3408 = vpop.f32.mrb[0].mxu0
      %v3409 = vadd.f32 %v3305, %v3408
      %v3410 = vpop.f32.mrb[0].mxu0
      %3411 = vmatprep.mubr.bf16.mxu0 0
      %3412 = vmatmul.mubr.bf16.gmra.mrb[0].mxu0 %v3288
      %v3413 = vpop.f32.mrb[0].mxu0
      %v3414 = vadd.f32 %v3305, %v3413
      %v3415 = vpop.f32.mrb[0].mxu0
      %v3416 = vpop.f32.mrb[0].mxu0
      %v3417 = vadd.f32 %v3305, %v3416
      %v3418 = vpop.f32.mrb[0].mxu0
      %3419 = vmatprep.mubr.bf16.mxu0 0
      %3420 = vmatmul.mubr.bf16.gmra.mrb[0].mxu0 %v3289
      %v3421 = vpop.f32.mrb[0].mxu0
      %v3422 = vadd.f32 %v3305, %v3421
      %v3423 = vpop.f32.mrb[0].mxu0
      %v3424 = vpop.f32.mrb[0].mxu0
      %v3425 = vadd.f32 %v3305, %v3424
      %v3426 = vpop.f32.mrb[0].mxu0
      %3427 = vmatprep.mubr.bf16.mxu0 0
      %3428 = vmatmul.mubr.bf16.gmra.mrb[0].mxu0 %v3290
      %v3429 = vpop.f32.mrb[0].mxu0
      %v3430 = vadd.f32 %v3305, %v3429
      %v3431 = vpop.f32.mrb[0].mxu0
      %v3432 = vpop.f32.mrb[0].mxu0
      %v3433 = vadd.f32 %v3305, %v3432
      %v3434 = vpop.f32.mrb[0].mxu0
      %3435 = vmatprep.mubr.bf16.mxu0 0
      %3436 = vmatmul.mubr.bf16.gmra.mrb[0].mxu0 %v3291
      %v3437 = vpop.f32.mrb[0].mxu0
      %v3438 = vadd.f32 %v3305, %v3437
      %v3439 = vpop.f32.mrb[0].mxu0
      %v3440 = vpop.f32.mrb[0].mxu0
      %v3441 = vadd.f32 %v3305, %v3440
      %v3442 = vpop.f32.mrb[0].mxu0
      %3443 = vmatprep.mubr.bf16.mxu0 0
      %3444 = vmatmul.mubr.bf16.gmra.mrb[0].mxu0 %v3292
      %v3445 = vpop.f32.mrb[0].mxu0
      %v3446 = vadd.f32 %v3305, %v3445
      %v3447 = vpop.f32.mrb[0].mxu0
      %v3448 = vpop.f32.mrb[0].mxu0
      %v3449 = vadd.f32 %v3305, %v3448
      %v3450 = vpop.f32.mrb[0].mxu0
      %3451 = vmatprep.mubr.bf16.mxu0 0
      %3452 = vmatmul.mubr.bf16.gmra.mrb[0].mxu0 %v3293
      %v3453 = vpop.f32.mrb[0].mxu0
      %v3454 = vadd.f32 %v3305, %v3453
      %v3455 = vpop.f32.mrb[0].mxu0
      %v3456 = vpop.f32.mrb[0].mxu0
      %v3457 = vadd.f32 %v3305, %v3456
      %v3458 = vpop.f32.mrb[0].mxu0
      %3459 = vmatprep.mubr.bf16.mxu0 0
      %3460 = vmatmul.mubr.bf16.gmra.mrb[0].mxu0 %v3294
      %v3461 = vpop.f32.mrb[0].mxu0
      %v3462 = vadd.f32 %v3305, %v3461
      %v3463 = vpop.f32.mrb[0].mxu0
      %v3464 = vpop.f32.mrb[0].mxu0
      %v3465 = vadd.f32 %v3305, %v3464
      %v3466 = vpop.f32.mrb[0].mxu0
      %3467 = vmatprep.mubr.bf16.mxu0 0
      %3468 = vmatmul.mubr.bf16.gmra.mrb[0].mxu0 %v3295
      %v3469 = vpop.f32.mrb[0].mxu0
      %v3470 = vadd.f32 %v3305, %v3469
      %v3471 = vpop.f32.mrb[0].mxu0
      %v3472 = vpop.f32.mrb[0].mxu0
      %v3473 = vadd.f32 %v3305, %v3472
      %v3474 = vpop.f32.mrb[0].mxu0
      %3475 = vmatprep.mubr.bf16.mxu0 0
      %3476 = vmatmul.mubr.bf16.gmra.mrb[0].mxu0 %v3296
      %v3477 = vpop.f32.mrb[0].mxu0
      %v3478 = vadd.f32 %v3305, %v3477
      %v3479 = vpop.f32.mrb[0].mxu0
      %v3480 = vpop.f32.mrb[0].mxu0
      %v3481 = vadd.f32 %v3305, %v3480
      %v3482 = vpop.f32.mrb[0].mxu0
      %3483 = vmatprep.mubr.bf16.mxu0 0
      %3484 = vmatmul.mubr.bf16.gmra.mrb[0].mxu0 %v3297
      %v3485 = vpop.f32.mrb[0].mxu0
      %v3486 = vadd.f32 %v3305, %v3485
      %v3487 = vpop.f32.mrb[0].mxu0
      %v3488 = vpop.f32.mrb[0].mxu0
      %v3489 = vadd.f32 %v3305, %v3488
      %v3490 = vpop.f32.mrb[0].mxu0
      %3491 = vmatprep.mubr.bf16.mxu0 0
      %3492 = vmatmul.mubr.bf16.gmra.mrb[0].mxu0 %v3298
      %v3493 = vpop.f32.mrb[0].mxu0
      %v3494 = vadd.f32 %v3305, %v3493
      %v3495 = vpop.f32.mrb[0].mxu0
      %v3496 = vpop.f32.mrb[0].mxu0
      %v3497 = vadd.f32 %v3305, %v3496
      %v3498 = vpop.f32.mrb[0].mxu0
      %3499 = vmatprep.mubr.bf16.mxu0 0
      %3500 = vmatmul.mubr.bf16.gmra.mrb[0].mxu0 %v3299
      %v3501 = vpop.f32.mrb[0].mxu0
      %v3502 = vadd.f32 %v3305, %v3501
      %v3503 = vpop.f32.mrb[0].mxu0
      %v3504 = vpop.f32.mrb[0].mxu0
      %v3505 = vadd.f32 %v3305, %v3504
      %v3506 = vpop.f32.mrb[0].mxu0
      %3507 = vmatprep.mubr.bf16.mxu0 0
      %3508 = vmatmul.mubr.bf16.gmra.mrb[0].mxu0 %v3300
      %v3509 = vpop.f32.mrb[0].mxu0
      %v3510 = vadd.f32 %v3305, %v3509
      %v3511 = vpop.f32.mrb[0].mxu0
      %v3512 = vpop.f32.mrb[0].mxu0
      %v3513 = vadd.f32 %v3305, %v3512
      %v3514 = vpop.f32.mrb[0].mxu0
      %3515 = vdwg.mxu0
      %v3516 = vpack.c.bf16 %v3393, %v3390
      %v3517 = vpack.c.bf16 %v3401, %v3398
      %v3518 = vpack.c.bf16 %v3409, %v3406
      %v3519 = vpack.c.bf16 %v3417, %v3414
      %v3520 = vpack.c.bf16 %v3425, %v3422
      %v3521 = vpack.c.bf16 %v3433, %v3430
      %v3522 = vpack.c.bf16 %v3441, %v3438
      %v3523 = vpack.c.bf16 %v3449, %v3446
      %v3524 = vpack.c.bf16 %v3457, %v3454
      %v3525 = vpack.c.bf16 %v3465, %v3462
      %v3526 = vpack.c.bf16 %v3473, %v3470
      %v3527 = vpack.c.bf16 %v3481, %v3478
      %v3528 = vpack.c.bf16 %v3489, %v3486
      %v3529 = vpack.c.bf16 %v3497, %v3494
      %v3530 = vpack.c.bf16 %v3505, %v3502
      %v3531 = vpack.c.bf16 %v3513, %v3510
      %v3548 = vrot.slane %v3516, 4
      %v3549 = vrot.slane %v3517, 4
      %v3550 = vrot.slane %v3518, 4
      %v3551 = vrot.slane %v3519, 4
      %v3552 = vrot.slane %v3520, 4
      %v3553 = vrot.slane %v3521, 4
      %v3554 = vrot.slane %v3522, 4
      %v3555 = vrot.slane %v3523, 4
      %v3556 = vrot.slane %v3524, 4
      %v3557 = vrot.slane %v3525, 4
      %v3558 = vrot.slane %v3526, 4
      %v3559 = vrot.slane %v3527, 4
      %v3560 = vrot.slane %v3528, 4
      %v3561 = vrot.slane %v3529, 4
      %v3562 = vrot.slane %v3530, 4
      %v3563 = vrot.slane %v3531, 4
      %s3580 = scalar_lea.vmem [#allocation3], 16
      %3581 = vst.msk [vmem:[%s3580] sm:$0xf0] %vm519, %v3548
      %3582 = vst.msk [vmem:[%s3580 + $0x8] sm:$0xf] %vm521, %v3548
      %3583 = vst.msk [vmem:[%s3580 + $0x10] sm:$0xf0] %vm519, %v3549
      %3584 = vst.msk [vmem:[%s3580 + $0x18] sm:$0xf] %vm521, %v3549
      %3585 = vst.msk [vmem:[%s3580 + $0x20] sm:$0xf0] %vm519, %v3550
      %3586 = vst.msk [vmem:[%s3580 + $0x28] sm:$0xf] %vm521, %v3550
      %3587 = vst.msk [vmem:[%s3580 + $0x30] sm:$0xf0] %vm519, %v3551
      %3588 = vst.msk [vmem:[%s3580 + $0x38] sm:$0xf] %vm521, %v3551
      %3589 = vst.msk [vmem:[%s3580 + $0x40] sm:$0xf0] %vm519, %v3552
      %3590 = vst.msk [vmem:[%s3580 + $0x48] sm:$0xf] %vm521, %v3552
      %3591 = vst.msk [vmem:[%s3580 + $0x50] sm:$0xf0] %vm519, %v3553
      %3592 = vst.msk [vmem:[%s3580 + $0x58] sm:$0xf] %vm521, %v3553
      %3593 = vst.msk [vmem:[%s3580 + $0x60] sm:$0xf0] %vm519, %v3554
      %3594 = vst.msk [vmem:[%s3580 + $0x68] sm:$0xf] %vm521, %v3554
      %3595 = vst.msk [vmem:[%s3580 + $0x70] sm:$0xf0] %vm519, %v3555
      %3596 = vst.msk [vmem:[%s3580 + $0x78] sm:$0xf] %vm521, %v3555
      %3597 = vst.msk [vmem:[%s3580 + $0x80] sm:$0xf0] %vm519, %v3556
      %3598 = vst.msk [vmem:[%s3580 + $0x88] sm:$0xf] %vm521, %v3556
      %3599 = vst.msk [vmem:[%s3580 + $0x90] sm:$0xf0] %vm519, %v3557
      %3600 = vst.msk [vmem:[%s3580 + $0x98] sm:$0xf] %vm521, %v3557
      %3601 = vst.msk [vmem:[%s3580 + $0xa0] sm:$0xf0] %vm519, %v3558
      %3602 = vst.msk [vmem:[%s3580 + $0xa8] sm:$0xf] %vm521, %v3558
      %3603 = vst.msk [vmem:[%s3580 + $0xb0] sm:$0xf0] %vm519, %v3559
      %3604 = vst.msk [vmem:[%s3580 + $0xb8] sm:$0xf] %vm521, %v3559
      %3605 = vst.msk [vmem:[%s3580 + $0xc0] sm:$0xf0] %vm519, %v3560
      %3606 = vst.msk [vmem:[%s3580 + $0xc8] sm:$0xf] %vm521, %v3560
      %3607 = vst.msk [vmem:[%s3580 + $0xd0] sm:$0xf0] %vm519, %v3561
      %3608 = vst.msk [vmem:[%s3580 + $0xd8] sm:$0xf] %vm521, %v3561
      %3609 = vst.msk [vmem:[%s3580 + $0xe0] sm:$0xf0] %vm519, %v3562
      %3610 = vst.msk [vmem:[%s3580 + $0xe8] sm:$0xf] %vm521, %v3562
      %3611 = vst.msk [vmem:[%s3580 + $0xf0] sm:$0xf0] %vm519, %v3563
      %3612 = vst.msk [vmem:[%s3580 + $0xf8] sm:$0xf] %vm521, %v3563
      %s3613 = scalar_lea.vmem %s1, 64
      %v3614 = vld [vmem:[%s3613] sm:$0xf]
      %v3615 = vld [vmem:[%s3613 + $0x4] sm:$0xf]
      %v3616 = vld [vmem:[%s3613 + $0x8] sm:$0xf]
      %v3617 = vld [vmem:[%s3613 + $0xc] sm:$0xf]
      %v3618 = vld [vmem:[%s3613 + $0x10] sm:$0xf]
      %v3619 = vld [vmem:[%s3613 + $0x14] sm:$0xf]
      %v3620 = vld [vmem:[%s3613 + $0x18] sm:$0xf]
      %v3621 = vld [vmem:[%s3613 + $0x1c] sm:$0xf]
      %v3622 = vld [vmem:[%s3613 + $0x20] sm:$0xf]
      %v3623 = vld [vmem:[%s3613 + $0x24] sm:$0xf]
      %v3624 = vld [vmem:[%s3613 + $0x28] sm:$0xf]
      %v3625 = vld [vmem:[%s3613 + $0x2c] sm:$0xf]
      %v3626 = vld [vmem:[%s3613 + $0x30] sm:$0xf]
      %v3627 = vld [vmem:[%s3613 + $0x34] sm:$0xf]
      %v3628 = vld [vmem:[%s3613 + $0x38] sm:$0xf]
      %v3629 = vld [vmem:[%s3613 + $0x3c] sm:$0xf]
      %s3630 = scalar_lea.vmem %s2, 1
      %v3631 = vld [vmem:[%s3630] sm:$0x1]
      %v3632 = vld [vmem:[#allocation3] sm:$0xf8]
      %v3633 = vld [vmem:[#allocation3 + $0x8] sm:$0xf]
      %v3634 = vld [vmem:[#allocation3 + $0x10] sm:$0xf8]
      %v3635 = vld [vmem:[#allocation3 + $0x18] sm:$0xf]
      %v3636 = vld [vmem:[#allocation3 + $0x20] sm:$0xf8]
      %v3637 = vld [vmem:[#allocation3 + $0x28] sm:$0xf]
      %v3638 = vld [vmem:[#allocation3 + $0x30] sm:$0xf8]
      %v3639 = vld [vmem:[#allocation3 + $0x38] sm:$0xf]
      %v3640 = vld [vmem:[#allocation3 + $0x40] sm:$0xf8]
      %v3641 = vld [vmem:[#allocation3 + $0x48] sm:$0xf]
      %v3642 = vld [vmem:[#allocation3 + $0x50] sm:$0xf8]
      %v3643 = vld [vmem:[#allocation3 + $0x58] sm:$0xf]
      %v3644 = vld [vmem:[#allocation3 + $0x60] sm:$0xf8]
      %v3645 = vld [vmem:[#allocation3 + $0x68] sm:$0xf]
      %v3646 = vld [vmem:[#allocation3 + $0x70] sm:$0xf8]
      %v3647 = vld [vmem:[#allocation3 + $0x78] sm:$0xf]
      %v3648 = vld [vmem:[#allocation3 + $0x80] sm:$0xf8]
      %v3649 = vld [vmem:[#allocation3 + $0x88] sm:$0xf]
      %v3650 = vld [vmem:[#allocation3 + $0x90] sm:$0xf8]
      %v3651 = vld [vmem:[#allocation3 + $0x98] sm:$0xf]
      %v3652 = vld [vmem:[#allocation3 + $0xa0] sm:$0xf8]
      %v3653 = vld [vmem:[#allocation3 + $0xa8] sm:$0xf]
      %v3654 = vld [vmem:[#allocation3 + $0xb0] sm:$0xf8]
      %v3655 = vld [vmem:[#allocation3 + $0xb8] sm:$0xf]
      %v3656 = vld [vmem:[#allocation3 + $0xc0] sm:$0xf8]
      %v3657 = vld [vmem:[#allocation3 + $0xc8] sm:$0xf]
      %v3658 = vld [vmem:[#allocation3 + $0xd0] sm:$0xf8]
      %v3659 = vld [vmem:[#allocation3 + $0xd8] sm:$0xf]
      %v3660 = vld [vmem:[#allocation3 + $0xe0] sm:$0xf8]
      %v3661 = vld [vmem:[#allocation3 + $0xe8] sm:$0xf]
      %v3662 = vld [vmem:[#allocation3 + $0xf0] sm:$0xf8]
      %v3663 = vld [vmem:[#allocation3 + $0xf8] sm:$0xf]
      %v3665 = vshrl.u32 %v3632, 16
      %v3667 = vrot.slane %v3665, 3
      %v3668 = vshll.u32 %v3632, 16
      %v3670 = vrot.slane %v3668, 4
      %v3671 = vor.u32 %v3667, %v3670
      %v3673 = vshrl.u32 %v3633, 16
      %v3675 = vrot.slane %v3673, 3
      %v3676 = vshll.u32 %v3633, 16
      %v3678 = vrot.slane %v3676, 4
      %v3679 = vor.u32 %v3675, %v3678
      %v3680 = vsel %vm236, %v3671, %v3679
      %v3682 = vshrl.u32 %v3634, 16
      %v3684 = vrot.slane %v3682, 3
      %v3685 = vshll.u32 %v3634, 16
      %v3687 = vrot.slane %v3685, 4
      %v3688 = vor.u32 %v3684, %v3687
      %v3690 = vshrl.u32 %v3635, 16
      %v3692 = vrot.slane %v3690, 3
      %v3693 = vshll.u32 %v3635, 16
      %v3695 = vrot.slane %v3693, 4
      %v3696 = vor.u32 %v3692, %v3695
      %v3697 = vsel %vm236, %v3688, %v3696
      %v3699 = vshrl.u32 %v3636, 16
      %v3701 = vrot.slane %v3699, 3
      %v3702 = vshll.u32 %v3636, 16
      %v3704 = vrot.slane %v3702, 4
      %v3705 = vor.u32 %v3701, %v3704
      %v3707 = vshrl.u32 %v3637, 16
      %v3709 = vrot.slane %v3707, 3
      %v3710 = vshll.u32 %v3637, 16
      %v3712 = vrot.slane %v3710, 4
      %v3713 = vor.u32 %v3709, %v3712
      %v3714 = vsel %vm236, %v3705, %v3713
      %v3716 = vshrl.u32 %v3638, 16
      %v3718 = vrot.slane %v3716, 3
      %v3719 = vshll.u32 %v3638, 16
      %v3721 = vrot.slane %v3719, 4
      %v3722 = vor.u32 %v3718, %v3721
      %v3724 = vshrl.u32 %v3639, 16
      %v3726 = vrot.slane %v3724, 3
      %v3727 = vshll.u32 %v3639, 16
      %v3729 = vrot.slane %v3727, 4
      %v3730 = vor.u32 %v3726, %v3729
      %v3731 = vsel %vm236, %v3722, %v3730
      %v3733 = vshrl.u32 %v3640, 16
      %v3735 = vrot.slane %v3733, 3
      %v3736 = vshll.u32 %v3640, 16
      %v3738 = vrot.slane %v3736, 4
      %v3739 = vor.u32 %v3735, %v3738
      %v3741 = vshrl.u32 %v3641, 16
      %v3743 = vrot.slane %v3741, 3
      %v3744 = vshll.u32 %v3641, 16
      %v3746 = vrot.slane %v3744, 4
      %v3747 = vor.u32 %v3743, %v3746
      %v3748 = vsel %vm236, %v3739, %v3747
      %v3750 = vshrl.u32 %v3642, 16
      %v3752 = vrot.slane %v3750, 3
      %v3753 = vshll.u32 %v3642, 16
      %v3755 = vrot.slane %v3753, 4
      %v3756 = vor.u32 %v3752, %v3755
      %v3758 = vshrl.u32 %v3643, 16
      %v3760 = vrot.slane %v3758, 3
      %v3761 = vshll.u32 %v3643, 16
      %v3763 = vrot.slane %v3761, 4
      %v3764 = vor.u32 %v3760, %v3763
      %v3765 = vsel %vm236, %v3756, %v3764
      %v3767 = vshrl.u32 %v3644, 16
      %v3769 = vrot.slane %v3767, 3
      %v3770 = vshll.u32 %v3644, 16
      %v3772 = vrot.slane %v3770, 4
      %v3773 = vor.u32 %v3769, %v3772
      %v3775 = vshrl.u32 %v3645, 16
      %v3777 = vrot.slane %v3775, 3
      %v3778 = vshll.u32 %v3645, 16
      %v3780 = vrot.slane %v3778, 4
      %v3781 = vor.u32 %v3777, %v3780
      %v3782 = vsel %vm236, %v3773, %v3781
      %v3784 = vshrl.u32 %v3646, 16
      %v3786 = vrot.slane %v3784, 3
      %v3787 = vshll.u32 %v3646, 16
      %v3789 = vrot.slane %v3787, 4
      %v3790 = vor.u32 %v3786, %v3789
      %v3792 = vshrl.u32 %v3647, 16
      %v3794 = vrot.slane %v3792, 3
      %v3795 = vshll.u32 %v3647, 16
      %v3797 = vrot.slane %v3795, 4
      %v3798 = vor.u32 %v3794, %v3797
      %v3799 = vsel %vm236, %v3790, %v3798
      %v3801 = vshrl.u32 %v3648, 16
      %v3803 = vrot.slane %v3801, 3
      %v3804 = vshll.u32 %v3648, 16
      %v3806 = vrot.slane %v3804, 4
      %v3807 = vor.u32 %v3803, %v3806
      %v3809 = vshrl.u32 %v3649, 16
      %v3811 = vrot.slane %v3809, 3
      %v3812 = vshll.u32 %v3649, 16
      %v3814 = vrot.slane %v3812, 4
      %v3815 = vor.u32 %v3811, %v3814
      %v3816 = vsel %vm236, %v3807, %v3815
      %v3818 = vshrl.u32 %v3650, 16
      %v3820 = vrot.slane %v3818, 3
      %v3821 = vshll.u32 %v3650, 16
      %v3823 = vrot.slane %v3821, 4
      %v3824 = vor.u32 %v3820, %v3823
      %v3826 = vshrl.u32 %v3651, 16
      %v3828 = vrot.slane %v3826, 3
      %v3829 = vshll.u32 %v3651, 16
      %v3831 = vrot.slane %v3829, 4
      %v3832 = vor.u32 %v3828, %v3831
      %v3833 = vsel %vm236, %v3824, %v3832
      %v3835 = vshrl.u32 %v3652, 16
      %v3837 = vrot.slane %v3835, 3
      %v3838 = vshll.u32 %v3652, 16
      %v3840 = vrot.slane %v3838, 4
      %v3841 = vor.u32 %v3837, %v3840
      %v3843 = vshrl.u32 %v3653, 16
      %v3845 = vrot.slane %v3843, 3
      %v3846 = vshll.u32 %v3653, 16
      %v3848 = vrot.slane %v3846, 4
      %v3849 = vor.u32 %v3845, %v3848
      %v3850 = vsel %vm236, %v3841, %v3849
      %v3852 = vshrl.u32 %v3654, 16
      %v3854 = vrot.slane %v3852, 3
      %v3855 = vshll.u32 %v3654, 16
      %v3857 = vrot.slane %v3855, 4
      %v3858 = vor.u32 %v3854, %v3857
      %v3860 = vshrl.u32 %v3655, 16
      %v3862 = vrot.slane %v3860, 3
      %v3863 = vshll.u32 %v3655, 16
      %v3865 = vrot.slane %v3863, 4
      %v3866 = vor.u32 %v3862, %v3865
      %v3867 = vsel %vm236, %v3858, %v3866
      %v3869 = vshrl.u32 %v3656, 16
      %v3871 = vrot.slane %v3869, 3
      %v3872 = vshll.u32 %v3656, 16
      %v3874 = vrot.slane %v3872, 4
      %v3875 = vor.u32 %v3871, %v3874
      %v3877 = vshrl.u32 %v3657, 16
      %v3879 = vrot.slane %v3877, 3
      %v3880 = vshll.u32 %v3657, 16
      %v3882 = vrot.slane %v3880, 4
      %v3883 = vor.u32 %v3879, %v3882
      %v3884 = vsel %vm236, %v3875, %v3883
      %v3886 = vshrl.u32 %v3658, 16
      %v3888 = vrot.slane %v3886, 3
      %v3889 = vshll.u32 %v3658, 16
      %v3891 = vrot.slane %v3889, 4
      %v3892 = vor.u32 %v3888, %v3891
      %v3894 = vshrl.u32 %v3659, 16
      %v3896 = vrot.slane %v3894, 3
      %v3897 = vshll.u32 %v3659, 16
      %v3899 = vrot.slane %v3897, 4
      %v3900 = vor.u32 %v3896, %v3899
      %v3901 = vsel %vm236, %v3892, %v3900
      %v3903 = vshrl.u32 %v3660, 16
      %v3905 = vrot.slane %v3903, 3
      %v3906 = vshll.u32 %v3660, 16
      %v3908 = vrot.slane %v3906, 4
      %v3909 = vor.u32 %v3905, %v3908
      %v3911 = vshrl.u32 %v3661, 16
      %v3913 = vrot.slane %v3911, 3
      %v3914 = vshll.u32 %v3661, 16
      %v3916 = vrot.slane %v3914, 4
      %v3917 = vor.u32 %v3913, %v3916
      %v3918 = vsel %vm236, %v3909, %v3917
      %v3920 = vshrl.u32 %v3662, 16
      %v3922 = vrot.slane %v3920, 3
      %v3923 = vshll.u32 %v3662, 16
      %v3925 = vrot.slane %v3923, 4
      %v3926 = vor.u32 %v3922, %v3925
      %v3928 = vshrl.u32 %v3663, 16
      %v3930 = vrot.slane %v3928, 3
      %v3931 = vshll.u32 %v3663, 16
      %v3933 = vrot.slane %v3931, 4
      %v3934 = vor.u32 %v3930, %v3933
      %v3935 = vsel %vm236, %v3926, %v3934
      %3952 = vst.msk [vmem:[#allocation4] sm:$0xff] %vm172, %v3680
      %3953 = vst.msk [vmem:[#allocation4 + $0x8] sm:$0xff] %vm172, %v3697
      %3954 = vst.msk [vmem:[#allocation4 + $0x10] sm:$0xff] %vm172, %v3714
      %3955 = vst.msk [vmem:[#allocation4 + $0x18] sm:$0xff] %vm172, %v3731
      %3956 = vst.msk [vmem:[#allocation4 + $0x20] sm:$0xff] %vm172, %v3748
      %3957 = vst.msk [vmem:[#allocation4 + $0x28] sm:$0xff] %vm172, %v3765
      %3958 = vst.msk [vmem:[#allocation4 + $0x30] sm:$0xff] %vm172, %v3782
      %3959 = vst.msk [vmem:[#allocation4 + $0x38] sm:$0xff] %vm172, %v3799
      %3960 = vst.msk [vmem:[#allocation4 + $0x40] sm:$0xff] %vm172, %v3816
      %3961 = vst.msk [vmem:[#allocation4 + $0x48] sm:$0xff] %vm172, %v3833
      %3962 = vst.msk [vmem:[#allocation4 + $0x50] sm:$0xff] %vm172, %v3850
      %3963 = vst.msk [vmem:[#allocation4 + $0x58] sm:$0xff] %vm172, %v3867
      %3964 = vst.msk [vmem:[#allocation4 + $0x60] sm:$0xff] %vm172, %v3884
      %3965 = vst.msk [vmem:[#allocation4 + $0x68] sm:$0xff] %vm172, %v3901
      %3966 = vst.msk [vmem:[#allocation4 + $0x70] sm:$0xff] %vm172, %v3918
      %3967 = vst.msk [vmem:[#allocation4 + $0x78] sm:$0xff] %vm172, %v3935
      %v3968 = vld [vmem:[#allocation3] sm:$0xf0]
      %v3969 = vld [vmem:[#allocation3 + $0x8] sm:$0xf]
      %v3970 = vld [vmem:[#allocation3 + $0x10] sm:$0xf0]
      %v3971 = vld [vmem:[#allocation3 + $0x18] sm:$0xf]
      %v3972 = vld [vmem:[#allocation3 + $0x20] sm:$0xf0]
      %v3973 = vld [vmem:[#allocation3 + $0x28] sm:$0xf]
      %v3974 = vld [vmem:[#allocation3 + $0x30] sm:$0xf0]
      %v3975 = vld [vmem:[#allocation3 + $0x38] sm:$0xf]
      %v3976 = vld [vmem:[#allocation3 + $0x40] sm:$0xf0]
      %v3977 = vld [vmem:[#allocation3 + $0x48] sm:$0xf]
      %v3978 = vld [vmem:[#allocation3 + $0x50] sm:$0xf0]
      %v3979 = vld [vmem:[#allocation3 + $0x58] sm:$0xf]
      %v3980 = vld [vmem:[#allocation3 + $0x60] sm:$0xf0]
      %v3981 = vld [vmem:[#allocation3 + $0x68] sm:$0xf]
      %v3982 = vld [vmem:[#allocation3 + $0x70] sm:$0xf0]
      %v3983 = vld [vmem:[#allocation3 + $0x78] sm:$0xf]
      %v3984 = vld [vmem:[#allocation3 + $0x80] sm:$0xf0]
      %v3985 = vld [vmem:[#allocation3 + $0x88] sm:$0xf]
      %v3986 = vld [vmem:[#allocation3 + $0x90] sm:$0xf0]
      %v3987 = vld [vmem:[#allocation3 + $0x98] sm:$0xf]
      %v3988 = vld [vmem:[#allocation3 + $0xa0] sm:$0xf0]
      %v3989 = vld [vmem:[#allocation3 + $0xa8] sm:$0xf]
      %v3990 = vld [vmem:[#allocation3 + $0xb0] sm:$0xf0]
      %v3991 = vld [vmem:[#allocation3 + $0xb8] sm:$0xf]
      %v3992 = vld [vmem:[#allocation3 + $0xc0] sm:$0xf0]
      %v3993 = vld [vmem:[#allocation3 + $0xc8] sm:$0xf]
      %v3994 = vld [vmem:[#allocation3 + $0xd0] sm:$0xf0]
      %v3995 = vld [vmem:[#allocation3 + $0xd8] sm:$0xf]
      %v3996 = vld [vmem:[#allocation3 + $0xe0] sm:$0xf0]
      %v3997 = vld [vmem:[#allocation3 + $0xe8] sm:$0xf]
      %v3998 = vld [vmem:[#allocation3 + $0xf0] sm:$0xf0]
      %v3999 = vld [vmem:[#allocation3 + $0xf8] sm:$0xf]
      %v4032 = vrot.slane %v3968, 4
      %v4033 = vrot.slane %v3969, 4
      %v4034 = vsel %vm970, %v4032, %v4033
      %v4035 = vrot.slane %v3970, 4
      %v4036 = vrot.slane %v3971, 4
      %v4037 = vsel %vm970, %v4035, %v4036
      %v4038 = vrot.slane %v3972, 4
      %v4039 = vrot.slane %v3973, 4
      %v4040 = vsel %vm970, %v4038, %v4039
      %v4041 = vrot.slane %v3974, 4
      %v4042 = vrot.slane %v3975, 4
      %v4043 = vsel %vm970, %v4041, %v4042
      %v4044 = vrot.slane %v3976, 4
      %v4045 = vrot.slane %v3977, 4
      %v4046 = vsel %vm970, %v4044, %v4045
      %v4047 = vrot.slane %v3978, 4
      %v4048 = vrot.slane %v3979, 4
      %v4049 = vsel %vm970, %v4047, %v4048
      %v4050 = vrot.slane %v3980, 4
      %v4051 = vrot.slane %v3981, 4
      %v4052 = vsel %vm970, %v4050, %v4051
      %v4053 = vrot.slane %v3982, 4
      %v4054 = vrot.slane %v3983, 4
      %v4055 = vsel %vm970, %v4053, %v4054
      %v4056 = vrot.slane %v3984, 4
      %v4057 = vrot.slane %v3985, 4
      %v4058 = vsel %vm970, %v4056, %v4057
      %v4059 = vrot.slane %v3986, 4
      %v4060 = vrot.slane %v3987, 4
      %v4061 = vsel %vm970, %v4059, %v4060
      %v4062 = vrot.slane %v3988, 4
      %v4063 = vrot.slane %v3989, 4
      %v4064 = vsel %vm970, %v4062, %v4063
      %v4065 = vrot.slane %v3990, 4
      %v4066 = vrot.slane %v3991, 4
      %v4067 = vsel %vm970, %v4065, %v4066
      %v4068 = vrot.slane %v3992, 4
      %v4069 = vrot.slane %v3993, 4
      %v4070 = vsel %vm970, %v4068, %v4069
      %v4071 = vrot.slane %v3994, 4
      %v4072 = vrot.slane %v3995, 4
      %v4073 = vsel %vm970, %v4071, %v4072
      %v4074 = vrot.slane %v3996, 4
      %v4075 = vrot.slane %v3997, 4
      %v4076 = vsel %vm970, %v4074, %v4075
      %v4077 = vrot.slane %v3998, 4
      %v4078 = vrot.slane %v3999, 4
      %v4079 = vsel %vm970, %v4077, %v4078
      %4080 = vrot.lane.b32.xlu0 %v4034, 4
      %v4081 = vpop.permute.xlu0 %4080
      %4082 = vrot.lane.b32.xlu0 %v4037, 4
      %v4083 = vpop.permute.xlu0 %4082
      %4084 = vrot.lane.b32.xlu0 %v4040, 4
      %v4085 = vpop.permute.xlu0 %4084
      %4086 = vrot.lane.b32.xlu0 %v4043, 4
      %v4087 = vpop.permute.xlu0 %4086
      %4088 = vrot.lane.b32.xlu0 %v4046, 4
      %v4089 = vpop.permute.xlu0 %4088
      %4090 = vrot.lane.b32.xlu0 %v4049, 4
      %v4091 = vpop.permute.xlu0 %4090
      %4092 = vrot.lane.b32.xlu0 %v4052, 4
      %v4093 = vpop.permute.xlu0 %4092
      %4094 = vrot.lane.b32.xlu0 %v4055, 4
      %v4095 = vpop.permute.xlu0 %4094
      %4096 = vrot.lane.b32.xlu0 %v4058, 4
      %v4097 = vpop.permute.xlu0 %4096
      %4098 = vrot.lane.b32.xlu0 %v4061, 4
      %v4099 = vpop.permute.xlu0 %4098
      %4100 = vrot.lane.b32.xlu0 %v4064, 4
      %v4101 = vpop.permute.xlu0 %4100
      %4102 = vrot.lane.b32.xlu0 %v4067, 4
      %v4103 = vpop.permute.xlu0 %4102
      %4104 = vrot.lane.b32.xlu0 %v4070, 4
      %v4105 = vpop.permute.xlu0 %4104
      %4106 = vrot.lane.b32.xlu0 %v4073, 4
      %v4107 = vpop.permute.xlu0 %4106
      %4108 = vrot.lane.b32.xlu0 %v4076, 4
      %v4109 = vpop.permute.xlu0 %4108
      %4110 = vrot.lane.b32.xlu0 %v4079, 4
      %v4111 = vpop.permute.xlu0 %4110
      %4128 = vst.msk [vmem:[#allocation4] sm:$0xff] %vm1067, %v4081
      %4129 = vst.msk [vmem:[#allocation4 + $0x8] sm:$0xff] %vm1067, %v4083
      %4130 = vst.msk [vmem:[#allocation4 + $0x10] sm:$0xff] %vm1067, %v4085
      %4131 = vst.msk [vmem:[#allocation4 + $0x18] sm:$0xff] %vm1067, %v4087
      %4132 = vst.msk [vmem:[#allocation4 + $0x20] sm:$0xff] %vm1067, %v4089
      %4133 = vst.msk [vmem:[#allocation4 + $0x28] sm:$0xff] %vm1067, %v4091
      %4134 = vst.msk [vmem:[#allocation4 + $0x30] sm:$0xff] %vm1067, %v4093
      %4135 = vst.msk [vmem:[#allocation4 + $0x38] sm:$0xff] %vm1067, %v4095
      %4136 = vst.msk [vmem:[#allocation4 + $0x40] sm:$0xff] %vm1067, %v4097
      %4137 = vst.msk [vmem:[#allocation4 + $0x48] sm:$0xff] %vm1067, %v4099
      %4138 = vst.msk [vmem:[#allocation4 + $0x50] sm:$0xff] %vm1067, %v4101
      %4139 = vst.msk [vmem:[#allocation4 + $0x58] sm:$0xff] %vm1067, %v4103
      %4140 = vst.msk [vmem:[#allocation4 + $0x60] sm:$0xff] %vm1067, %v4105
      %4141 = vst.msk [vmem:[#allocation4 + $0x68] sm:$0xff] %vm1067, %v4107
      %4142 = vst.msk [vmem:[#allocation4 + $0x70] sm:$0xff] %vm1067, %v4109
      %4143 = vst.msk [vmem:[#allocation4 + $0x78] sm:$0xff] %vm1067, %v4111
      %v4144 = vld [vmem:[#allocation3] sm:$0xf0]
      %v4145 = vld [vmem:[#allocation3 + $0x8] sm:$0x1f]
      %v4146 = vld [vmem:[#allocation3 + $0x10] sm:$0xf0]
      %v4147 = vld [vmem:[#allocation3 + $0x18] sm:$0x1f]
      %v4148 = vld [vmem:[#allocation3 + $0x20] sm:$0xf0]
      %v4149 = vld [vmem:[#allocation3 + $0x28] sm:$0x1f]
      %v4150 = vld [vmem:[#allocation3 + $0x30] sm:$0xf0]
      %v4151 = vld [vmem:[#allocation3 + $0x38] sm:$0x1f]
      %v4152 = vld [vmem:[#allocation3 + $0x40] sm:$0xf0]
      %v4153 = vld [vmem:[#allocation3 + $0x48] sm:$0x1f]
      %v4154 = vld [vmem:[#allocation3 + $0x50] sm:$0xf0]
      %v4155 = vld [vmem:[#allocation3 + $0x58] sm:$0x1f]
      %v4156 = vld [vmem:[#allocation3 + $0x60] sm:$0xf0]
      %v4157 = vld [vmem:[#allocation3 + $0x68] sm:$0x1f]
      %v4158 = vld [vmem:[#allocation3 + $0x70] sm:$0xf0]
      %v4159 = vld [vmem:[#allocation3 + $0x78] sm:$0x1f]
      %v4160 = vld [vmem:[#allocation3 + $0x80] sm:$0xf0]
      %v4161 = vld [vmem:[#allocation3 + $0x88] sm:$0x1f]
      %v4162 = vld [vmem:[#allocation3 + $0x90] sm:$0xf0]
      %v4163 = vld [vmem:[#allocation3 + $0x98] sm:$0x1f]
      %v4164 = vld [vmem:[#allocation3 + $0xa0] sm:$0xf0]
      %v4165 = vld [vmem:[#allocation3 + $0xa8] sm:$0x1f]
      %v4166 = vld [vmem:[#allocation3 + $0xb0] sm:$0xf0]
      %v4167 = vld [vmem:[#allocation3 + $0xb8] sm:$0x1f]
      %v4168 = vld [vmem:[#allocation3 + $0xc0] sm:$0xf0]
      %v4169 = vld [vmem:[#allocation3 + $0xc8] sm:$0x1f]
      %v4170 = vld [vmem:[#allocation3 + $0xd0] sm:$0xf0]
      %v4171 = vld [vmem:[#allocation3 + $0xd8] sm:$0x1f]
      %v4172 = vld [vmem:[#allocation3 + $0xe0] sm:$0xf0]
      %v4173 = vld [vmem:[#allocation3 + $0xe8] sm:$0x1f]
      %v4174 = vld [vmem:[#allocation3 + $0xf0] sm:$0xf0]
      %v4175 = vld [vmem:[#allocation3 + $0xf8] sm:$0x1f]
      %v4177 = vshrl.u32 %v4144, 16
      %v4179 = vrot.slane %v4177, 4
      %v4180 = vshll.u32 %v4144, 16
      %v4182 = vrot.slane %v4180, 5
      %v4183 = vor.u32 %v4179, %v4182
      %v4185 = vshrl.u32 %v4145, 16
      %v4187 = vrot.slane %v4185, 4
      %v4188 = vshll.u32 %v4145, 16
      %v4190 = vrot.slane %v4188, 5
      %v4191 = vor.u32 %v4187, %v4190
      %v4192 = vsel %vm1116, %v4183, %v4191
      %v4194 = vshrl.u32 %v4146, 16
      %v4196 = vrot.slane %v4194, 4
      %v4197 = vshll.u32 %v4146, 16
      %v4199 = vrot.slane %v4197, 5
      %v4200 = vor.u32 %v4196, %v4199
      %v4202 = vshrl.u32 %v4147, 16
      %v4204 = vrot.slane %v4202, 4
      %v4205 = vshll.u32 %v4147, 16
      %v4207 = vrot.slane %v4205, 5
      %v4208 = vor.u32 %v4204, %v4207
      %v4209 = vsel %vm1116, %v4200, %v4208
      %v4211 = vshrl.u32 %v4148, 16
      %v4213 = vrot.slane %v4211, 4
      %v4214 = vshll.u32 %v4148, 16
      %v4216 = vrot.slane %v4214, 5
      %v4217 = vor.u32 %v4213, %v4216
      %v4219 = vshrl.u32 %v4149, 16
      %v4221 = vrot.slane %v4219, 4
      %v4222 = vshll.u32 %v4149, 16
      %v4224 = vrot.slane %v4222, 5
      %v4225 = vor.u32 %v4221, %v4224
      %v4226 = vsel %vm1116, %v4217, %v4225
      %v4228 = vshrl.u32 %v4150, 16
      %v4230 = vrot.slane %v4228, 4
      %v4231 = vshll.u32 %v4150, 16
      %v4233 = vrot.slane %v4231, 5
      %v4234 = vor.u32 %v4230, %v4233
      %v4236 = vshrl.u32 %v4151, 16
      %v4238 = vrot.slane %v4236, 4
      %v4239 = vshll.u32 %v4151, 16
      %v4241 = vrot.slane %v4239, 5
      %v4242 = vor.u32 %v4238, %v4241
      %v4243 = vsel %vm1116, %v4234, %v4242
      %v4245 = vshrl.u32 %v4152, 16
      %v4247 = vrot.slane %v4245, 4
      %v4248 = vshll.u32 %v4152, 16
      %v4250 = vrot.slane %v4248, 5
      %v4251 = vor.u32 %v4247, %v4250
      %v4253 = vshrl.u32 %v4153, 16
      %v4255 = vrot.slane %v4253, 4
      %v4256 = vshll.u32 %v4153, 16
      %v4258 = vrot.slane %v4256, 5
      %v4259 = vor.u32 %v4255, %v4258
      %v4260 = vsel %vm1116, %v4251, %v4259
      %v4262 = vshrl.u32 %v4154, 16
      %v4264 = vrot.slane %v4262, 4
      %v4265 = vshll.u32 %v4154, 16
      %v4267 = vrot.slane %v4265, 5
      %v4268 = vor.u32 %v4264, %v4267
      %v4270 = vshrl.u32 %v4155, 16
      %v4272 = vrot.slane %v4270, 4
      %v4273 = vshll.u32 %v4155, 16
      %v4275 = vrot.slane %v4273, 5
      %v4276 = vor.u32 %v4272, %v4275
      %v4277 = vsel %vm1116, %v4268, %v4276
      %v4279 = vshrl.u32 %v4156, 16
      %v4281 = vrot.slane %v4279, 4
      %v4282 = vshll.u32 %v4156, 16
      %v4284 = vrot.slane %v4282, 5
      %v4285 = vor.u32 %v4281, %v4284
      %v4287 = vshrl.u32 %v4157, 16
      %v4289 = vrot.slane %v4287, 4
      %v4290 = vshll.u32 %v4157, 16
      %v4292 = vrot.slane %v4290, 5
      %v4293 = vor.u32 %v4289, %v4292
      %v4294 = vsel %vm1116, %v4285, %v4293
      %v4296 = vshrl.u32 %v4158, 16
      %v4298 = vrot.slane %v4296, 4
      %v4299 = vshll.u32 %v4158, 16
      %v4301 = vrot.slane %v4299, 5
      %v4302 = vor.u32 %v4298, %v4301
      %v4304 = vshrl.u32 %v4159, 16
      %v4306 = vrot.slane %v4304, 4
      %v4307 = vshll.u32 %v4159, 16
      %v4309 = vrot.slane %v4307, 5
      %v4310 = vor.u32 %v4306, %v4309
      %v4311 = vsel %vm1116, %v4302, %v4310
      %v4313 = vshrl.u32 %v4160, 16
      %v4315 = vrot.slane %v4313, 4
      %v4316 = vshll.u32 %v4160, 16
      %v4318 = vrot.slane %v4316, 5
      %v4319 = vor.u32 %v4315, %v4318
      %v4321 = vshrl.u32 %v4161, 16
      %v4323 = vrot.slane %v4321, 4
      %v4324 = vshll.u32 %v4161, 16
      %v4326 = vrot.slane %v4324, 5
      %v4327 = vor.u32 %v4323, %v4326
      %v4328 = vsel %vm1116, %v4319, %v4327
      %v4330 = vshrl.u32 %v4162, 16
      %v4332 = vrot.slane %v4330, 4
      %v4333 = vshll.u32 %v4162, 16
      %v4335 = vrot.slane %v4333, 5
      %v4336 = vor.u32 %v4332, %v4335
      %v4338 = vshrl.u32 %v4163, 16
      %v4340 = vrot.slane %v4338, 4
      %v4341 = vshll.u32 %v4163, 16
      %v4343 = vrot.slane %v4341, 5
      %v4344 = vor.u32 %v4340, %v4343
      %v4345 = vsel %vm1116, %v4336, %v4344
      %v4347 = vshrl.u32 %v4164, 16
      %v4349 = vrot.slane %v4347, 4
      %v4350 = vshll.u32 %v4164, 16
      %v4352 = vrot.slane %v4350, 5
      %v4353 = vor.u32 %v4349, %v4352
      %v4355 = vshrl.u32 %v4165, 16
      %v4357 = vrot.slane %v4355, 4
      %v4358 = vshll.u32 %v4165, 16
      %v4360 = vrot.slane %v4358, 5
      %v4361 = vor.u32 %v4357, %v4360
      %v4362 = vsel %vm1116, %v4353, %v4361
      %v4364 = vshrl.u32 %v4166, 16
      %v4366 = vrot.slane %v4364, 4
      %v4367 = vshll.u32 %v4166, 16
      %v4369 = vrot.slane %v4367, 5
      %v4370 = vor.u32 %v4366, %v4369
      %v4372 = vshrl.u32 %v4167, 16
      %v4374 = vrot.slane %v4372, 4
      %v4375 = vshll.u32 %v4167, 16
      %v4377 = vrot.slane %v4375, 5
      %v4378 = vor.u32 %v4374, %v4377
      %v4379 = vsel %vm1116, %v4370, %v4378
      %v4381 = vshrl.u32 %v4168, 16
      %v4383 = vrot.slane %v4381, 4
      %v4384 = vshll.u32 %v4168, 16
      %v4386 = vrot.slane %v4384, 5
      %v4387 = vor.u32 %v4383, %v4386
      %v4389 = vshrl.u32 %v4169, 16
      %v4391 = vrot.slane %v4389, 4
      %v4392 = vshll.u32 %v4169, 16
      %v4394 = vrot.slane %v4392, 5
      %v4395 = vor.u32 %v4391, %v4394
      %v4396 = vsel %vm1116, %v4387, %v4395
      %v4398 = vshrl.u32 %v4170, 16
      %v4400 = vrot.slane %v4398, 4
      %v4401 = vshll.u32 %v4170, 16
      %v4403 = vrot.slane %v4401, 5
      %v4404 = vor.u32 %v4400, %v4403
      %v4406 = vshrl.u32 %v4171, 16
      %v4408 = vrot.slane %v4406, 4
      %v4409 = vshll.u32 %v4171, 16
      %v4411 = vrot.slane %v4409, 5
      %v4412 = vor.u32 %v4408, %v4411
      %v4413 = vsel %vm1116, %v4404, %v4412
      %v4415 = vshrl.u32 %v4172, 16
      %v4417 = vrot.slane %v4415, 4
      %v4418 = vshll.u32 %v4172, 16
      %v4420 = vrot.slane %v4418, 5
      %v4421 = vor.u32 %v4417, %v4420
      %v4423 = vshrl.u32 %v4173, 16
      %v4425 = vrot.slane %v4423, 4
      %v4426 = vshll.u32 %v4173, 16
      %v4428 = vrot.slane %v4426, 5
      %v4429 = vor.u32 %v4425, %v4428
      %v4430 = vsel %vm1116, %v4421, %v4429
      %v4432 = vshrl.u32 %v4174, 16
      %v4434 = vrot.slane %v4432, 4
      %v4435 = vshll.u32 %v4174, 16
      %v4437 = vrot.slane %v4435, 5
      %v4438 = vor.u32 %v4434, %v4437
      %v4440 = vshrl.u32 %v4175, 16
      %v4442 = vrot.slane %v4440, 4
      %v4443 = vshll.u32 %v4175, 16
      %v4445 = vrot.slane %v4443, 5
      %v4446 = vor.u32 %v4442, %v4445
      %v4447 = vsel %vm1116, %v4438, %v4446
      %4448 = vrot.lane.b32.xlu0 %v4192, 8
      %v4449 = vpop.permute.xlu0 %4448
      %4450 = vrot.lane.b32.xlu0 %v4209, 8
      %v4451 = vpop.permute.xlu0 %4450
      %4452 = vrot.lane.b32.xlu0 %v4226, 8
      %v4453 = vpop.permute.xlu0 %4452
      %4454 = vrot.lane.b32.xlu0 %v4243, 8
      %v4455 = vpop.permute.xlu0 %4454
      %4456 = vrot.lane.b32.xlu0 %v4260, 8
      %v4457 = vpop.permute.xlu0 %4456
      %4458 = vrot.lane.b32.xlu0 %v4277, 8
      %v4459 = vpop.permute.xlu0 %4458
      %4460 = vrot.lane.b32.xlu0 %v4294, 8
      %v4461 = vpop.permute.xlu0 %4460
      %4462 = vrot.lane.b32.xlu0 %v4311, 8
      %v4463 = vpop.permute.xlu0 %4462
      %4464 = vrot.lane.b32.xlu0 %v4328, 8
      %v4465 = vpop.permute.xlu0 %4464
      %4466 = vrot.lane.b32.xlu0 %v4345, 8
      %v4467 = vpop.permute.xlu0 %4466
      %4468 = vrot.lane.b32.xlu0 %v4362, 8
      %v4469 = vpop.permute.xlu0 %4468
      %4470 = vrot.lane.b32.xlu0 %v4379, 8
      %v4471 = vpop.permute.xlu0 %4470
      %4472 = vrot.lane.b32.xlu0 %v4396, 8
      %v4473 = vpop.permute.xlu0 %4472
      %4474 = vrot.lane.b32.xlu0 %v4413, 8
      %v4475 = vpop.permute.xlu0 %4474
      %4476 = vrot.lane.b32.xlu0 %v4430, 8
      %v4477 = vpop.permute.xlu0 %4476
      %4478 = vrot.lane.b32.xlu0 %v4447, 8
      %v4479 = vpop.permute.xlu0 %4478
      %4496 = vst.msk [vmem:[#allocation4] sm:$0xff] %vm1437, %v4449
      %4497 = vst.msk [vmem:[#allocation4 + $0x8] sm:$0xff] %vm1437, %v4451
      %4498 = vst.msk [vmem:[#allocation4 + $0x10] sm:$0xff] %vm1437, %v4453
      %4499 = vst.msk [vmem:[#allocation4 + $0x18] sm:$0xff] %vm1437, %v4455
      %4500 = vst.msk [vmem:[#allocation4 + $0x20] sm:$0xff] %vm1437, %v4457
      %4501 = vst.msk [vmem:[#allocation4 + $0x28] sm:$0xff] %vm1437, %v4459
      %4502 = vst.msk [vmem:[#allocation4 + $0x30] sm:$0xff] %vm1437, %v4461
      %4503 = vst.msk [vmem:[#allocation4 + $0x38] sm:$0xff] %vm1437, %v4463
      %4504 = vst.msk [vmem:[#allocation4 + $0x40] sm:$0xff] %vm1437, %v4465
      %4505 = vst.msk [vmem:[#allocation4 + $0x48] sm:$0xff] %vm1437, %v4467
      %4506 = vst.msk [vmem:[#allocation4 + $0x50] sm:$0xff] %vm1437, %v4469
      %4507 = vst.msk [vmem:[#allocation4 + $0x58] sm:$0xff] %vm1437, %v4471
      %4508 = vst.msk [vmem:[#allocation4 + $0x60] sm:$0xff] %vm1437, %v4473
      %4509 = vst.msk [vmem:[#allocation4 + $0x68] sm:$0xff] %vm1437, %v4475
      %4510 = vst.msk [vmem:[#allocation4 + $0x70] sm:$0xff] %vm1437, %v4477
      %4511 = vst.msk [vmem:[#allocation4 + $0x78] sm:$0xff] %vm1437, %v4479
      %v4512 = vld [vmem:[%s3580] sm:$0xf8]
      %v4513 = vld [vmem:[%s3580 + $0x8] sm:$0xf]
      %v4514 = vld [vmem:[%s3580 + $0x10] sm:$0xf8]
      %v4515 = vld [vmem:[%s3580 + $0x18] sm:$0xf]
      %v4516 = vld [vmem:[%s3580 + $0x20] sm:$0xf8]
      %v4517 = vld [vmem:[%s3580 + $0x28] sm:$0xf]
      %v4518 = vld [vmem:[%s3580 + $0x30] sm:$0xf8]
      %v4519 = vld [vmem:[%s3580 + $0x38] sm:$0xf]
      %v4520 = vld [vmem:[%s3580 + $0x40] sm:$0xf8]
      %v4521 = vld [vmem:[%s3580 + $0x48] sm:$0xf]
      %v4522 = vld [vmem:[%s3580 + $0x50] sm:$0xf8]
      %v4523 = vld [vmem:[%s3580 + $0x58] sm:$0xf]
      %v4524 = vld [vmem:[%s3580 + $0x60] sm:$0xf8]
      %v4525 = vld [vmem:[%s3580 + $0x68] sm:$0xf]
      %v4526 = vld [vmem:[%s3580 + $0x70] sm:$0xf8]
      %v4527 = vld [vmem:[%s3580 + $0x78] sm:$0xf]
      %v4528 = vld [vmem:[%s3580 + $0x80] sm:$0xf8]
      %v4529 = vld [vmem:[%s3580 + $0x88] sm:$0xf]
      %v4530 = vld [vmem:[%s3580 + $0x90] sm:$0xf8]
      %v4531 = vld [vmem:[%s3580 + $0x98] sm:$0xf]
      %v4532 = vld [vmem:[%s3580 + $0xa0] sm:$0xf8]
      %v4533 = vld [vmem:[%s3580 + $0xa8] sm:$0xf]
      %v4534 = vld [vmem:[%s3580 + $0xb0] sm:$0xf8]
      %v4535 = vld [vmem:[%s3580 + $0xb8] sm:$0xf]
      %v4536 = vld [vmem:[%s3580 + $0xc0] sm:$0xf8]
      %v4537 = vld [vmem:[%s3580 + $0xc8] sm:$0xf]
      %v4538 = vld [vmem:[%s3580 + $0xd0] sm:$0xf8]
      %v4539 = vld [vmem:[%s3580 + $0xd8] sm:$0xf]
      %v4540 = vld [vmem:[%s3580 + $0xe0] sm:$0xf8]
      %v4541 = vld [vmem:[%s3580 + $0xe8] sm:$0xf]
      %v4542 = vld [vmem:[%s3580 + $0xf0] sm:$0xf8]
      %v4543 = vld [vmem:[%s3580 + $0xf8] sm:$0xf]
      %v4545 = vshrl.u32 %v4512, 16
      %v4547 = vrot.slane %v4545, 3
      %v4548 = vshll.u32 %v4512, 16
      %v4550 = vrot.slane %v4548, 4
      %v4551 = vor.u32 %v4547, %v4550
      %v4553 = vshrl.u32 %v4513, 16
      %v4555 = vrot.slane %v4553, 3
      %v4556 = vshll.u32 %v4513, 16
      %v4558 = vrot.slane %v4556, 4
      %v4559 = vor.u32 %v4555, %v4558
      %v4560 = vsel %vm236, %v4551, %v4559
      %v4562 = vshrl.u32 %v4514, 16
      %v4564 = vrot.slane %v4562, 3
      %v4565 = vshll.u32 %v4514, 16
      %v4567 = vrot.slane %v4565, 4
      %v4568 = vor.u32 %v4564, %v4567
      %v4570 = vshrl.u32 %v4515, 16
      %v4572 = vrot.slane %v4570, 3
      %v4573 = vshll.u32 %v4515, 16
      %v4575 = vrot.slane %v4573, 4
      %v4576 = vor.u32 %v4572, %v4575
      %v4577 = vsel %vm236, %v4568, %v4576
      %v4579 = vshrl.u32 %v4516, 16
      %v4581 = vrot.slane %v4579, 3
      %v4582 = vshll.u32 %v4516, 16
      %v4584 = vrot.slane %v4582, 4
      %v4585 = vor.u32 %v4581, %v4584
      %v4587 = vshrl.u32 %v4517, 16
      %v4589 = vrot.slane %v4587, 3
      %v4590 = vshll.u32 %v4517, 16
      %v4592 = vrot.slane %v4590, 4
      %v4593 = vor.u32 %v4589, %v4592
      %v4594 = vsel %vm236, %v4585, %v4593
      %v4596 = vshrl.u32 %v4518, 16
      %v4598 = vrot.slane %v4596, 3
      %v4599 = vshll.u32 %v4518, 16
      %v4601 = vrot.slane %v4599, 4
      %v4602 = vor.u32 %v4598, %v4601
      %v4604 = vshrl.u32 %v4519, 16
      %v4606 = vrot.slane %v4604, 3
      %v4607 = vshll.u32 %v4519, 16
      %v4609 = vrot.slane %v4607, 4
      %v4610 = vor.u32 %v4606, %v4609
      %v4611 = vsel %vm236, %v4602, %v4610
      %v4613 = vshrl.u32 %v4520, 16
      %v4615 = vrot.slane %v4613, 3
      %v4616 = vshll.u32 %v4520, 16
      %v4618 = vrot.slane %v4616, 4
      %v4619 = vor.u32 %v4615, %v4618
      %v4621 = vshrl.u32 %v4521, 16
      %v4623 = vrot.slane %v4621, 3
      %v4624 = vshll.u32 %v4521, 16
      %v4626 = vrot.slane %v4624, 4
      %v4627 = vor.u32 %v4623, %v4626
      %v4628 = vsel %vm236, %v4619, %v4627
      %v4630 = vshrl.u32 %v4522, 16
      %v4632 = vrot.slane %v4630, 3
      %v4633 = vshll.u32 %v4522, 16
      %v4635 = vrot.slane %v4633, 4
      %v4636 = vor.u32 %v4632, %v4635
      %v4638 = vshrl.u32 %v4523, 16
      %v4640 = vrot.slane %v4638, 3
      %v4641 = vshll.u32 %v4523, 16
      %v4643 = vrot.slane %v4641, 4
      %v4644 = vor.u32 %v4640, %v4643
      %v4645 = vsel %vm236, %v4636, %v4644
      %v4647 = vshrl.u32 %v4524, 16
      %v4649 = vrot.slane %v4647, 3
      %v4650 = vshll.u32 %v4524, 16
      %v4652 = vrot.slane %v4650, 4
      %v4653 = vor.u32 %v4649, %v4652
      %v4655 = vshrl.u32 %v4525, 16
      %v4657 = vrot.slane %v4655, 3
      %v4658 = vshll.u32 %v4525, 16
      %v4660 = vrot.slane %v4658, 4
      %v4661 = vor.u32 %v4657, %v4660
      %v4662 = vsel %vm236, %v4653, %v4661
      %v4664 = vshrl.u32 %v4526, 16
      %v4666 = vrot.slane %v4664, 3
      %v4667 = vshll.u32 %v4526, 16
      %v4669 = vrot.slane %v4667, 4
      %v4670 = vor.u32 %v4666, %v4669
      %v4672 = vshrl.u32 %v4527, 16
      %v4674 = vrot.slane %v4672, 3
      %v4675 = vshll.u32 %v4527, 16
      %v4677 = vrot.slane %v4675, 4
      %v4678 = vor.u32 %v4674, %v4677
      %v4679 = vsel %vm236, %v4670, %v4678
      %v4681 = vshrl.u32 %v4528, 16
      %v4683 = vrot.slane %v4681, 3
      %v4684 = vshll.u32 %v4528, 16
      %v4686 = vrot.slane %v4684, 4
      %v4687 = vor.u32 %v4683, %v4686
      %v4689 = vshrl.u32 %v4529, 16
      %v4691 = vrot.slane %v4689, 3
      %v4692 = vshll.u32 %v4529, 16
      %v4694 = vrot.slane %v4692, 4
      %v4695 = vor.u32 %v4691, %v4694
      %v4696 = vsel %vm236, %v4687, %v4695
      %v4698 = vshrl.u32 %v4530, 16
      %v4700 = vrot.slane %v4698, 3
      %v4701 = vshll.u32 %v4530, 16
      %v4703 = vrot.slane %v4701, 4
      %v4704 = vor.u32 %v4700, %v4703
      %v4706 = vshrl.u32 %v4531, 16
      %v4708 = vrot.slane %v4706, 3
      %v4709 = vshll.u32 %v4531, 16
      %v4711 = vrot.slane %v4709, 4
      %v4712 = vor.u32 %v4708, %v4711
      %v4713 = vsel %vm236, %v4704, %v4712
      %v4715 = vshrl.u32 %v4532, 16
      %v4717 = vrot.slane %v4715, 3
      %v4718 = vshll.u32 %v4532, 16
      %v4720 = vrot.slane %v4718, 4
      %v4721 = vor.u32 %v4717, %v4720
      %v4723 = vshrl.u32 %v4533, 16
      %v4725 = vrot.slane %v4723, 3
      %v4726 = vshll.u32 %v4533, 16
      %v4728 = vrot.slane %v4726, 4
      %v4729 = vor.u32 %v4725, %v4728
      %v4730 = vsel %vm236, %v4721, %v4729
      %v4732 = vshrl.u32 %v4534, 16
      %v4734 = vrot.slane %v4732, 3
      %v4735 = vshll.u32 %v4534, 16
      %v4737 = vrot.slane %v4735, 4
      %v4738 = vor.u32 %v4734, %v4737
      %v4740 = vshrl.u32 %v4535, 16
      %v4742 = vrot.slane %v4740, 3
      %v4743 = vshll.u32 %v4535, 16
      %v4745 = vrot.slane %v4743, 4
      %v4746 = vor.u32 %v4742, %v4745
      %v4747 = vsel %vm236, %v4738, %v4746
      %v4749 = vshrl.u32 %v4536, 16
      %v4751 = vrot.slane %v4749, 3
      %v4752 = vshll.u32 %v4536, 16
      %v4754 = vrot.slane %v4752, 4
      %v4755 = vor.u32 %v4751, %v4754
      %v4757 = vshrl.u32 %v4537, 16
      %v4759 = vrot.slane %v4757, 3
      %v4760 = vshll.u32 %v4537, 16
      %v4762 = vrot.slane %v4760, 4
      %v4763 = vor.u32 %v4759, %v4762
      %v4764 = vsel %vm236, %v4755, %v4763
      %v4766 = vshrl.u32 %v4538, 16
      %v4768 = vrot.slane %v4766, 3
      %v4769 = vshll.u32 %v4538, 16
      %v4771 = vrot.slane %v4769, 4
      %v4772 = vor.u32 %v4768, %v4771
      %v4774 = vshrl.u32 %v4539, 16
      %v4776 = vrot.slane %v4774, 3
      %v4777 = vshll.u32 %v4539, 16
      %v4779 = vrot.slane %v4777, 4
      %v4780 = vor.u32 %v4776, %v4779
      %v4781 = vsel %vm236, %v4772, %v4780
      %v4783 = vshrl.u32 %v4540, 16
      %v4785 = vrot.slane %v4783, 3
      %v4786 = vshll.u32 %v4540, 16
      %v4788 = vrot.slane %v4786, 4
      %v4789 = vor.u32 %v4785, %v4788
      %v4791 = vshrl.u32 %v4541, 16
      %v4793 = vrot.slane %v4791, 3
      %v4794 = vshll.u32 %v4541, 16
      %v4796 = vrot.slane %v4794, 4
      %v4797 = vor.u32 %v4793, %v4796
      %v4798 = vsel %vm236, %v4789, %v4797
      %v4800 = vshrl.u32 %v4542, 16
      %v4802 = vrot.slane %v4800, 3
      %v4803 = vshll.u32 %v4542, 16
      %v4805 = vrot.slane %v4803, 4
      %v4806 = vor.u32 %v4802, %v4805
      %v4808 = vshrl.u32 %v4543, 16
      %v4810 = vrot.slane %v4808, 3
      %v4811 = vshll.u32 %v4543, 16
      %v4813 = vrot.slane %v4811, 4
      %v4814 = vor.u32 %v4810, %v4813
      %v4815 = vsel %vm236, %v4806, %v4814
      %4816 = vrot.lane.b32.xlu0 %v4560, 12
      %v4817 = vpop.permute.xlu0 %4816
      %4818 = vrot.lane.b32.xlu0 %v4577, 12
      %v4819 = vpop.permute.xlu0 %4818
      %4820 = vrot.lane.b32.xlu0 %v4594, 12
      %v4821 = vpop.permute.xlu0 %4820
      %4822 = vrot.lane.b32.xlu0 %v4611, 12
      %v4823 = vpop.permute.xlu0 %4822
      %4824 = vrot.lane.b32.xlu0 %v4628, 12
      %v4825 = vpop.permute.xlu0 %4824
      %4826 = vrot.lane.b32.xlu0 %v4645, 12
      %v4827 = vpop.permute.xlu0 %4826
      %4828 = vrot.lane.b32.xlu0 %v4662, 12
      %v4829 = vpop.permute.xlu0 %4828
      %4830 = vrot.lane.b32.xlu0 %v4679, 12
      %v4831 = vpop.permute.xlu0 %4830
      %4832 = vrot.lane.b32.xlu0 %v4696, 12
      %v4833 = vpop.permute.xlu0 %4832
      %4834 = vrot.lane.b32.xlu0 %v4713, 12
      %v4835 = vpop.permute.xlu0 %4834
      %4836 = vrot.lane.b32.xlu0 %v4730, 12
      %v4837 = vpop.permute.xlu0 %4836
      %4838 = vrot.lane.b32.xlu0 %v4747, 12
      %v4839 = vpop.permute.xlu0 %4838
      %4840 = vrot.lane.b32.xlu0 %v4764, 12
      %v4841 = vpop.permute.xlu0 %4840
      %4842 = vrot.lane.b32.xlu0 %v4781, 12
      %v4843 = vpop.permute.xlu0 %4842
      %4844 = vrot.lane.b32.xlu0 %v4798, 12
      %v4845 = vpop.permute.xlu0 %4844
      %4846 = vrot.lane.b32.xlu0 %v4815, 12
      %v4847 = vpop.permute.xlu0 %4846
      %4864 = vst.msk [vmem:[#allocation4] sm:$0xff] %vm1806, %v4817
      %4865 = vst.msk [vmem:[#allocation4 + $0x8] sm:$0xff] %vm1806, %v4819
      %4866 = vst.msk [vmem:[#allocation4 + $0x10] sm:$0xff] %vm1806, %v4821
      %4867 = vst.msk [vmem:[#allocation4 + $0x18] sm:$0xff] %vm1806, %v4823
      %4868 = vst.msk [vmem:[#allocation4 + $0x20] sm:$0xff] %vm1806, %v4825
      %4869 = vst.msk [vmem:[#allocation4 + $0x28] sm:$0xff] %vm1806, %v4827
      %4870 = vst.msk [vmem:[#allocation4 + $0x30] sm:$0xff] %vm1806, %v4829
      %4871 = vst.msk [vmem:[#allocation4 + $0x38] sm:$0xff] %vm1806, %v4831
      %4872 = vst.msk [vmem:[#allocation4 + $0x40] sm:$0xff] %vm1806, %v4833
      %4873 = vst.msk [vmem:[#allocation4 + $0x48] sm:$0xff] %vm1806, %v4835
      %4874 = vst.msk [vmem:[#allocation4 + $0x50] sm:$0xff] %vm1806, %v4837
      %4875 = vst.msk [vmem:[#allocation4 + $0x58] sm:$0xff] %vm1806, %v4839
      %4876 = vst.msk [vmem:[#allocation4 + $0x60] sm:$0xff] %vm1806, %v4841
      %4877 = vst.msk [vmem:[#allocation4 + $0x68] sm:$0xff] %vm1806, %v4843
      %4878 = vst.msk [vmem:[#allocation4 + $0x70] sm:$0xff] %vm1806, %v4845
      %4879 = vst.msk [vmem:[#allocation4 + $0x78] sm:$0xff] %vm1806, %v4847
      %v4880 = vld [vmem:[%s3580] sm:$0xf0]
      %v4881 = vld [vmem:[%s3580 + $0x8] sm:$0xf]
      %v4882 = vld [vmem:[%s3580 + $0x10] sm:$0xf0]
      %v4883 = vld [vmem:[%s3580 + $0x18] sm:$0xf]
      %v4884 = vld [vmem:[%s3580 + $0x20] sm:$0xf0]
      %v4885 = vld [vmem:[%s3580 + $0x28] sm:$0xf]
      %v4886 = vld [vmem:[%s3580 + $0x30] sm:$0xf0]
      %v4887 = vld [vmem:[%s3580 + $0x38] sm:$0xf]
      %v4888 = vld [vmem:[%s3580 + $0x40] sm:$0xf0]
      %v4889 = vld [vmem:[%s3580 + $0x48] sm:$0xf]
      %v4890 = vld [vmem:[%s3580 + $0x50] sm:$0xf0]
      %v4891 = vld [vmem:[%s3580 + $0x58] sm:$0xf]
      %v4892 = vld [vmem:[%s3580 + $0x60] sm:$0xf0]
      %v4893 = vld [vmem:[%s3580 + $0x68] sm:$0xf]
      %v4894 = vld [vmem:[%s3580 + $0x70] sm:$0xf0]
      %v4895 = vld [vmem:[%s3580 + $0x78] sm:$0xf]
      %v4896 = vld [vmem:[%s3580 + $0x80] sm:$0xf0]
      %v4897 = vld [vmem:[%s3580 + $0x88] sm:$0xf]
      %v4898 = vld [vmem:[%s3580 + $0x90] sm:$0xf0]
      %v4899 = vld [vmem:[%s3580 + $0x98] sm:$0xf]
      %v4900 = vld [vmem:[%s3580 + $0xa0] sm:$0xf0]
      %v4901 = vld [vmem:[%s3580 + $0xa8] sm:$0xf]
      %v4902 = vld [vmem:[%s3580 + $0xb0] sm:$0xf0]
      %v4903 = vld [vmem:[%s3580 + $0xb8] sm:$0xf]
      %v4904 = vld [vmem:[%s3580 + $0xc0] sm:$0xf0]
      %v4905 = vld [vmem:[%s3580 + $0xc8] sm:$0xf]
      %v4906 = vld [vmem:[%s3580 + $0xd0] sm:$0xf0]
      %v4907 = vld [vmem:[%s3580 + $0xd8] sm:$0xf]
      %v4908 = vld [vmem:[%s3580 + $0xe0] sm:$0xf0]
      %v4909 = vld [vmem:[%s3580 + $0xe8] sm:$0xf]
      %v4910 = vld [vmem:[%s3580 + $0xf0] sm:$0xf0]
      %v4911 = vld [vmem:[%s3580 + $0xf8] sm:$0xf]
      %v4944 = vrot.slane %v4880, 4
      %v4945 = vrot.slane %v4881, 4
      %v4946 = vsel %vm970, %v4944, %v4945
      %v4947 = vrot.slane %v4882, 4
      %v4948 = vrot.slane %v4883, 4
      %v4949 = vsel %vm970, %v4947, %v4948
      %v4950 = vrot.slane %v4884, 4
      %v4951 = vrot.slane %v4885, 4
      %v4952 = vsel %vm970, %v4950, %v4951
      %v4953 = vrot.slane %v4886, 4
      %v4954 = vrot.slane %v4887, 4
      %v4955 = vsel %vm970, %v4953, %v4954
      %v4956 = vrot.slane %v4888, 4
      %v4957 = vrot.slane %v4889, 4
      %v4958 = vsel %vm970, %v4956, %v4957
      %v4959 = vrot.slane %v4890, 4
      %v4960 = vrot.slane %v4891, 4
      %v4961 = vsel %vm970, %v4959, %v4960
      %v4962 = vrot.slane %v4892, 4
      %v4963 = vrot.slane %v4893, 4
      %v4964 = vsel %vm970, %v4962, %v4963
      %v4965 = vrot.slane %v4894, 4
      %v4966 = vrot.slane %v4895, 4
      %v4967 = vsel %vm970, %v4965, %v4966
      %v4968 = vrot.slane %v4896, 4
      %v4969 = vrot.slane %v4897, 4
      %v4970 = vsel %vm970, %v4968, %v4969
      %v4971 = vrot.slane %v4898, 4
      %v4972 = vrot.slane %v4899, 4
      %v4973 = vsel %vm970, %v4971, %v4972
      %v4974 = vrot.slane %v4900, 4
      %v4975 = vrot.slane %v4901, 4
      %v4976 = vsel %vm970, %v4974, %v4975
      %v4977 = vrot.slane %v4902, 4
      %v4978 = vrot.slane %v4903, 4
      %v4979 = vsel %vm970, %v4977, %v4978
      %v4980 = vrot.slane %v4904, 4
      %v4981 = vrot.slane %v4905, 4
      %v4982 = vsel %vm970, %v4980, %v4981
      %v4983 = vrot.slane %v4906, 4
      %v4984 = vrot.slane %v4907, 4
      %v4985 = vsel %vm970, %v4983, %v4984
      %v4986 = vrot.slane %v4908, 4
      %v4987 = vrot.slane %v4909, 4
      %v4988 = vsel %vm970, %v4986, %v4987
      %v4989 = vrot.slane %v4910, 4
      %v4990 = vrot.slane %v4911, 4
      %v4991 = vsel %vm970, %v4989, %v4990
      %4992 = vrot.lane.b32.xlu0 %v4946, 16
      %v4993 = vpop.permute.xlu0 %4992
      %4994 = vrot.lane.b32.xlu0 %v4949, 16
      %v4995 = vpop.permute.xlu0 %4994
      %4996 = vrot.lane.b32.xlu0 %v4952, 16
      %v4997 = vpop.permute.xlu0 %4996
      %4998 = vrot.lane.b32.xlu0 %v4955, 16
      %v4999 = vpop.permute.xlu0 %4998
      %5000 = vrot.lane.b32.xlu0 %v4958, 16
      %v5001 = vpop.permute.xlu0 %5000
      %5002 = vrot.lane.b32.xlu0 %v4961, 16
      %v5003 = vpop.permute.xlu0 %5002
      %5004 = vrot.lane.b32.xlu0 %v4964, 16
      %v5005 = vpop.permute.xlu0 %5004
      %5006 = vrot.lane.b32.xlu0 %v4967, 16
      %v5007 = vpop.permute.xlu0 %5006
      %5008 = vrot.lane.b32.xlu0 %v4970, 16
      %v5009 = vpop.permute.xlu0 %5008
      %5010 = vrot.lane.b32.xlu0 %v4973, 16
      %v5011 = vpop.permute.xlu0 %5010
      %5012 = vrot.lane.b32.xlu0 %v4976, 16
      %v5013 = vpop.permute.xlu0 %5012
      %5014 = vrot.lane.b32.xlu0 %v4979, 16
      %v5015 = vpop.permute.xlu0 %5014
      %5016 = vrot.lane.b32.xlu0 %v4982, 16
      %v5017 = vpop.permute.xlu0 %5016
      %5018 = vrot.lane.b32.xlu0 %v4985, 16
      %v5019 = vpop.permute.xlu0 %5018
      %5020 = vrot.lane.b32.xlu0 %v4988, 16
      %v5021 = vpop.permute.xlu0 %5020
      %5022 = vrot.lane.b32.xlu0 %v4991, 16
      %v5023 = vpop.permute.xlu0 %5022
      %5040 = vst.msk [vmem:[#allocation4] sm:$0xff] %vm1983, %v4993
      %5041 = vst.msk [vmem:[#allocation4 + $0x8] sm:$0xff] %vm1983, %v4995
      %5042 = vst.msk [vmem:[#allocation4 + $0x10] sm:$0xff] %vm1983, %v4997
      %5043 = vst.msk [vmem:[#allocation4 + $0x18] sm:$0xff] %vm1983, %v4999
      %5044 = vst.msk [vmem:[#allocation4 + $0x20] sm:$0xff] %vm1983, %v5001
      %5045 = vst.msk [vmem:[#allocation4 + $0x28] sm:$0xff] %vm1983, %v5003
      %5046 = vst.msk [vmem:[#allocation4 + $0x30] sm:$0xff] %vm1983, %v5005
      %5047 = vst.msk [vmem:[#allocation4 + $0x38] sm:$0xff] %vm1983, %v5007
      %5048 = vst.msk [vmem:[#allocation4 + $0x40] sm:$0xff] %vm1983, %v5009
      %5049 = vst.msk [vmem:[#allocation4 + $0x48] sm:$0xff] %vm1983, %v5011
      %5050 = vst.msk [vmem:[#allocation4 + $0x50] sm:$0xff] %vm1983, %v5013
      %5051 = vst.msk [vmem:[#allocation4 + $0x58] sm:$0xff] %vm1983, %v5015
      %5052 = vst.msk [vmem:[#allocation4 + $0x60] sm:$0xff] %vm1983, %v5017
      %5053 = vst.msk [vmem:[#allocation4 + $0x68] sm:$0xff] %vm1983, %v5019
      %5054 = vst.msk [vmem:[#allocation4 + $0x70] sm:$0xff] %vm1983, %v5021
      %5055 = vst.msk [vmem:[#allocation4 + $0x78] sm:$0xff] %vm1983, %v5023
      %v5056 = vld [vmem:[%s3580] sm:$0xf0]
      %v5057 = vld [vmem:[%s3580 + $0x8] sm:$0x1f]
      %v5058 = vld [vmem:[%s3580 + $0x10] sm:$0xf0]
      %v5059 = vld [vmem:[%s3580 + $0x18] sm:$0x1f]
      %v5060 = vld [vmem:[%s3580 + $0x20] sm:$0xf0]
      %v5061 = vld [vmem:[%s3580 + $0x28] sm:$0x1f]
      %v5062 = vld [vmem:[%s3580 + $0x30] sm:$0xf0]
      %v5063 = vld [vmem:[%s3580 + $0x38] sm:$0x1f]
      %v5064 = vld [vmem:[%s3580 + $0x40] sm:$0xf0]
      %v5065 = vld [vmem:[%s3580 + $0x48] sm:$0x1f]
      %v5066 = vld [vmem:[%s3580 + $0x50] sm:$0xf0]
      %v5067 = vld [vmem:[%s3580 + $0x58] sm:$0x1f]
      %v5068 = vld [vmem:[%s3580 + $0x60] sm:$0xf0]
      %v5069 = vld [vmem:[%s3580 + $0x68] sm:$0x1f]
      %v5070 = vld [vmem:[%s3580 + $0x70] sm:$0xf0]
      %v5071 = vld [vmem:[%s3580 + $0x78] sm:$0x1f]
      %v5072 = vld [vmem:[%s3580 + $0x80] sm:$0xf0]
      %v5073 = vld [vmem:[%s3580 + $0x88] sm:$0x1f]
      %v5074 = vld [vmem:[%s3580 + $0x90] sm:$0xf0]
      %v5075 = vld [vmem:[%s3580 + $0x98] sm:$0x1f]
      %v5076 = vld [vmem:[%s3580 + $0xa0] sm:$0xf0]
      %v5077 = vld [vmem:[%s3580 + $0xa8] sm:$0x1f]
      %v5078 = vld [vmem:[%s3580 + $0xb0] sm:$0xf0]
      %v5079 = vld [vmem:[%s3580 + $0xb8] sm:$0x1f]
      %v5080 = vld [vmem:[%s3580 + $0xc0] sm:$0xf0]
      %v5081 = vld [vmem:[%s3580 + $0xc8] sm:$0x1f]
      %v5082 = vld [vmem:[%s3580 + $0xd0] sm:$0xf0]
      %v5083 = vld [vmem:[%s3580 + $0xd8] sm:$0x1f]
      %v5084 = vld [vmem:[%s3580 + $0xe0] sm:$0xf0]
      %v5085 = vld [vmem:[%s3580 + $0xe8] sm:$0x1f]
      %v5086 = vld [vmem:[%s3580 + $0xf0] sm:$0xf0]
      %v5087 = vld [vmem:[%s3580 + $0xf8] sm:$0x1f]
      %v5089 = vshrl.u32 %v5056, 16
      %v5091 = vrot.slane %v5089, 4
      %v5092 = vshll.u32 %v5056, 16
      %v5094 = vrot.slane %v5092, 5
      %v5095 = vor.u32 %v5091, %v5094
      %v5097 = vshrl.u32 %v5057, 16
      %v5099 = vrot.slane %v5097, 4
      %v5100 = vshll.u32 %v5057, 16
      %v5102 = vrot.slane %v5100, 5
      %v5103 = vor.u32 %v5099, %v5102
      %v5104 = vsel %vm1116, %v5095, %v5103
      %v5106 = vshrl.u32 %v5058, 16
      %v5108 = vrot.slane %v5106, 4
      %v5109 = vshll.u32 %v5058, 16
      %v5111 = vrot.slane %v5109, 5
      %v5112 = vor.u32 %v5108, %v5111
      %v5114 = vshrl.u32 %v5059, 16
      %v5116 = vrot.slane %v5114, 4
      %v5117 = vshll.u32 %v5059, 16
      %v5119 = vrot.slane %v5117, 5
      %v5120 = vor.u32 %v5116, %v5119
      %v5121 = vsel %vm1116, %v5112, %v5120
      %v5123 = vshrl.u32 %v5060, 16
      %v5125 = vrot.slane %v5123, 4
      %v5126 = vshll.u32 %v5060, 16
      %v5128 = vrot.slane %v5126, 5
      %v5129 = vor.u32 %v5125, %v5128
      %v5131 = vshrl.u32 %v5061, 16
      %v5133 = vrot.slane %v5131, 4
      %v5134 = vshll.u32 %v5061, 16
      %v5136 = vrot.slane %v5134, 5
      %v5137 = vor.u32 %v5133, %v5136
      %v5138 = vsel %vm1116, %v5129, %v5137
      %v5140 = vshrl.u32 %v5062, 16
      %v5142 = vrot.slane %v5140, 4
      %v5143 = vshll.u32 %v5062, 16
      %v5145 = vrot.slane %v5143, 5
      %v5146 = vor.u32 %v5142, %v5145
      %v5148 = vshrl.u32 %v5063, 16
      %v5150 = vrot.slane %v5148, 4
      %v5151 = vshll.u32 %v5063, 16
      %v5153 = vrot.slane %v5151, 5
      %v5154 = vor.u32 %v5150, %v5153
      %v5155 = vsel %vm1116, %v5146, %v5154
      %v5157 = vshrl.u32 %v5064, 16
      %v5159 = vrot.slane %v5157, 4
      %v5160 = vshll.u32 %v5064, 16
      %v5162 = vrot.slane %v5160, 5
      %v5163 = vor.u32 %v5159, %v5162
      %v5165 = vshrl.u32 %v5065, 16
      %v5167 = vrot.slane %v5165, 4
      %v5168 = vshll.u32 %v5065, 16
      %v5170 = vrot.slane %v5168, 5
      %v5171 = vor.u32 %v5167, %v5170
      %v5172 = vsel %vm1116, %v5163, %v5171
      %v5174 = vshrl.u32 %v5066, 16
      %v5176 = vrot.slane %v5174, 4
      %v5177 = vshll.u32 %v5066, 16
      %v5179 = vrot.slane %v5177, 5
      %v5180 = vor.u32 %v5176, %v5179
      %v5182 = vshrl.u32 %v5067, 16
      %v5184 = vrot.slane %v5182, 4
      %v5185 = vshll.u32 %v5067, 16
      %v5187 = vrot.slane %v5185, 5
      %v5188 = vor.u32 %v5184, %v5187
      %v5189 = vsel %vm1116, %v5180, %v5188
      %v5191 = vshrl.u32 %v5068, 16
      %v5193 = vrot.slane %v5191, 4
      %v5194 = vshll.u32 %v5068, 16
      %v5196 = vrot.slane %v5194, 5
      %v5197 = vor.u32 %v5193, %v5196
      %v5199 = vshrl.u32 %v5069, 16
      %v5201 = vrot.slane %v5199, 4
      %v5202 = vshll.u32 %v5069, 16
      %v5204 = vrot.slane %v5202, 5
      %v5205 = vor.u32 %v5201, %v5204
      %v5206 = vsel %vm1116, %v5197, %v5205
      %v5208 = vshrl.u32 %v5070, 16
      %v5210 = vrot.slane %v5208, 4
      %v5211 = vshll.u32 %v5070, 16
      %v5213 = vrot.slane %v5211, 5
      %v5214 = vor.u32 %v5210, %v5213
      %v5216 = vshrl.u32 %v5071, 16
      %v5218 = vrot.slane %v5216, 4
      %v5219 = vshll.u32 %v5071, 16
      %v5221 = vrot.slane %v5219, 5
      %v5222 = vor.u32 %v5218, %v5221
      %v5223 = vsel %vm1116, %v5214, %v5222
      %v5225 = vshrl.u32 %v5072, 16
      %v5227 = vrot.slane %v5225, 4
      %v5228 = vshll.u32 %v5072, 16
      %v5230 = vrot.slane %v5228, 5
      %v5231 = vor.u32 %v5227, %v5230
      %v5233 = vshrl.u32 %v5073, 16
      %v5235 = vrot.slane %v5233, 4
      %v5236 = vshll.u32 %v5073, 16
      %v5238 = vrot.slane %v5236, 5
      %v5239 = vor.u32 %v5235, %v5238
      %v5240 = vsel %vm1116, %v5231, %v5239
      %v5242 = vshrl.u32 %v5074, 16
      %v5244 = vrot.slane %v5242, 4
      %v5245 = vshll.u32 %v5074, 16
      %v5247 = vrot.slane %v5245, 5
      %v5248 = vor.u32 %v5244, %v5247
      %v5250 = vshrl.u32 %v5075, 16
      %v5252 = vrot.slane %v5250, 4
      %v5253 = vshll.u32 %v5075, 16
      %v5255 = vrot.slane %v5253, 5
      %v5256 = vor.u32 %v5252, %v5255
      %v5257 = vsel %vm1116, %v5248, %v5256
      %v5259 = vshrl.u32 %v5076, 16
      %v5261 = vrot.slane %v5259, 4
      %v5262 = vshll.u32 %v5076, 16
      %v5264 = vrot.slane %v5262, 5
      %v5265 = vor.u32 %v5261, %v5264
      %v5267 = vshrl.u32 %v5077, 16
      %v5269 = vrot.slane %v5267, 4
      %v5270 = vshll.u32 %v5077, 16
      %v5272 = vrot.slane %v5270, 5
      %v5273 = vor.u32 %v5269, %v5272
      %v5274 = vsel %vm1116, %v5265, %v5273
      %v5276 = vshrl.u32 %v5078, 16
      %v5278 = vrot.slane %v5276, 4
      %v5279 = vshll.u32 %v5078, 16
      %v5281 = vrot.slane %v5279, 5
      %v5282 = vor.u32 %v5278, %v5281
      %v5284 = vshrl.u32 %v5079, 16
      %v5286 = vrot.slane %v5284, 4
      %v5287 = vshll.u32 %v5079, 16
      %v5289 = vrot.slane %v5287, 5
      %v5290 = vor.u32 %v5286, %v5289
      %v5291 = vsel %vm1116, %v5282, %v5290
      %v5293 = vshrl.u32 %v5080, 16
      %v5295 = vrot.slane %v5293, 4
      %v5296 = vshll.u32 %v5080, 16
      %v5298 = vrot.slane %v5296, 5
      %v5299 = vor.u32 %v5295, %v5298
      %v5301 = vshrl.u32 %v5081, 16
      %v5303 = vrot.slane %v5301, 4
      %v5304 = vshll.u32 %v5081, 16
      %v5306 = vrot.slane %v5304, 5
      %v5307 = vor.u32 %v5303, %v5306
      %v5308 = vsel %vm1116, %v5299, %v5307
      %v5310 = vshrl.u32 %v5082, 16
      %v5312 = vrot.slane %v5310, 4
      %v5313 = vshll.u32 %v5082, 16
      %v5315 = vrot.slane %v5313, 5
      %v5316 = vor.u32 %v5312, %v5315
      %v5318 = vshrl.u32 %v5083, 16
      %v5320 = vrot.slane %v5318, 4
      %v5321 = vshll.u32 %v5083, 16
      %v5323 = vrot.slane %v5321, 5
      %v5324 = vor.u32 %v5320, %v5323
      %v5325 = vsel %vm1116, %v5316, %v5324
      %v5327 = vshrl.u32 %v5084, 16
      %v5329 = vrot.slane %v5327, 4
      %v5330 = vshll.u32 %v5084, 16
      %v5332 = vrot.slane %v5330, 5
      %v5333 = vor.u32 %v5329, %v5332
      %v5335 = vshrl.u32 %v5085, 16
      %v5337 = vrot.slane %v5335, 4
      %v5338 = vshll.u32 %v5085, 16
      %v5340 = vrot.slane %v5338, 5
      %v5341 = vor.u32 %v5337, %v5340
      %v5342 = vsel %vm1116, %v5333, %v5341
      %v5344 = vshrl.u32 %v5086, 16
      %v5346 = vrot.slane %v5344, 4
      %v5347 = vshll.u32 %v5086, 16
      %v5349 = vrot.slane %v5347, 5
      %v5350 = vor.u32 %v5346, %v5349
      %v5352 = vshrl.u32 %v5087, 16
      %v5354 = vrot.slane %v5352, 4
      %v5355 = vshll.u32 %v5087, 16
      %v5357 = vrot.slane %v5355, 5
      %v5358 = vor.u32 %v5354, %v5357
      %v5359 = vsel %vm1116, %v5350, %v5358
      %5360 = vrot.lane.b32.xlu0 %v5104, 20
      %v5361 = vpop.permute.xlu0 %5360
      %5362 = vrot.lane.b32.xlu0 %v5121, 20
      %v5363 = vpop.permute.xlu0 %5362
      %5364 = vrot.lane.b32.xlu0 %v5138, 20
      %v5365 = vpop.permute.xlu0 %5364
      %5366 = vrot.lane.b32.xlu0 %v5155, 20
      %v5367 = vpop.permute.xlu0 %5366
      %5368 = vrot.lane.b32.xlu0 %v5172, 20
      %v5369 = vpop.permute.xlu0 %5368
      %5370 = vrot.lane.b32.xlu0 %v5189, 20
      %v5371 = vpop.permute.xlu0 %5370
      %5372 = vrot.lane.b32.xlu0 %v5206, 20
      %v5373 = vpop.permute.xlu0 %5372
      %5374 = vrot.lane.b32.xlu0 %v5223, 20
      %v5375 = vpop.permute.xlu0 %5374
      %5376 = vrot.lane.b32.xlu0 %v5240, 20
      %v5377 = vpop.permute.xlu0 %5376
      %5378 = vrot.lane.b32.xlu0 %v5257, 20
      %v5379 = vpop.permute.xlu0 %5378
      %5380 = vrot.lane.b32.xlu0 %v5274, 20
      %v5381 = vpop.permute.xlu0 %5380
      %5382 = vrot.lane.b32.xlu0 %v5291, 20
      %v5383 = vpop.permute.xlu0 %5382
      %5384 = vrot.lane.b32.xlu0 %v5308, 20
      %v5385 = vpop.permute.xlu0 %5384
      %5386 = vrot.lane.b32.xlu0 %v5325, 20
      %v5387 = vpop.permute.xlu0 %5386
      %5388 = vrot.lane.b32.xlu0 %v5342, 20
      %v5389 = vpop.permute.xlu0 %5388
      %5390 = vrot.lane.b32.xlu0 %v5359, 20
      %v5391 = vpop.permute.xlu0 %5390
      %5408 = vst.msk [vmem:[#allocation4] sm:$0xff] %vm2352, %v5361
      %5409 = vst.msk [vmem:[#allocation4 + $0x8] sm:$0xff] %vm2352, %v5363
      %5410 = vst.msk [vmem:[#allocation4 + $0x10] sm:$0xff] %vm2352, %v5365
      %5411 = vst.msk [vmem:[#allocation4 + $0x18] sm:$0xff] %vm2352, %v5367
      %5412 = vst.msk [vmem:[#allocation4 + $0x20] sm:$0xff] %vm2352, %v5369
      %5413 = vst.msk [vmem:[#allocation4 + $0x28] sm:$0xff] %vm2352, %v5371
      %5414 = vst.msk [vmem:[#allocation4 + $0x30] sm:$0xff] %vm2352, %v5373
      %5415 = vst.msk [vmem:[#allocation4 + $0x38] sm:$0xff] %vm2352, %v5375
      %5416 = vst.msk [vmem:[#allocation4 + $0x40] sm:$0xff] %vm2352, %v5377
      %5417 = vst.msk [vmem:[#allocation4 + $0x48] sm:$0xff] %vm2352, %v5379
      %5418 = vst.msk [vmem:[#allocation4 + $0x50] sm:$0xff] %vm2352, %v5381
      %5419 = vst.msk [vmem:[#allocation4 + $0x58] sm:$0xff] %vm2352, %v5383
      %5420 = vst.msk [vmem:[#allocation4 + $0x60] sm:$0xff] %vm2352, %v5385
      %5421 = vst.msk [vmem:[#allocation4 + $0x68] sm:$0xff] %vm2352, %v5387
      %5422 = vst.msk [vmem:[#allocation4 + $0x70] sm:$0xff] %vm2352, %v5389
      %5423 = vst.msk [vmem:[#allocation4 + $0x78] sm:$0xff] %vm2352, %v5391
      %s5424 = scalar_lea.vmem [#allocation3], 32
      %v5425 = vld [vmem:[%s5424] sm:$0xf8]
      %v5426 = vld [vmem:[%s5424 + $0x8] sm:$0xf]
      %v5427 = vld [vmem:[%s5424 + $0x10] sm:$0xf8]
      %v5428 = vld [vmem:[%s5424 + $0x18] sm:$0xf]
      %v5429 = vld [vmem:[%s5424 + $0x20] sm:$0xf8]
      %v5430 = vld [vmem:[%s5424 + $0x28] sm:$0xf]
      %v5431 = vld [vmem:[%s5424 + $0x30] sm:$0xf8]
      %v5432 = vld [vmem:[%s5424 + $0x38] sm:$0xf]
      %v5433 = vld [vmem:[%s5424 + $0x40] sm:$0xf8]
      %v5434 = vld [vmem:[%s5424 + $0x48] sm:$0xf]
      %v5435 = vld [vmem:[%s5424 + $0x50] sm:$0xf8]
      %v5436 = vld [vmem:[%s5424 + $0x58] sm:$0xf]
      %v5437 = vld [vmem:[%s5424 + $0x60] sm:$0xf8]
      %v5438 = vld [vmem:[%s5424 + $0x68] sm:$0xf]
      %v5439 = vld [vmem:[%s5424 + $0x70] sm:$0xf8]
      %v5440 = vld [vmem:[%s5424 + $0x78] sm:$0xf]
      %v5441 = vld [vmem:[%s5424 + $0x80] sm:$0xf8]
      %v5442 = vld [vmem:[%s5424 + $0x88] sm:$0xf]
      %v5443 = vld [vmem:[%s5424 + $0x90] sm:$0xf8]
      %v5444 = vld [vmem:[%s5424 + $0x98] sm:$0xf]
      %v5445 = vld [vmem:[%s5424 + $0xa0] sm:$0xf8]
      %v5446 = vld [vmem:[%s5424 + $0xa8] sm:$0xf]
      %v5447 = vld [vmem:[%s5424 + $0xb0] sm:$0xf8]
      %v5448 = vld [vmem:[%s5424 + $0xb8] sm:$0xf]
      %v5449 = vld [vmem:[%s5424 + $0xc0] sm:$0xf8]
      %v5450 = vld [vmem:[%s5424 + $0xc8] sm:$0xf]
      %v5451 = vld [vmem:[%s5424 + $0xd0] sm:$0xf8]
      %v5452 = vld [vmem:[%s5424 + $0xd8] sm:$0xf]
      %v5453 = vld [vmem:[%s5424 + $0xe0] sm:$0xf8]
      %v5454 = vld [vmem:[%s5424 + $0xe8] sm:$0xf]
      %v5455 = vld [vmem:[%s5424 + $0xf0] sm:$0xf8]
      %v5456 = vld [vmem:[%s5424 + $0xf8] sm:$0xf]
      %v5458 = vshrl.u32 %v5425, 16
      %v5460 = vrot.slane %v5458, 3
      %v5461 = vshll.u32 %v5425, 16
      %v5463 = vrot.slane %v5461, 4
      %v5464 = vor.u32 %v5460, %v5463
      %v5466 = vshrl.u32 %v5426, 16
      %v5468 = vrot.slane %v5466, 3
      %v5469 = vshll.u32 %v5426, 16
      %v5471 = vrot.slane %v5469, 4
      %v5472 = vor.u32 %v5468, %v5471
      %v5473 = vsel %vm236, %v5464, %v5472
      %v5475 = vshrl.u32 %v5427, 16
      %v5477 = vrot.slane %v5475, 3
      %v5478 = vshll.u32 %v5427, 16
      %v5480 = vrot.slane %v5478, 4
      %v5481 = vor.u32 %v5477, %v5480
      %v5483 = vshrl.u32 %v5428, 16
      %v5485 = vrot.slane %v5483, 3
      %v5486 = vshll.u32 %v5428, 16
      %v5488 = vrot.slane %v5486, 4
      %v5489 = vor.u32 %v5485, %v5488
      %v5490 = vsel %vm236, %v5481, %v5489
      %v5492 = vshrl.u32 %v5429, 16
      %v5494 = vrot.slane %v5492, 3
      %v5495 = vshll.u32 %v5429, 16
      %v5497 = vrot.slane %v5495, 4
      %v5498 = vor.u32 %v5494, %v5497
      %v5500 = vshrl.u32 %v5430, 16
      %v5502 = vrot.slane %v5500, 3
      %v5503 = vshll.u32 %v5430, 16
      %v5505 = vrot.slane %v5503, 4
      %v5506 = vor.u32 %v5502, %v5505
      %v5507 = vsel %vm236, %v5498, %v5506
      %v5509 = vshrl.u32 %v5431, 16
      %v5511 = vrot.slane %v5509, 3
      %v5512 = vshll.u32 %v5431, 16
      %v5514 = vrot.slane %v5512, 4
      %v5515 = vor.u32 %v5511, %v5514
      %v5517 = vshrl.u32 %v5432, 16
      %v5519 = vrot.slane %v5517, 3
      %v5520 = vshll.u32 %v5432, 16
      %v5522 = vrot.slane %v5520, 4
      %v5523 = vor.u32 %v5519, %v5522
      %v5524 = vsel %vm236, %v5515, %v5523
      %v5526 = vshrl.u32 %v5433, 16
      %v5528 = vrot.slane %v5526, 3
      %v5529 = vshll.u32 %v5433, 16
      %v5531 = vrot.slane %v5529, 4
      %v5532 = vor.u32 %v5528, %v5531
      %v5534 = vshrl.u32 %v5434, 16
      %v5536 = vrot.slane %v5534, 3
      %v5537 = vshll.u32 %v5434, 16
      %v5539 = vrot.slane %v5537, 4
      %v5540 = vor.u32 %v5536, %v5539
      %v5541 = vsel %vm236, %v5532, %v5540
      %v5543 = vshrl.u32 %v5435, 16
      %v5545 = vrot.slane %v5543, 3
      %v5546 = vshll.u32 %v5435, 16
      %v5548 = vrot.slane %v5546, 4
      %v5549 = vor.u32 %v5545, %v5548
      %v5551 = vshrl.u32 %v5436, 16
      %v5553 = vrot.slane %v5551, 3
      %v5554 = vshll.u32 %v5436, 16
      %v5556 = vrot.slane %v5554, 4
      %v5557 = vor.u32 %v5553, %v5556
      %v5558 = vsel %vm236, %v5549, %v5557
      %v5560 = vshrl.u32 %v5437, 16
      %v5562 = vrot.slane %v5560, 3
      %v5563 = vshll.u32 %v5437, 16
      %v5565 = vrot.slane %v5563, 4
      %v5566 = vor.u32 %v5562, %v5565
      %v5568 = vshrl.u32 %v5438, 16
      %v5570 = vrot.slane %v5568, 3
      %v5571 = vshll.u32 %v5438, 16
      %v5573 = vrot.slane %v5571, 4
      %v5574 = vor.u32 %v5570, %v5573
      %v5575 = vsel %vm236, %v5566, %v5574
      %v5577 = vshrl.u32 %v5439, 16
      %v5579 = vrot.slane %v5577, 3
      %v5580 = vshll.u32 %v5439, 16
      %v5582 = vrot.slane %v5580, 4
      %v5583 = vor.u32 %v5579, %v5582
      %v5585 = vshrl.u32 %v5440, 16
      %v5587 = vrot.slane %v5585, 3
      %v5588 = vshll.u32 %v5440, 16
      %v5590 = vrot.slane %v5588, 4
      %v5591 = vor.u32 %v5587, %v5590
      %v5592 = vsel %vm236, %v5583, %v5591
      %v5594 = vshrl.u32 %v5441, 16
      %v5596 = vrot.slane %v5594, 3
      %v5597 = vshll.u32 %v5441, 16
      %v5599 = vrot.slane %v5597, 4
      %v5600 = vor.u32 %v5596, %v5599
      %v5602 = vshrl.u32 %v5442, 16
      %v5604 = vrot.slane %v5602, 3
      %v5605 = vshll.u32 %v5442, 16
      %v5607 = vrot.slane %v5605, 4
      %v5608 = vor.u32 %v5604, %v5607
      %v5609 = vsel %vm236, %v5600, %v5608
      %v5611 = vshrl.u32 %v5443, 16
      %v5613 = vrot.slane %v5611, 3
      %v5614 = vshll.u32 %v5443, 16
      %v5616 = vrot.slane %v5614, 4
      %v5617 = vor.u32 %v5613, %v5616
      %v5619 = vshrl.u32 %v5444, 16
      %v5621 = vrot.slane %v5619, 3
      %v5622 = vshll.u32 %v5444, 16
      %v5624 = vrot.slane %v5622, 4
      %v5625 = vor.u32 %v5621, %v5624
      %v5626 = vsel %vm236, %v5617, %v5625
      %v5628 = vshrl.u32 %v5445, 16
      %v5630 = vrot.slane %v5628, 3
      %v5631 = vshll.u32 %v5445, 16
      %v5633 = vrot.slane %v5631, 4
      %v5634 = vor.u32 %v5630, %v5633
      %v5636 = vshrl.u32 %v5446, 16
      %v5638 = vrot.slane %v5636, 3
      %v5639 = vshll.u32 %v5446, 16
      %v5641 = vrot.slane %v5639, 4
      %v5642 = vor.u32 %v5638, %v5641
      %v5643 = vsel %vm236, %v5634, %v5642
      %v5645 = vshrl.u32 %v5447, 16
      %v5647 = vrot.slane %v5645, 3
      %v5648 = vshll.u32 %v5447, 16
      %v5650 = vrot.slane %v5648, 4
      %v5651 = vor.u32 %v5647, %v5650
      %v5653 = vshrl.u32 %v5448, 16
      %v5655 = vrot.slane %v5653, 3
      %v5656 = vshll.u32 %v5448, 16
      %v5658 = vrot.slane %v5656, 4
      %v5659 = vor.u32 %v5655, %v5658
      %v5660 = vsel %vm236, %v5651, %v5659
      %v5662 = vshrl.u32 %v5449, 16
      %v5664 = vrot.slane %v5662, 3
      %v5665 = vshll.u32 %v5449, 16
      %v5667 = vrot.slane %v5665, 4
      %v5668 = vor.u32 %v5664, %v5667
      %v5670 = vshrl.u32 %v5450, 16
      %v5672 = vrot.slane %v5670, 3
      %v5673 = vshll.u32 %v5450, 16
      %v5675 = vrot.slane %v5673, 4
      %v5676 = vor.u32 %v5672, %v5675
      %v5677 = vsel %vm236, %v5668, %v5676
      %v5679 = vshrl.u32 %v5451, 16
      %v5681 = vrot.slane %v5679, 3
      %v5682 = vshll.u32 %v5451, 16
      %v5684 = vrot.slane %v5682, 4
      %v5685 = vor.u32 %v5681, %v5684
      %v5687 = vshrl.u32 %v5452, 16
      %v5689 = vrot.slane %v5687, 3
      %v5690 = vshll.u32 %v5452, 16
      %v5692 = vrot.slane %v5690, 4
      %v5693 = vor.u32 %v5689, %v5692
      %v5694 = vsel %vm236, %v5685, %v5693
      %v5696 = vshrl.u32 %v5453, 16
      %v5698 = vrot.slane %v5696, 3
      %v5699 = vshll.u32 %v5453, 16
      %v5701 = vrot.slane %v5699, 4
      %v5702 = vor.u32 %v5698, %v5701
      %v5704 = vshrl.u32 %v5454, 16
      %v5706 = vrot.slane %v5704, 3
      %v5707 = vshll.u32 %v5454, 16
      %v5709 = vrot.slane %v5707, 4
      %v5710 = vor.u32 %v5706, %v5709
      %v5711 = vsel %vm236, %v5702, %v5710
      %v5713 = vshrl.u32 %v5455, 16
      %v5715 = vrot.slane %v5713, 3
      %v5716 = vshll.u32 %v5455, 16
      %v5718 = vrot.slane %v5716, 4
      %v5719 = vor.u32 %v5715, %v5718
      %v5721 = vshrl.u32 %v5456, 16
      %v5723 = vrot.slane %v5721, 3
      %v5724 = vshll.u32 %v5456, 16
      %v5726 = vrot.slane %v5724, 4
      %v5727 = vor.u32 %v5723, %v5726
      %v5728 = vsel %vm236, %v5719, %v5727
      %5729 = vrot.lane.b32.xlu0 %v5473, 24
      %v5730 = vpop.permute.xlu0 %5729
      %5731 = vrot.lane.b32.xlu0 %v5490, 24
      %v5732 = vpop.permute.xlu0 %5731
      %5733 = vrot.lane.b32.xlu0 %v5507, 24
      %v5734 = vpop.permute.xlu0 %5733
      %5735 = vrot.lane.b32.xlu0 %v5524, 24
      %v5736 = vpop.permute.xlu0 %5735
      %5737 = vrot.lane.b32.xlu0 %v5541, 24
      %v5738 = vpop.permute.xlu0 %5737
      %5739 = vrot.lane.b32.xlu0 %v5558, 24
      %v5740 = vpop.permute.xlu0 %5739
      %5741 = vrot.lane.b32.xlu0 %v5575, 24
      %v5742 = vpop.permute.xlu0 %5741
      %5743 = vrot.lane.b32.xlu0 %v5592, 24
      %v5744 = vpop.permute.xlu0 %5743
      %5745 = vrot.lane.b32.xlu0 %v5609, 24
      %v5746 = vpop.permute.xlu0 %5745
      %5747 = vrot.lane.b32.xlu0 %v5626, 24
      %v5748 = vpop.permute.xlu0 %5747
      %5749 = vrot.lane.b32.xlu0 %v5643, 24
      %v5750 = vpop.permute.xlu0 %5749
      %5751 = vrot.lane.b32.xlu0 %v5660, 24
      %v5752 = vpop.permute.xlu0 %5751
      %5753 = vrot.lane.b32.xlu0 %v5677, 24
      %v5754 = vpop.permute.xlu0 %5753
      %5755 = vrot.lane.b32.xlu0 %v5694, 24
      %v5756 = vpop.permute.xlu0 %5755
      %5757 = vrot.lane.b32.xlu0 %v5711, 24
      %v5758 = vpop.permute.xlu0 %5757
      %5759 = vrot.lane.b32.xlu0 %v5728, 24
      %v5760 = vpop.permute.xlu0 %5759
      %5777 = vst.msk [vmem:[#allocation4] sm:$0xff] %vm2722, %v5730
      %5778 = vst.msk [vmem:[#allocation4 + $0x8] sm:$0xff] %vm2722, %v5732
      %5779 = vst.msk [vmem:[#allocation4 + $0x10] sm:$0xff] %vm2722, %v5734
      %5780 = vst.msk [vmem:[#allocation4 + $0x18] sm:$0xff] %vm2722, %v5736
      %5781 = vst.msk [vmem:[#allocation4 + $0x20] sm:$0xff] %vm2722, %v5738
      %5782 = vst.msk [vmem:[#allocation4 + $0x28] sm:$0xff] %vm2722, %v5740
      %5783 = vst.msk [vmem:[#allocation4 + $0x30] sm:$0xff] %vm2722, %v5742
      %5784 = vst.msk [vmem:[#allocation4 + $0x38] sm:$0xff] %vm2722, %v5744
      %5785 = vst.msk [vmem:[#allocation4 + $0x40] sm:$0xff] %vm2722, %v5746
      %5786 = vst.msk [vmem:[#allocation4 + $0x48] sm:$0xff] %vm2722, %v5748
      %5787 = vst.msk [vmem:[#allocation4 + $0x50] sm:$0xff] %vm2722, %v5750
      %5788 = vst.msk [vmem:[#allocation4 + $0x58] sm:$0xff] %vm2722, %v5752
      %5789 = vst.msk [vmem:[#allocation4 + $0x60] sm:$0xff] %vm2722, %v5754
      %5790 = vst.msk [vmem:[#allocation4 + $0x68] sm:$0xff] %vm2722, %v5756
      %5791 = vst.msk [vmem:[#allocation4 + $0x70] sm:$0xff] %vm2722, %v5758
      %5792 = vst.msk [vmem:[#allocation4 + $0x78] sm:$0xff] %vm2722, %v5760
      %v5793 = vld [vmem:[%s5424] sm:$0xf0]
      %v5794 = vld [vmem:[%s5424 + $0x8] sm:$0xf]
      %v5795 = vld [vmem:[%s5424 + $0x10] sm:$0xf0]
      %v5796 = vld [vmem:[%s5424 + $0x18] sm:$0xf]
      %v5797 = vld [vmem:[%s5424 + $0x20] sm:$0xf0]
      %v5798 = vld [vmem:[%s5424 + $0x28] sm:$0xf]
      %v5799 = vld [vmem:[%s5424 + $0x30] sm:$0xf0]
      %v5800 = vld [vmem:[%s5424 + $0x38] sm:$0xf]
      %v5801 = vld [vmem:[%s5424 + $0x40] sm:$0xf0]
      %v5802 = vld [vmem:[%s5424 + $0x48] sm:$0xf]
      %v5803 = vld [vmem:[%s5424 + $0x50] sm:$0xf0]
      %v5804 = vld [vmem:[%s5424 + $0x58] sm:$0xf]
      %v5805 = vld [vmem:[%s5424 + $0x60] sm:$0xf0]
      %v5806 = vld [vmem:[%s5424 + $0x68] sm:$0xf]
      %v5807 = vld [vmem:[%s5424 + $0x70] sm:$0xf0]
      %v5808 = vld [vmem:[%s5424 + $0x78] sm:$0xf]
      %v5809 = vld [vmem:[%s5424 + $0x80] sm:$0xf0]
      %v5810 = vld [vmem:[%s5424 + $0x88] sm:$0xf]
      %v5811 = vld [vmem:[%s5424 + $0x90] sm:$0xf0]
      %v5812 = vld [vmem:[%s5424 + $0x98] sm:$0xf]
      %v5813 = vld [vmem:[%s5424 + $0xa0] sm:$0xf0]
      %v5814 = vld [vmem:[%s5424 + $0xa8] sm:$0xf]
      %v5815 = vld [vmem:[%s5424 + $0xb0] sm:$0xf0]
      %v5816 = vld [vmem:[%s5424 + $0xb8] sm:$0xf]
      %v5817 = vld [vmem:[%s5424 + $0xc0] sm:$0xf0]
      %v5818 = vld [vmem:[%s5424 + $0xc8] sm:$0xf]
      %v5819 = vld [vmem:[%s5424 + $0xd0] sm:$0xf0]
      %v5820 = vld [vmem:[%s5424 + $0xd8] sm:$0xf]
      %v5821 = vld [vmem:[%s5424 + $0xe0] sm:$0xf0]
      %v5822 = vld [vmem:[%s5424 + $0xe8] sm:$0xf]
      %v5823 = vld [vmem:[%s5424 + $0xf0] sm:$0xf0]
      %v5824 = vld [vmem:[%s5424 + $0xf8] sm:$0xf]
      %v5857 = vrot.slane %v5793, 4
      %v5858 = vrot.slane %v5794, 4
      %v5859 = vsel %vm970, %v5857, %v5858
      %v5860 = vrot.slane %v5795, 4
      %v5861 = vrot.slane %v5796, 4
      %v5862 = vsel %vm970, %v5860, %v5861
      %v5863 = vrot.slane %v5797, 4
      %v5864 = vrot.slane %v5798, 4
      %v5865 = vsel %vm970, %v5863, %v5864
      %v5866 = vrot.slane %v5799, 4
      %v5867 = vrot.slane %v5800, 4
      %v5868 = vsel %vm970, %v5866, %v5867
      %v5869 = vrot.slane %v5801, 4
      %v5870 = vrot.slane %v5802, 4
      %v5871 = vsel %vm970, %v5869, %v5870
      %v5872 = vrot.slane %v5803, 4
      %v5873 = vrot.slane %v5804, 4
      %v5874 = vsel %vm970, %v5872, %v5873
      %v5875 = vrot.slane %v5805, 4
      %v5876 = vrot.slane %v5806, 4
      %v5877 = vsel %vm970, %v5875, %v5876
      %v5878 = vrot.slane %v5807, 4
      %v5879 = vrot.slane %v5808, 4
      %v5880 = vsel %vm970, %v5878, %v5879
      %v5881 = vrot.slane %v5809, 4
      %v5882 = vrot.slane %v5810, 4
      %v5883 = vsel %vm970, %v5881, %v5882
      %v5884 = vrot.slane %v5811, 4
      %v5885 = vrot.slane %v5812, 4
      %v5886 = vsel %vm970, %v5884, %v5885
      %v5887 = vrot.slane %v5813, 4
      %v5888 = vrot.slane %v5814, 4
      %v5889 = vsel %vm970, %v5887, %v5888
      %v5890 = vrot.slane %v5815, 4
      %v5891 = vrot.slane %v5816, 4
      %v5892 = vsel %vm970, %v5890, %v5891
      %v5893 = vrot.slane %v5817, 4
      %v5894 = vrot.slane %v5818, 4
      %v5895 = vsel %vm970, %v5893, %v5894
      %v5896 = vrot.slane %v5819, 4
      %v5897 = vrot.slane %v5820, 4
      %v5898 = vsel %vm970, %v5896, %v5897
      %v5899 = vrot.slane %v5821, 4
      %v5900 = vrot.slane %v5822, 4
      %v5901 = vsel %vm970, %v5899, %v5900
      %v5902 = vrot.slane %v5823, 4
      %v5903 = vrot.slane %v5824, 4
      %v5904 = vsel %vm970, %v5902, %v5903
      %5905 = vrot.lane.b32.xlu0 %v5859, 28
      %v5906 = vpop.permute.xlu0 %5905
      %5907 = vrot.lane.b32.xlu0 %v5862, 28
      %v5908 = vpop.permute.xlu0 %5907
      %5909 = vrot.lane.b32.xlu0 %v5865, 28
      %v5910 = vpop.permute.xlu0 %5909
      %5911 = vrot.lane.b32.xlu0 %v5868, 28
      %v5912 = vpop.permute.xlu0 %5911
      %5913 = vrot.lane.b32.xlu0 %v5871, 28
      %v5914 = vpop.permute.xlu0 %5913
      %5915 = vrot.lane.b32.xlu0 %v5874, 28
      %v5916 = vpop.permute.xlu0 %5915
      %5917 = vrot.lane.b32.xlu0 %v5877, 28
      %v5918 = vpop.permute.xlu0 %5917
      %5919 = vrot.lane.b32.xlu0 %v5880, 28
      %v5920 = vpop.permute.xlu0 %5919
      %5921 = vrot.lane.b32.xlu0 %v5883, 28
      %v5922 = vpop.permute.xlu0 %5921
      %5923 = vrot.lane.b32.xlu0 %v5886, 28
      %v5924 = vpop.permute.xlu0 %5923
      %5925 = vrot.lane.b32.xlu0 %v5889, 28
      %v5926 = vpop.permute.xlu0 %5925
      %5927 = vrot.lane.b32.xlu0 %v5892, 28
      %v5928 = vpop.permute.xlu0 %5927
      %5929 = vrot.lane.b32.xlu0 %v5895, 28
      %v5930 = vpop.permute.xlu0 %5929
      %5931 = vrot.lane.b32.xlu0 %v5898, 28
      %v5932 = vpop.permute.xlu0 %5931
      %5933 = vrot.lane.b32.xlu0 %v5901, 28
      %v5934 = vpop.permute.xlu0 %5933
      %5935 = vrot.lane.b32.xlu0 %v5904, 28
      %v5936 = vpop.permute.xlu0 %5935
      %5953 = vst.msk [vmem:[#allocation4] sm:$0xff] %vm2899, %v5906
      %5954 = vst.msk [vmem:[#allocation4 + $0x8] sm:$0xff] %vm2899, %v5908
      %5955 = vst.msk [vmem:[#allocation4 + $0x10] sm:$0xff] %vm2899, %v5910
      %5956 = vst.msk [vmem:[#allocation4 + $0x18] sm:$0xff] %vm2899, %v5912
      %5957 = vst.msk [vmem:[#allocation4 + $0x20] sm:$0xff] %vm2899, %v5914
      %5958 = vst.msk [vmem:[#allocation4 + $0x28] sm:$0xff] %vm2899, %v5916
      %5959 = vst.msk [vmem:[#allocation4 + $0x30] sm:$0xff] %vm2899, %v5918
      %5960 = vst.msk [vmem:[#allocation4 + $0x38] sm:$0xff] %vm2899, %v5920
      %5961 = vst.msk [vmem:[#allocation4 + $0x40] sm:$0xff] %vm2899, %v5922
      %5962 = vst.msk [vmem:[#allocation4 + $0x48] sm:$0xff] %vm2899, %v5924
      %5963 = vst.msk [vmem:[#allocation4 + $0x50] sm:$0xff] %vm2899, %v5926
      %5964 = vst.msk [vmem:[#allocation4 + $0x58] sm:$0xff] %vm2899, %v5928
      %5965 = vst.msk [vmem:[#allocation4 + $0x60] sm:$0xff] %vm2899, %v5930
      %5966 = vst.msk [vmem:[#allocation4 + $0x68] sm:$0xff] %vm2899, %v5932
      %5967 = vst.msk [vmem:[#allocation4 + $0x70] sm:$0xff] %vm2899, %v5934
      %5968 = vst.msk [vmem:[#allocation4 + $0x78] sm:$0xff] %vm2899, %v5936
      %v5969 = vld [vmem:[%s5424] sm:$0xf0]
      %v5970 = vld [vmem:[%s5424 + $0x8] sm:$0x1f]
      %v5971 = vld [vmem:[%s5424 + $0x10] sm:$0xf0]
      %v5972 = vld [vmem:[%s5424 + $0x18] sm:$0x1f]
      %v5973 = vld [vmem:[%s5424 + $0x20] sm:$0xf0]
      %v5974 = vld [vmem:[%s5424 + $0x28] sm:$0x1f]
      %v5975 = vld [vmem:[%s5424 + $0x30] sm:$0xf0]
      %v5976 = vld [vmem:[%s5424 + $0x38] sm:$0x1f]
      %v5977 = vld [vmem:[%s5424 + $0x40] sm:$0xf0]
      %v5978 = vld [vmem:[%s5424 + $0x48] sm:$0x1f]
      %v5979 = vld [vmem:[%s5424 + $0x50] sm:$0xf0]
      %v5980 = vld [vmem:[%s5424 + $0x58] sm:$0x1f]
      %v5981 = vld [vmem:[%s5424 + $0x60] sm:$0xf0]
      %v5982 = vld [vmem:[%s5424 + $0x68] sm:$0x1f]
      %v5983 = vld [vmem:[%s5424 + $0x70] sm:$0xf0]
      %v5984 = vld [vmem:[%s5424 + $0x78] sm:$0x1f]
      %v5985 = vld [vmem:[%s5424 + $0x80] sm:$0xf0]
      %v5986 = vld [vmem:[%s5424 + $0x88] sm:$0x1f]
      %v5987 = vld [vmem:[%s5424 + $0x90] sm:$0xf0]
      %v5988 = vld [vmem:[%s5424 + $0x98] sm:$0x1f]
      %v5989 = vld [vmem:[%s5424 + $0xa0] sm:$0xf0]
      %v5990 = vld [vmem:[%s5424 + $0xa8] sm:$0x1f]
      %v5991 = vld [vmem:[%s5424 + $0xb0] sm:$0xf0]
      %v5992 = vld [vmem:[%s5424 + $0xb8] sm:$0x1f]
      %v5993 = vld [vmem:[%s5424 + $0xc0] sm:$0xf0]
      %v5994 = vld [vmem:[%s5424 + $0xc8] sm:$0x1f]
      %v5995 = vld [vmem:[%s5424 + $0xd0] sm:$0xf0]
      %v5996 = vld [vmem:[%s5424 + $0xd8] sm:$0x1f]
      %v5997 = vld [vmem:[%s5424 + $0xe0] sm:$0xf0]
      %v5998 = vld [vmem:[%s5424 + $0xe8] sm:$0x1f]
      %v5999 = vld [vmem:[%s5424 + $0xf0] sm:$0xf0]
      %v6000 = vld [vmem:[%s5424 + $0xf8] sm:$0x1f]
      %v6002 = vshrl.u32 %v5969, 16
      %v6004 = vrot.slane %v6002, 4
      %v6005 = vshll.u32 %v5969, 16
      %v6007 = vrot.slane %v6005, 5
      %v6008 = vor.u32 %v6004, %v6007
      %v6010 = vshrl.u32 %v5970, 16
      %v6012 = vrot.slane %v6010, 4
      %v6013 = vshll.u32 %v5970, 16
      %v6015 = vrot.slane %v6013, 5
      %v6016 = vor.u32 %v6012, %v6015
      %v6017 = vsel %vm1116, %v6008, %v6016
      %v6019 = vshrl.u32 %v5971, 16
      %v6021 = vrot.slane %v6019, 4
      %v6022 = vshll.u32 %v5971, 16
      %v6024 = vrot.slane %v6022, 5
      %v6025 = vor.u32 %v6021, %v6024
      %v6027 = vshrl.u32 %v5972, 16
      %v6029 = vrot.slane %v6027, 4
      %v6030 = vshll.u32 %v5972, 16
      %v6032 = vrot.slane %v6030, 5
      %v6033 = vor.u32 %v6029, %v6032
      %v6034 = vsel %vm1116, %v6025, %v6033
      %v6036 = vshrl.u32 %v5973, 16
      %v6038 = vrot.slane %v6036, 4
      %v6039 = vshll.u32 %v5973, 16
      %v6041 = vrot.slane %v6039, 5
      %v6042 = vor.u32 %v6038, %v6041
      %v6044 = vshrl.u32 %v5974, 16
      %v6046 = vrot.slane %v6044, 4
      %v6047 = vshll.u32 %v5974, 16
      %v6049 = vrot.slane %v6047, 5
      %v6050 = vor.u32 %v6046, %v6049
      %v6051 = vsel %vm1116, %v6042, %v6050
      %v6053 = vshrl.u32 %v5975, 16
      %v6055 = vrot.slane %v6053, 4
      %v6056 = vshll.u32 %v5975, 16
      %v6058 = vrot.slane %v6056, 5
      %v6059 = vor.u32 %v6055, %v6058
      %v6061 = vshrl.u32 %v5976, 16
      %v6063 = vrot.slane %v6061, 4
      %v6064 = vshll.u32 %v5976, 16
      %v6066 = vrot.slane %v6064, 5
      %v6067 = vor.u32 %v6063, %v6066
      %v6068 = vsel %vm1116, %v6059, %v6067
      %v6070 = vshrl.u32 %v5977, 16
      %v6072 = vrot.slane %v6070, 4
      %v6073 = vshll.u32 %v5977, 16
      %v6075 = vrot.slane %v6073, 5
      %v6076 = vor.u32 %v6072, %v6075
      %v6078 = vshrl.u32 %v5978, 16
      %v6080 = vrot.slane %v6078, 4
      %v6081 = vshll.u32 %v5978, 16
      %v6083 = vrot.slane %v6081, 5
      %v6084 = vor.u32 %v6080, %v6083
      %v6085 = vsel %vm1116, %v6076, %v6084
      %v6087 = vshrl.u32 %v5979, 16
      %v6089 = vrot.slane %v6087, 4
      %v6090 = vshll.u32 %v5979, 16
      %v6092 = vrot.slane %v6090, 5
      %v6093 = vor.u32 %v6089, %v6092
      %v6095 = vshrl.u32 %v5980, 16
      %v6097 = vrot.slane %v6095, 4
      %v6098 = vshll.u32 %v5980, 16
      %v6100 = vrot.slane %v6098, 5
      %v6101 = vor.u32 %v6097, %v6100
      %v6102 = vsel %vm1116, %v6093, %v6101
      %v6104 = vshrl.u32 %v5981, 16
      %v6106 = vrot.slane %v6104, 4
      %v6107 = vshll.u32 %v5981, 16
      %v6109 = vrot.slane %v6107, 5
      %v6110 = vor.u32 %v6106, %v6109
      %v6112 = vshrl.u32 %v5982, 16
      %v6114 = vrot.slane %v6112, 4
      %v6115 = vshll.u32 %v5982, 16
      %v6117 = vrot.slane %v6115, 5
      %v6118 = vor.u32 %v6114, %v6117
      %v6119 = vsel %vm1116, %v6110, %v6118
      %v6121 = vshrl.u32 %v5983, 16
      %v6123 = vrot.slane %v6121, 4
      %v6124 = vshll.u32 %v5983, 16
      %v6126 = vrot.slane %v6124, 5
      %v6127 = vor.u32 %v6123, %v6126
      %v6129 = vshrl.u32 %v5984, 16
      %v6131 = vrot.slane %v6129, 4
      %v6132 = vshll.u32 %v5984, 16
      %v6134 = vrot.slane %v6132, 5
      %v6135 = vor.u32 %v6131, %v6134
      %v6136 = vsel %vm1116, %v6127, %v6135
      %v6138 = vshrl.u32 %v5985, 16
      %v6140 = vrot.slane %v6138, 4
      %v6141 = vshll.u32 %v5985, 16
      %v6143 = vrot.slane %v6141, 5
      %v6144 = vor.u32 %v6140, %v6143
      %v6146 = vshrl.u32 %v5986, 16
      %v6148 = vrot.slane %v6146, 4
      %v6149 = vshll.u32 %v5986, 16
      %v6151 = vrot.slane %v6149, 5
      %v6152 = vor.u32 %v6148, %v6151
      %v6153 = vsel %vm1116, %v6144, %v6152
      %v6155 = vshrl.u32 %v5987, 16
      %v6157 = vrot.slane %v6155, 4
      %v6158 = vshll.u32 %v5987, 16
      %v6160 = vrot.slane %v6158, 5
      %v6161 = vor.u32 %v6157, %v6160
      %v6163 = vshrl.u32 %v5988, 16
      %v6165 = vrot.slane %v6163, 4
      %v6166 = vshll.u32 %v5988, 16
      %v6168 = vrot.slane %v6166, 5
      %v6169 = vor.u32 %v6165, %v6168
      %v6170 = vsel %vm1116, %v6161, %v6169
      %v6172 = vshrl.u32 %v5989, 16
      %v6174 = vrot.slane %v6172, 4
      %v6175 = vshll.u32 %v5989, 16
      %v6177 = vrot.slane %v6175, 5
      %v6178 = vor.u32 %v6174, %v6177
      %v6180 = vshrl.u32 %v5990, 16
      %v6182 = vrot.slane %v6180, 4
      %v6183 = vshll.u32 %v5990, 16
      %v6185 = vrot.slane %v6183, 5
      %v6186 = vor.u32 %v6182, %v6185
      %v6187 = vsel %vm1116, %v6178, %v6186
      %v6189 = vshrl.u32 %v5991, 16
      %v6191 = vrot.slane %v6189, 4
      %v6192 = vshll.u32 %v5991, 16
      %v6194 = vrot.slane %v6192, 5
      %v6195 = vor.u32 %v6191, %v6194
      %v6197 = vshrl.u32 %v5992, 16
      %v6199 = vrot.slane %v6197, 4
      %v6200 = vshll.u32 %v5992, 16
      %v6202 = vrot.slane %v6200, 5
      %v6203 = vor.u32 %v6199, %v6202
      %v6204 = vsel %vm1116, %v6195, %v6203
      %v6206 = vshrl.u32 %v5993, 16
      %v6208 = vrot.slane %v6206, 4
      %v6209 = vshll.u32 %v5993, 16
      %v6211 = vrot.slane %v6209, 5
      %v6212 = vor.u32 %v6208, %v6211
      %v6214 = vshrl.u32 %v5994, 16
      %v6216 = vrot.slane %v6214, 4
      %v6217 = vshll.u32 %v5994, 16
      %v6219 = vrot.slane %v6217, 5
      %v6220 = vor.u32 %v6216, %v6219
      %v6221 = vsel %vm1116, %v6212, %v6220
      %v6223 = vshrl.u32 %v5995, 16
      %v6225 = vrot.slane %v6223, 4
      %v6226 = vshll.u32 %v5995, 16
      %v6228 = vrot.slane %v6226, 5
      %v6229 = vor.u32 %v6225, %v6228
      %v6231 = vshrl.u32 %v5996, 16
      %v6233 = vrot.slane %v6231, 4
      %v6234 = vshll.u32 %v5996, 16
      %v6236 = vrot.slane %v6234, 5
      %v6237 = vor.u32 %v6233, %v6236
      %v6238 = vsel %vm1116, %v6229, %v6237
      %v6240 = vshrl.u32 %v5997, 16
      %v6242 = vrot.slane %v6240, 4
      %v6243 = vshll.u32 %v5997, 16
      %v6245 = vrot.slane %v6243, 5
      %v6246 = vor.u32 %v6242, %v6245
      %v6248 = vshrl.u32 %v5998, 16
      %v6250 = vrot.slane %v6248, 4
      %v6251 = vshll.u32 %v5998, 16
      %v6253 = vrot.slane %v6251, 5
      %v6254 = vor.u32 %v6250, %v6253
      %v6255 = vsel %vm1116, %v6246, %v6254
      %v6257 = vshrl.u32 %v5999, 16
      %v6259 = vrot.slane %v6257, 4
      %v6260 = vshll.u32 %v5999, 16
      %v6262 = vrot.slane %v6260, 5
      %v6263 = vor.u32 %v6259, %v6262
      %v6265 = vshrl.u32 %v6000, 16
      %v6267 = vrot.slane %v6265, 4
      %v6268 = vshll.u32 %v6000, 16
      %v6270 = vrot.slane %v6268, 5
      %v6271 = vor.u32 %v6267, %v6270
      %v6272 = vsel %vm1116, %v6263, %v6271
      %6273 = vrot.lane.b32.xlu0 %v6017, 32
      %v6274 = vpop.permute.xlu0 %6273
      %6275 = vrot.lane.b32.xlu0 %v6034, 32
      %v6276 = vpop.permute.xlu0 %6275
      %6277 = vrot.lane.b32.xlu0 %v6051, 32
      %v6278 = vpop.permute.xlu0 %6277
      %6279 = vrot.lane.b32.xlu0 %v6068, 32
      %v6280 = vpop.permute.xlu0 %6279
      %6281 = vrot.lane.b32.xlu0 %v6085, 32
      %v6282 = vpop.permute.xlu0 %6281
      %6283 = vrot.lane.b32.xlu0 %v6102, 32
      %v6284 = vpop.permute.xlu0 %6283
      %6285 = vrot.lane.b32.xlu0 %v6119, 32
      %v6286 = vpop.permute.xlu0 %6285
      %6287 = vrot.lane.b32.xlu0 %v6136, 32
      %v6288 = vpop.permute.xlu0 %6287
      %6289 = vrot.lane.b32.xlu0 %v6153, 32
      %v6290 = vpop.permute.xlu0 %6289
      %6291 = vrot.lane.b32.xlu0 %v6170, 32
      %v6292 = vpop.permute.xlu0 %6291
      %6293 = vrot.lane.b32.xlu0 %v6187, 32
      %v6294 = vpop.permute.xlu0 %6293
      %6295 = vrot.lane.b32.xlu0 %v6204, 32
      %v6296 = vpop.permute.xlu0 %6295
      %6297 = vrot.lane.b32.xlu0 %v6221, 32
      %v6298 = vpop.permute.xlu0 %6297
      %6299 = vrot.lane.b32.xlu0 %v6238, 32
      %v6300 = vpop.permute.xlu0 %6299
      %6301 = vrot.lane.b32.xlu0 %v6255, 32
      %v6302 = vpop.permute.xlu0 %6301
      %6303 = vrot.lane.b32.xlu0 %v6272, 32
      %v6304 = vpop.permute.xlu0 %6303
      %6321 = vst.msk [vmem:[#allocation4] sm:$0xff] %vm3268, %v6274
      %6322 = vst.msk [vmem:[#allocation4 + $0x8] sm:$0xff] %vm3268, %v6276
      %6323 = vst.msk [vmem:[#allocation4 + $0x10] sm:$0xff] %vm3268, %v6278
      %6324 = vst.msk [vmem:[#allocation4 + $0x18] sm:$0xff] %vm3268, %v6280
      %6325 = vst.msk [vmem:[#allocation4 + $0x20] sm:$0xff] %vm3268, %v6282
      %6326 = vst.msk [vmem:[#allocation4 + $0x28] sm:$0xff] %vm3268, %v6284
      %6327 = vst.msk [vmem:[#allocation4 + $0x30] sm:$0xff] %vm3268, %v6286
      %6328 = vst.msk [vmem:[#allocation4 + $0x38] sm:$0xff] %vm3268, %v6288
      %6329 = vst.msk [vmem:[#allocation4 + $0x40] sm:$0xff] %vm3268, %v6290
      %6330 = vst.msk [vmem:[#allocation4 + $0x48] sm:$0xff] %vm3268, %v6292
      %6331 = vst.msk [vmem:[#allocation4 + $0x50] sm:$0xff] %vm3268, %v6294
      %6332 = vst.msk [vmem:[#allocation4 + $0x58] sm:$0xff] %vm3268, %v6296
      %6333 = vst.msk [vmem:[#allocation4 + $0x60] sm:$0xff] %vm3268, %v6298
      %6334 = vst.msk [vmem:[#allocation4 + $0x68] sm:$0xff] %vm3268, %v6300
      %6335 = vst.msk [vmem:[#allocation4 + $0x70] sm:$0xff] %vm3268, %v6302
      %6336 = vst.msk [vmem:[#allocation4 + $0x78] sm:$0xff] %vm3268, %v6304
      %v6337 = vld [vmem:[#allocation4] sm:$0xff]
      %v6338 = vld [vmem:[#allocation4 + $0x8] sm:$0xff]
      %v6339 = vld [vmem:[#allocation4 + $0x10] sm:$0xff]
      %v6340 = vld [vmem:[#allocation4 + $0x18] sm:$0xff]
      %v6341 = vld [vmem:[#allocation4 + $0x20] sm:$0xff]
      %v6342 = vld [vmem:[#allocation4 + $0x28] sm:$0xff]
      %v6343 = vld [vmem:[#allocation4 + $0x30] sm:$0xff]
      %v6344 = vld [vmem:[#allocation4 + $0x38] sm:$0xff]
      %v6345 = vld [vmem:[#allocation4 + $0x40] sm:$0xff]
      %v6346 = vld [vmem:[#allocation4 + $0x48] sm:$0xff]
      %v6347 = vld [vmem:[#allocation4 + $0x50] sm:$0xff]
      %v6348 = vld [vmem:[#allocation4 + $0x58] sm:$0xff]
      %v6349 = vld [vmem:[#allocation4 + $0x60] sm:$0xff]
      %v6350 = vld [vmem:[#allocation4 + $0x68] sm:$0xff]
      %v6351 = vld [vmem:[#allocation4 + $0x70] sm:$0xff]
      %v6352 = vld [vmem:[#allocation4 + $0x78] sm:$0xff]
      %v6354 = vlaneseq
      %v6355 = vshrl.u32 %v6354, 7
      %v6356 = vsub.s32 0, %v6355
      %v6357 = vrot.slane %v3631, %v6356
      %v6375 = vunpack.c.l.b16 %v3614
      %v6376 = vunpack.c.l.b16 %v3615
      %v6377 = vunpack.c.l.b16 %v3616
      %v6378 = vunpack.c.l.b16 %v3617
      %v6379 = vunpack.c.l.b16 %v3618
      %v6380 = vunpack.c.l.b16 %v3619
      %v6381 = vunpack.c.l.b16 %v3620
      %v6382 = vunpack.c.l.b16 %v3621
      %v6383 = vunpack.c.l.b16 %v3622
      %v6384 = vunpack.c.l.b16 %v3623
      %v6385 = vunpack.c.l.b16 %v3624
      %v6386 = vunpack.c.l.b16 %v3625
      %v6387 = vunpack.c.l.b16 %v3626
      %v6388 = vunpack.c.l.b16 %v3627
      %v6389 = vunpack.c.l.b16 %v3628
      %v6390 = vunpack.c.l.b16 %v3629
      %v6391 = vpack.c.b16 %v6376, %v6375
      %v6392 = vpack.c.b16 %v6378, %v6377
      %v6393 = vpack.c.b16 %v6380, %v6379
      %v6394 = vpack.c.b16 %v6382, %v6381
      %v6395 = vpack.c.b16 %v6384, %v6383
      %v6396 = vpack.c.b16 %v6386, %v6385
      %v6397 = vpack.c.b16 %v6388, %v6387
      %v6398 = vpack.c.b16 %v6390, %v6389
      %6407 = vmatprep.subr.bf16.mxu0 0
      %6408 = vmatpush1.bf16.msra.mxu0 %v6391
      %6409 = vmatprep.subr.bf16.mxu0 0
      %6410 = vmatpush1.bf16.msra.mxu0 %v6392
      %6411 = vmatprep.subr.bf16.mxu0 0
      %6412 = vmatpush1.bf16.msra.mxu0 %v6393
      %6413 = vmatprep.subr.bf16.mxu0 0
      %6414 = vmatpush1.bf16.msra.mxu0 %v6394
      %6415 = vmatprep.subr.bf16.mxu0 0
      %6416 = vmatpush1.bf16.msra.mxu0 %v6395
      %6417 = vmatprep.subr.bf16.mxu0 0
      %6418 = vmatpush1.bf16.msra.mxu0 %v6396
      %6419 = vmatprep.subr.bf16.mxu0 0
      %6420 = vmatpush1.bf16.msra.mxu0 %v6397
      %6421 = vmatprep.subr.bf16.mxu0 0
      %6422 = vmatpush1.bf16.msra.mxu0 %v6398
      %6423 = vmatprep.subr.bf16.mxu0 0
      %6424 = vmatpush1.bf16.msra.mxu0 0
      %6425 = vmatprep.subr.bf16.mxu0 0
      %6426 = vmatpush1.bf16.msra.mxu0 0
      %6427 = vmatprep.subr.bf16.mxu0 0
      %6428 = vmatpush1.bf16.msra.mxu0 0
      %6429 = vmatprep.subr.bf16.mxu0 0
      %6430 = vmatpush1.bf16.msra.mxu0 0
      %6431 = vmatprep.subr.bf16.mxu0 0
      %6432 = vmatpush1.bf16.msra.mxu0 0
      %6433 = vmatprep.subr.bf16.mxu0 0
      %6434 = vmatpush1.bf16.msra.mxu0 0
      %6435 = vmatprep.subr.bf16.mxu0 0
      %6436 = vmatpush1.bf16.msra.mxu0 0
      %6437 = vmatprep.subr.bf16.mxu0 0
      %6438 = vmatpush1.bf16.msra.mxu0 0
      %6439 = vmatprep.mubr.bf16.mxu0 0
      %6440 = vmatmul.mubr.bf16.gmra.mrb[0].mxu0 %v6337
      %v6441 = vpop.f32.mrb[0].mxu0
      %v6442 = vadd.f32 %v6357, %v6441
      %v6443 = vpop.f32.mrb[0].mxu0
      %v6444 = vpop.f32.mrb[0].mxu0
      %v6445 = vadd.f32 %v6357, %v6444
      %v6446 = vpop.f32.mrb[0].mxu0
      %6447 = vmatprep.mubr.bf16.mxu0 0
      %6448 = vmatmul.mubr.bf16.gmra.mrb[0].mxu0 %v6338
      %v6449 = vpop.f32.mrb[0].mxu0
      %v6450 = vadd.f32 %v6357, %v6449
      %v6451 = vpop.f32.mrb[0].mxu0
      %v6452 = vpop.f32.mrb[0].mxu0
      %v6453 = vadd.f32 %v6357, %v6452
      %v6454 = vpop.f32.mrb[0].mxu0
      %6455 = vmatprep.mubr.bf16.mxu0 0
      %6456 = vmatmul.mubr.bf16.gmra.mrb[0].mxu0 %v6339
      %v6457 = vpop.f32.mrb[0].mxu0
      %v6458 = vadd.f32 %v6357, %v6457
      %v6459 = vpop.f32.mrb[0].mxu0
      %v6460 = vpop.f32.mrb[0].mxu0
      %v6461 = vadd.f32 %v6357, %v6460
      %v6462 = vpop.f32.mrb[0].mxu0
      %6463 = vmatprep.mubr.bf16.mxu0 0
      %6464 = vmatmul.mubr.bf16.gmra.mrb[0].mxu0 %v6340
      %v6465 = vpop.f32.mrb[0].mxu0
      %v6466 = vadd.f32 %v6357, %v6465
      %v6467 = vpop.f32.mrb[0].mxu0
      %v6468 = vpop.f32.mrb[0].mxu0
      %v6469 = vadd.f32 %v6357, %v6468
      %v6470 = vpop.f32.mrb[0].mxu0
      %6471 = vmatprep.mubr.bf16.mxu0 0
      %6472 = vmatmul.mubr.bf16.gmra.mrb[0].mxu0 %v6341
      %v6473 = vpop.f32.mrb[0].mxu0
      %v6474 = vadd.f32 %v6357, %v6473
      %v6475 = vpop.f32.mrb[0].mxu0
      %v6476 = vpop.f32.mrb[0].mxu0
      %v6477 = vadd.f32 %v6357, %v6476
      %v6478 = vpop.f32.mrb[0].mxu0
      %6479 = vmatprep.mubr.bf16.mxu0 0
      %6480 = vmatmul.mubr.bf16.gmra.mrb[0].mxu0 %v6342
      %v6481 = vpop.f32.mrb[0].mxu0
      %v6482 = vadd.f32 %v6357, %v6481
      %v6483 = vpop.f32.mrb[0].mxu0
      %v6484 = vpop.f32.mrb[0].mxu0
      %v6485 = vadd.f32 %v6357, %v6484
      %v6486 = vpop.f32.mrb[0].mxu0
      %6487 = vmatprep.mubr.bf16.mxu0 0
      %6488 = vmatmul.mubr.bf16.gmra.mrb[0].mxu0 %v6343
      %v6489 = vpop.f32.mrb[0].mxu0
      %v6490 = vadd.f32 %v6357, %v6489
      %v6491 = vpop.f32.mrb[0].mxu0
      %v6492 = vpop.f32.mrb[0].mxu0
      %v6493 = vadd.f32 %v6357, %v6492
      %v6494 = vpop.f32.mrb[0].mxu0
      %6495 = vmatprep.mubr.bf16.mxu0 0
      %6496 = vmatmul.mubr.bf16.gmra.mrb[0].mxu0 %v6344
      %v6497 = vpop.f32.mrb[0].mxu0
      %v6498 = vadd.f32 %v6357, %v6497
      %v6499 = vpop.f32.mrb[0].mxu0
      %v6500 = vpop.f32.mrb[0].mxu0
      %v6501 = vadd.f32 %v6357, %v6500
      %v6502 = vpop.f32.mrb[0].mxu0
      %6503 = vmatprep.mubr.bf16.mxu0 0
      %6504 = vmatmul.mubr.bf16.gmra.mrb[0].mxu0 %v6345
      %v6505 = vpop.f32.mrb[0].mxu0
      %v6506 = vadd.f32 %v6357, %v6505
      %v6507 = vpop.f32.mrb[0].mxu0
      %v6508 = vpop.f32.mrb[0].mxu0
      %v6509 = vadd.f32 %v6357, %v6508
      %v6510 = vpop.f32.mrb[0].mxu0
      %6511 = vmatprep.mubr.bf16.mxu0 0
      %6512 = vmatmul.mubr.bf16.gmra.mrb[0].mxu0 %v6346
      %v6513 = vpop.f32.mrb[0].mxu0
      %v6514 = vadd.f32 %v6357, %v6513
      %v6515 = vpop.f32.mrb[0].mxu0
      %v6516 = vpop.f32.mrb[0].mxu0
      %v6517 = vadd.f32 %v6357, %v6516
      %v6518 = vpop.f32.mrb[0].mxu0
      %6519 = vmatprep.mubr.bf16.mxu0 0
      %6520 = vmatmul.mubr.bf16.gmra.mrb[0].mxu0 %v6347
      %v6521 = vpop.f32.mrb[0].mxu0
      %v6522 = vadd.f32 %v6357, %v6521
      %v6523 = vpop.f32.mrb[0].mxu0
      %v6524 = vpop.f32.mrb[0].mxu0
      %v6525 = vadd.f32 %v6357, %v6524
      %v6526 = vpop.f32.mrb[0].mxu0
      %6527 = vmatprep.mubr.bf16.mxu0 0
      %6528 = vmatmul.mubr.bf16.gmra.mrb[0].mxu0 %v6348
      %v6529 = vpop.f32.mrb[0].mxu0
      %v6530 = vadd.f32 %v6357, %v6529
      %v6531 = vpop.f32.mrb[0].mxu0
      %v6532 = vpop.f32.mrb[0].mxu0
      %v6533 = vadd.f32 %v6357, %v6532
      %v6534 = vpop.f32.mrb[0].mxu0
      %6535 = vmatprep.mubr.bf16.mxu0 0
      %6536 = vmatmul.mubr.bf16.gmra.mrb[0].mxu0 %v6349
      %v6537 = vpop.f32.mrb[0].mxu0
      %v6538 = vadd.f32 %v6357, %v6537
      %v6539 = vpop.f32.mrb[0].mxu0
      %v6540 = vpop.f32.mrb[0].mxu0
      %v6541 = vadd.f32 %v6357, %v6540
      %v6542 = vpop.f32.mrb[0].mxu0
      %6543 = vmatprep.mubr.bf16.mxu0 0
      %6544 = vmatmul.mubr.bf16.gmra.mrb[0].mxu0 %v6350
      %v6545 = vpop.f32.mrb[0].mxu0
      %v6546 = vadd.f32 %v6357, %v6545
      %v6547 = vpop.f32.mrb[0].mxu0
      %v6548 = vpop.f32.mrb[0].mxu0
      %v6549 = vadd.f32 %v6357, %v6548
      %v6550 = vpop.f32.mrb[0].mxu0
      %6551 = vmatprep.mubr.bf16.mxu0 0
      %6552 = vmatmul.mubr.bf16.gmra.mrb[0].mxu0 %v6351
      %v6553 = vpop.f32.mrb[0].mxu0
      %v6554 = vadd.f32 %v6357, %v6553
      %v6555 = vpop.f32.mrb[0].mxu0
      %v6556 = vpop.f32.mrb[0].mxu0
      %v6557 = vadd.f32 %v6357, %v6556
      %v6558 = vpop.f32.mrb[0].mxu0
      %6559 = vmatprep.mubr.bf16.mxu0 0
      %6560 = vmatmul.mubr.bf16.gmra.mrb[0].mxu0 %v6352
      %v6561 = vpop.f32.mrb[0].mxu0
      %v6562 = vadd.f32 %v6357, %v6561
      %v6563 = vpop.f32.mrb[0].mxu0
      %v6564 = vpop.f32.mrb[0].mxu0
      %v6565 = vadd.f32 %v6357, %v6564
      %v6566 = vpop.f32.mrb[0].mxu0
      %6567 = vdwg.mxu0
      %v6568 = vld [vmem:[%s165] sm:$0xff]
      %v6569 = vld [vmem:[%s165 + $0x8] sm:$0xff]
      %v6570 = vld [vmem:[%s165 + $0x10] sm:$0xff]
      %v6571 = vld [vmem:[%s165 + $0x18] sm:$0xff]
      %v6572 = vld [vmem:[%s165 + $0x20] sm:$0xff]
      %v6573 = vld [vmem:[%s165 + $0x28] sm:$0xff]
      %v6574 = vld [vmem:[%s165 + $0x30] sm:$0xff]
      %v6575 = vld [vmem:[%s165 + $0x38] sm:$0xff]
      %v6576 = vld [vmem:[%s165 + $0x40] sm:$0xff]
      %v6577 = vld [vmem:[%s165 + $0x48] sm:$0xff]
      %v6578 = vld [vmem:[%s165 + $0x50] sm:$0xff]
      %v6579 = vld [vmem:[%s165 + $0x58] sm:$0xff]
      %v6580 = vld [vmem:[%s165 + $0x60] sm:$0xff]
      %v6581 = vld [vmem:[%s165 + $0x68] sm:$0xff]
      %v6582 = vld [vmem:[%s165 + $0x70] sm:$0xff]
      %v6583 = vld [vmem:[%s165 + $0x78] sm:$0xff]
      %v6584 = vld [vmem:[%s165 + $0x80] sm:$0xff]
      %v6585 = vld [vmem:[%s165 + $0x88] sm:$0xff]
      %v6586 = vld [vmem:[%s165 + $0x90] sm:$0xff]
      %v6587 = vld [vmem:[%s165 + $0x98] sm:$0xff]
      %v6588 = vld [vmem:[%s165 + $0xa0] sm:$0xff]
      %v6589 = vld [vmem:[%s165 + $0xa8] sm:$0xff]
      %v6590 = vld [vmem:[%s165 + $0xb0] sm:$0xff]
      %v6591 = vld [vmem:[%s165 + $0xb8] sm:$0xff]
      %v6592 = vld [vmem:[%s165 + $0xc0] sm:$0xff]
      %v6593 = vld [vmem:[%s165 + $0xc8] sm:$0xff]
      %v6594 = vld [vmem:[%s165 + $0xd0] sm:$0xff]
      %v6595 = vld [vmem:[%s165 + $0xd8] sm:$0xff]
      %v6596 = vld [vmem:[%s165 + $0xe0] sm:$0xff]
      %v6597 = vld [vmem:[%s165 + $0xe8] sm:$0xff]
      %v6598 = vld [vmem:[%s165 + $0xf0] sm:$0xff]
      %v6599 = vld [vmem:[%s165 + $0xf8] sm:$0xff]
      %v6600 = vadd.f32 %v6442, %v6568
      %v6601 = vadd.f32 %v6445, %v6569
      %v6602 = vadd.f32 %v6450, %v6570
      %v6603 = vadd.f32 %v6453, %v6571
      %v6604 = vadd.f32 %v6458, %v6572
      %v6605 = vadd.f32 %v6461, %v6573
      %v6606 = vadd.f32 %v6466, %v6574
      %v6607 = vadd.f32 %v6469, %v6575
      %v6608 = vadd.f32 %v6474, %v6576
      %v6609 = vadd.f32 %v6477, %v6577
      %v6610 = vadd.f32 %v6482, %v6578
      %v6611 = vadd.f32 %v6485, %v6579
      %v6612 = vadd.f32 %v6490, %v6580
      %v6613 = vadd.f32 %v6493, %v6581
      %v6614 = vadd.f32 %v6498, %v6582
      %v6615 = vadd.f32 %v6501, %v6583
      %v6616 = vadd.f32 %v6506, %v6584
      %v6617 = vadd.f32 %v6509, %v6585
      %v6618 = vadd.f32 %v6514, %v6586
      %v6619 = vadd.f32 %v6517, %v6587
      %v6620 = vadd.f32 %v6522, %v6588
      %v6621 = vadd.f32 %v6525, %v6589
      %v6622 = vadd.f32 %v6530, %v6590
      %v6623 = vadd.f32 %v6533, %v6591
      %v6624 = vadd.f32 %v6538, %v6592
      %v6625 = vadd.f32 %v6541, %v6593
      %v6626 = vadd.f32 %v6546, %v6594
      %v6627 = vadd.f32 %v6549, %v6595
      %v6628 = vadd.f32 %v6554, %v6596
      %v6629 = vadd.f32 %v6557, %v6597
      %v6630 = vadd.f32 %v6562, %v6598
      %v6631 = vadd.f32 %v6565, %v6599
      %vm6632 = vcmp.gt.f32.partialorder %v6600, 0.0
      %vm6633 = vcmp.gt.f32.partialorder %v6601, 0.0
      %vm6634 = vcmp.gt.f32.partialorder %v6602, 0.0
      %vm6635 = vcmp.gt.f32.partialorder %v6603, 0.0
      %vm6636 = vcmp.gt.f32.partialorder %v6604, 0.0
      %vm6637 = vcmp.gt.f32.partialorder %v6605, 0.0
      %vm6638 = vcmp.gt.f32.partialorder %v6606, 0.0
      %vm6639 = vcmp.gt.f32.partialorder %v6607, 0.0
      %vm6640 = vcmp.gt.f32.partialorder %v6608, 0.0
      %vm6641 = vcmp.gt.f32.partialorder %v6609, 0.0
      %vm6642 = vcmp.gt.f32.partialorder %v6610, 0.0
      %vm6643 = vcmp.gt.f32.partialorder %v6611, 0.0
      %vm6644 = vcmp.gt.f32.partialorder %v6612, 0.0
      %vm6645 = vcmp.gt.f32.partialorder %v6613, 0.0
      %vm6646 = vcmp.gt.f32.partialorder %v6614, 0.0
      %vm6647 = vcmp.gt.f32.partialorder %v6615, 0.0
      %vm6648 = vcmp.gt.f32.partialorder %v6616, 0.0
      %vm6649 = vcmp.gt.f32.partialorder %v6617, 0.0
      %vm6650 = vcmp.gt.f32.partialorder %v6618, 0.0
      %vm6651 = vcmp.gt.f32.partialorder %v6619, 0.0
      %vm6652 = vcmp.gt.f32.partialorder %v6620, 0.0
      %vm6653 = vcmp.gt.f32.partialorder %v6621, 0.0
      %vm6654 = vcmp.gt.f32.partialorder %v6622, 0.0
      %vm6655 = vcmp.gt.f32.partialorder %v6623, 0.0
      %vm6656 = vcmp.gt.f32.partialorder %v6624, 0.0
      %vm6657 = vcmp.gt.f32.partialorder %v6625, 0.0
      %vm6658 = vcmp.gt.f32.partialorder %v6626, 0.0
      %vm6659 = vcmp.gt.f32.partialorder %v6627, 0.0
      %vm6660 = vcmp.gt.f32.partialorder %v6628, 0.0
      %vm6661 = vcmp.gt.f32.partialorder %v6629, 0.0
      %vm6662 = vcmp.gt.f32.partialorder %v6630, 0.0
      %vm6663 = vcmp.gt.f32.partialorder %v6631, 0.0
      %v6664 = vmul.f32 %v6600, 0.02
      %v6665 = vmul.f32 %v6601, 0.02
      %v6666 = vmul.f32 %v6602, 0.02
      %v6667 = vmul.f32 %v6603, 0.02
      %v6668 = vmul.f32 %v6604, 0.02
      %v6669 = vmul.f32 %v6605, 0.02
      %v6670 = vmul.f32 %v6606, 0.02
      %v6671 = vmul.f32 %v6607, 0.02
      %v6672 = vmul.f32 %v6608, 0.02
      %v6673 = vmul.f32 %v6609, 0.02
      %v6674 = vmul.f32 %v6610, 0.02
      %v6675 = vmul.f32 %v6611, 0.02
      %v6676 = vmul.f32 %v6612, 0.02
      %v6677 = vmul.f32 %v6613, 0.02
      %v6678 = vmul.f32 %v6614, 0.02
      %v6679 = vmul.f32 %v6615, 0.02
      %v6680 = vmul.f32 %v6616, 0.02
      %v6681 = vmul.f32 %v6617, 0.02
      %v6682 = vmul.f32 %v6618, 0.02
      %v6683 = vmul.f32 %v6619, 0.02
      %v6684 = vmul.f32 %v6620, 0.02
      %v6685 = vmul.f32 %v6621, 0.02
      %v6686 = vmul.f32 %v6622, 0.02
      %v6687 = vmul.f32 %v6623, 0.02
      %v6688 = vmul.f32 %v6624, 0.02
      %v6689 = vmul.f32 %v6625, 0.02
      %v6690 = vmul.f32 %v6626, 0.02
      %v6691 = vmul.f32 %v6627, 0.02
      %v6692 = vmul.f32 %v6628, 0.02
      %v6693 = vmul.f32 %v6629, 0.02
      %v6694 = vmul.f32 %v6630, 0.02
      %v6695 = vmul.f32 %v6631, 0.02
      %v6696 = vsel %vm6632, %v6600, %v6664
      %v6697 = vsel %vm6633, %v6601, %v6665
      %v6698 = vsel %vm6634, %v6602, %v6666
      %v6699 = vsel %vm6635, %v6603, %v6667
      %v6700 = vsel %vm6636, %v6604, %v6668
      %v6701 = vsel %vm6637, %v6605, %v6669
      %v6702 = vsel %vm6638, %v6606, %v6670
      %v6703 = vsel %vm6639, %v6607, %v6671
      %v6704 = vsel %vm6640, %v6608, %v6672
      %v6705 = vsel %vm6641, %v6609, %v6673
      %v6706 = vsel %vm6642, %v6610, %v6674
      %v6707 = vsel %vm6643, %v6611, %v6675
      %v6708 = vsel %vm6644, %v6612, %v6676
      %v6709 = vsel %vm6645, %v6613, %v6677
      %v6710 = vsel %vm6646, %v6614, %v6678
      %v6711 = vsel %vm6647, %v6615, %v6679
      %v6712 = vsel %vm6648, %v6616, %v6680
      %v6713 = vsel %vm6649, %v6617, %v6681
      %v6714 = vsel %vm6650, %v6618, %v6682
      %v6715 = vsel %vm6651, %v6619, %v6683
      %v6716 = vsel %vm6652, %v6620, %v6684
      %v6717 = vsel %vm6653, %v6621, %v6685
      %v6718 = vsel %vm6654, %v6622, %v6686
      %v6719 = vsel %vm6655, %v6623, %v6687
      %v6720 = vsel %vm6656, %v6624, %v6688
      %v6721 = vsel %vm6657, %v6625, %v6689
      %v6722 = vsel %vm6658, %v6626, %v6690
      %v6723 = vsel %vm6659, %v6627, %v6691
      %v6724 = vsel %vm6660, %v6628, %v6692
      %v6725 = vsel %vm6661, %v6629, %v6693
      %v6726 = vsel %vm6662, %v6630, %v6694
      %v6727 = vsel %vm6663, %v6631, %v6695
      %6728 = vst.msk [vmem:[%s170] sm:$0xff] %vm172, %v6696
      %6729 = vst.msk [vmem:[%s170 + $0x8] sm:$0xff] %vm172, %v6697
      %6730 = vst.msk [vmem:[%s170 + $0x10] sm:$0xff] %vm172, %v6698
      %6731 = vst.msk [vmem:[%s170 + $0x18] sm:$0xff] %vm172, %v6699
      %6732 = vst.msk [vmem:[%s170 + $0x20] sm:$0xff] %vm172, %v6700
      %6733 = vst.msk [vmem:[%s170 + $0x28] sm:$0xff] %vm172, %v6701
      %6734 = vst.msk [vmem:[%s170 + $0x30] sm:$0xff] %vm172, %v6702
      %6735 = vst.msk [vmem:[%s170 + $0x38] sm:$0xff] %vm172, %v6703
      %6736 = vst.msk [vmem:[%s170 + $0x40] sm:$0xff] %vm172, %v6704
      %6737 = vst.msk [vmem:[%s170 + $0x48] sm:$0xff] %vm172, %v6705
      %6738 = vst.msk [vmem:[%s170 + $0x50] sm:$0xff] %vm172, %v6706
      %6739 = vst.msk [vmem:[%s170 + $0x58] sm:$0xff] %vm172, %v6707
      %6740 = vst.msk [vmem:[%s170 + $0x60] sm:$0xff] %vm172, %v6708
      %6741 = vst.msk [vmem:[%s170 + $0x68] sm:$0xff] %vm172, %v6709
      %6742 = vst.msk [vmem:[%s170 + $0x70] sm:$0xff] %vm172, %v6710
      %6743 = vst.msk [vmem:[%s170 + $0x78] sm:$0xff] %vm172, %v6711
      %6744 = vst.msk [vmem:[%s170 + $0x80] sm:$0xff] %vm172, %v6712
      %6745 = vst.msk [vmem:[%s170 + $0x88] sm:$0xff] %vm172, %v6713
      %6746 = vst.msk [vmem:[%s170 + $0x90] sm:$0xff] %vm172, %v6714
      %6747 = vst.msk [vmem:[%s170 + $0x98] sm:$0xff] %vm172, %v6715
      %6748 = vst.msk [vmem:[%s170 + $0xa0] sm:$0xff] %vm172, %v6716
      %6749 = vst.msk [vmem:[%s170 + $0xa8] sm:$0xff] %vm172, %v6717
      %6750 = vst.msk [vmem:[%s170 + $0xb0] sm:$0xff] %vm172, %v6718
      %6751 = vst.msk [vmem:[%s170 + $0xb8] sm:$0xff] %vm172, %v6719
      %6752 = vst.msk [vmem:[%s170 + $0xc0] sm:$0xff] %vm172, %v6720
      %6753 = vst.msk [vmem:[%s170 + $0xc8] sm:$0xff] %vm172, %v6721
      %6754 = vst.msk [vmem:[%s170 + $0xd0] sm:$0xff] %vm172, %v6722
      %6755 = vst.msk [vmem:[%s170 + $0xd8] sm:$0xff] %vm172, %v6723
      %6756 = vst.msk [vmem:[%s170 + $0xe0] sm:$0xff] %vm172, %v6724
      %6757 = vst.msk [vmem:[%s170 + $0xe8] sm:$0xff] %vm172, %v6725
      %6758 = vst.msk [vmem:[%s170 + $0xf0] sm:$0xff] %vm172, %v6726
      %6759 = vst.msk [vmem:[%s170 + $0xf8] sm:$0xff] %vm172, %v6727
      %p6760 = scmp.lt.s32.totalorder %s14, 1
      %s6761 = scalar_select %p6760, %s14, 1
      %s6762 = smul.addr %s6761, 32
      %s6763 = smul.addr %s6762, 8
      %s6764 = scalar_lea.vmem %s3, %s6763
      // Predicated region
      $region33: #{residual_block_forward.1} parent=31 // pred_check
        %p6765 = pneg %p100
      $region34: #{residual_block_forward.1} parent=31 // pred_check_branch
        %6767 = sbr.rel (%p6765) target = $region36
      $region35: #{residual_block_forward.1} parent=31 // pred_region
        _
      $region36: #{residual_block_forward.1} parent=31 // pred_fallthru
        _
    $region32: #{residual_block_forward.1} parent=5 // pred_fallthru
      _
    %p6768 = scmp.le.s32.totalorder 2, %s9
    // Predicated region
    $region37: #{residual_block_forward.1} parent=5 // pred_check
      %p6769 = pneg %p6768
    $region38: #{residual_block_forward.1} parent=5 // pred_check_branch
      %6771 = sbr.rel (%p6769) target = $region40
    $region39: #{residual_block_forward.1} parent=5 // pred_region
      %s6772 = ssub.s32 %s9, 2
      // Predicated region
      $region41: #{residual_block_forward.1} parent=39 // pred_check
        %p6773 = pneg %p106
      $region42: #{residual_block_forward.1} parent=39 // pred_check_branch
        %6775 = sbr.rel (%p6773) target = $region44
      $region43: #{residual_block_forward.1} parent=39 // pred_region
        %p6776 = scmp.lt.s32.totalorder %s15, 1
        %s6777 = scalar_select %p6776, %s15, 1
        %s6778 = smul.addr %s6777, 32
        %s6779 = smul.addr %s6778, 8
        %s6780 = scalar_lea.vmem %s3, %s6779
      $region44: #{residual_block_forward.1} parent=39 // pred_fallthru
        _
    $region40: #{residual_block_forward.1} parent=5 // pred_fallthru
      _
  $region6: #{residual_block_forward.1} parent=0 // loop_footer
    %s13 = sadd.s32 1, %s9
  $region7: #{residual_block_forward.1} parent=0 // loop_footer_branch
    %8 = sbr.rel target = $region3
  $region8: #{residual_block_forward.1} parent=0 // loop_exit
    _

</llo_original>
